<compile_context>
chip_gen: v7x
topology: tpu7x:2x2x1
jax: 0.10.0
libtpu: 0.0.40
codegen_flags: <defaults>
</compile_context>

<pallas_src>
import jax
import jax.numpy as jnp
from jax.experimental import pallas as pl
from jax.experimental.pallas import tpu as pltpu

EPS = 1e-5


# ---------------------------------------------------------------------------
# Single fused kernel
# ---------------------------------------------------------------------------
def _generator_kernel(x_ref, w_ih_ref, w_hh_ref, b_ref,
                      bnx_g_ref, bnx_b_ref, bnh_g_ref, bnh_b_ref,
                      lin_w_ref, lin_b_ref, out_ref):
    """Fused Generator forward.

    x_ref     : [B*T, F]   flattened batch-first input (row index = b*T + t)
    w_ih_ref  : [F, 4H]    LSTM input weights (transposed)
    w_hh_ref  : [H, 4H]    LSTM recurrent weights (transposed)
    b_ref     : [1, 4H]    b_ih + b_hh
    bnx_*     : [1, F]     BatchNorm1d(n_features) gamma/beta
    bnh_*     : [1, H]     BatchNorm1d(hidden_dim) gamma/beta
    lin_w_ref : [T, H, F]  per-timestep Linear weights (transposed)
    lin_b_ref : [T, 1, F]  per-timestep Linear biases
    out_ref   : [B, T, F]  batch-first output
    """
    B, T, _F = out_ref.shape
    H = w_hh_ref.shape[0]

    # ---- bn_x (training-mode batch statistics over batch*time), folded into one FMA ----
    x = x_ref[...]                                                # [B*T, F]
    mean_x = jnp.mean(x, axis=0, keepdims=True)                   # [1, F]
    var_x = jnp.mean((x - mean_x) ** 2, axis=0, keepdims=True)    # biased, as in PyTorch forward
    scale_x = bnx_g_ref[...] * jax.lax.rsqrt(var_x + EPS)         # [1, F]
    shift_x = bnx_b_ref[...] - mean_x * scale_x                   # [1, F]
    xn = x * scale_x + shift_x                                    # [B*T, F]

    # ---- hoisted input projection: ONE [B*T, F] @ [F, 4H] MXU matmul for all timesteps ----
    gates_x = jnp.dot(xn, w_ih_ref[...],
                      preferred_element_type=jnp.float32) + b_ref[...]     # [B*T, 4H]
    # Register-resident [B, T, 4H] view: minor dim (4H) preserved and B*T splits on whole
    # (8,128) sublane tiles (T == 8), so this reshape is layout-free (no VMEM copy).
    gates_bt = gates_x.reshape(B, T, 4 * H)

    # ---- LSTM recurrence: per step only h @ W_hh + gate nonlinearities (static unroll) ----
    w_hh = w_hh_ref[...]                                          # [H, 4H]
    h = jnp.zeros((B, H), jnp.float32)
    c = jnp.zeros((B, H), jnp.float32)
    hs = []
    for t in range(T):
        g = gates_bt[:, t, :] + jnp.dot(h, w_hh, preferred_element_type=jnp.float32)  # [B, 4H]
        i_g = jax.nn.sigmoid(g[:, 0 * H:1 * H])
        f_g = jax.nn.sigmoid(g[:, 1 * H:2 * H])
        g_g = jnp.tanh(g[:, 2 * H:3 * H])
        o_g = jax.nn.sigmoid(g[:, 3 * H:4 * H])
        c = f_g * c + i_g * g_g
        h = o_g * jnp.tanh(c)
        hs.append(h)

    # ---- bn_hidden: GLOBAL stats over (batch, time), one pass over the stacked block ----
    hs_all = jnp.concatenate(hs, axis=0)                          # [T*B, H], rows t-major
    mean_h = jnp.mean(hs_all, axis=0, keepdims=True)              # [1, H]
    var_h = jnp.mean((hs_all - mean_h) ** 2, axis=0, keepdims=True)
    scale_h = bnh_g_ref[...] * jax.lax.rsqrt(var_h + EPS)         # [1, H]
    shift_h = bnh_b_ref[...] - mean_h * scale_h                   # [1, H]
    hn_all = hs_all * scale_h + shift_h                           # single fused scale/shift

    # ---- per-timestep Linear heads, written batch-first (no wrapper transposes needed) ----
    for t in range(T):
        hn_t = hn_all[t * B:(t + 1) * B, :]                       # [B, H] (contiguous rows)
        o_t = jnp.dot(hn_t, lin_w_ref[t],
                      preferred_element_type=jnp.float32) + lin_b_ref[t]   # [B, F]
        out_ref[:, t, :] = o_t


# ---------------------------------------------------------------------------
# Wrapper
# ---------------------------------------------------------------------------
def generator_forward(x_btf, params):
    """x_btf: [B, T, n_features] batch-first, like the PyTorch module."""
    B, T, F = x_btf.shape
    # Contiguous merge of leading dims: free (no transpose, no HBM shuffle).
    x2d = x_btf.astype(jnp.float32).reshape(B * T, F)

    vmem = pl.BlockSpec(memory_space=pltpu.MemorySpace.VMEM)
    return pl.pallas_call(
        _generator_kernel,
        out_shape=jax.ShapeDtypeStruct((B, T, F), jnp.float32),
        in_specs=[vmem] * 10,
        out_specs=vmem,
    )(x2d,
      params["w_ih_T"], params["w_hh_T"], params["b"],
      params["bn_x_gamma"], params["bn_x_beta"],
      params["bn_h_gamma"], params["bn_h_beta"],
      params["lin_w_T"], params["lin_b"])


# ---------------------------------------------------------------------------
# Deterministic parameter init (shapes from Generator.__init__; PyTorch-like U(-1/sqrt(H), 1/sqrt(H)))
# ---------------------------------------------------------------------------
def init_params(key, n_features, hidden_dim, sequence_length):
    F, H, T = n_features, hidden_dim, sequence_length
    k = 1.0 / jnp.sqrt(jnp.float32(H))
    keys = jax.random.split(key, 6)
    w_ih = jax.random.uniform(keys[0], (4 * H, F), jnp.float32, -k, k)   # LSTM weight_ih_l0
    w_hh = jax.random.uniform(keys[1], (4 * H, H), jnp.float32, -k, k)   # LSTM weight_hh_l0
    b_ih = jax.random.uniform(keys[2], (4 * H,), jnp.float32, -k, k)
    b_hh = jax.random.uniform(keys[3], (4 * H,), jnp.float32, -k, k)
    lin_w = jax.random.uniform(keys[4], (T, F, H), jnp.float32, -k, k)   # T x Linear(H, F).weight
    lin_b = jax.random.uniform(keys[5], (T, F), jnp.float32, -k, k)
    return {
        "w_ih_T": w_ih.T,                         # [F, 4H]
        "w_hh_T": w_hh.T,                         # [H, 4H]
        "b": (b_ih + b_hh)[None, :],              # [1, 4H]
        "bn_x_gamma": jnp.ones((1, F), jnp.float32),
        "bn_x_beta": jnp.zeros((1, F), jnp.float32),
        "bn_h_gamma": jnp.ones((1, H), jnp.float32),
        "bn_h_beta": jnp.zeros((1, H), jnp.float32),
        "lin_w_T": jnp.transpose(lin_w, (0, 2, 1)),   # [T, H, F]
        "lin_b": lin_b[:, None, :],                   # [T, 1, F]
    }


# ---------------------------------------------------------------------------
# Pure-JAX reference (same math) for a correctness check.
# ---------------------------------------------------------------------------
def reference_forward(x_btf, params):
    x = jnp.transpose(x_btf, (1, 0, 2)).astype(jnp.float32)   # [T,B,F]
    mean = x.mean(axis=(0, 1), keepdims=True)
    var = ((x - mean) ** 2).mean(axis=(0, 1), keepdims=True)
    xn = (x - mean) * jax.lax.rsqrt(var + EPS) * params["bn_x_gamma"] + params["bn_x_beta"]

    T, B, F = x.shape
    H = params["w_hh_T"].shape[0]

    def step(carry, xt):
        h, c = carry
        gates = xt @ params["w_ih_T"] + h @ params["w_hh_T"] + params["b"]
        i = jax.nn.sigmoid(gates[:, :H])
        f = jax.nn.sigmoid(gates[:, H:2 * H])
        g = jnp.tanh(gates[:, 2 * H:3 * H])
        o = jax.nn.sigmoid(gates[:, 3 * H:])
        c = f * c + i * g
        h = o * jnp.tanh(c)
        return (h, c), h

    (_, _), hs = jax.lax.scan(step, (jnp.zeros((B, H)), jnp.zeros((B, H))), xn)  # [T,B,H]

    mean = hs.mean(axis=(0, 1), keepdims=True)
    var = ((hs - mean) ** 2).mean(axis=(0, 1), keepdims=True)
    rn = (hs - mean) * jax.lax.rsqrt(var + EPS) * params["bn_h_gamma"] + params["bn_h_beta"]
    out = jnp.einsum('tbh,thf->tbf', rn, params["lin_w_T"]) + params["lin_b"]
    return jnp.transpose(out, (1, 0, 2))


if __name__ == "__main__":
    # Generator(n_features=8, hidden_dim=32, sequence_length=8), batch=4.
    B, T, F, H = 4, 8, 8, 32
    key = jax.random.PRNGKey(0)
    k_x, k_p = jax.random.split(key)
    x = jax.random.normal(k_x, (B, T, F), jnp.float32)
    params = init_params(k_p, F, H, T)

    # TODO(synk): PackedSequence input path (pad_packed_sequence) is not implemented;
    #             only the dense-tensor branch of Generator.forward is reproduced.

    out = jax.block_until_ready(generator_forward(x, params))
    assert out.shape == (B, T, F), out.shape

    with jax.default_matmul_precision("highest"):
        ref = jax.block_until_ready(reference_forward(x, params))
    max_err = float(jnp.max(jnp.abs(out - ref)))
    assert max_err < 1e-2, f"mismatch vs reference, max abs err = {max_err}"

    print("KERNEL_OK")
</pallas_src>

<mosaic_0001>
module attributes {stable_mosaic.version = 11 : i64} {
  func.func @_generator_kernel(%arg0: memref<32x8xf32, #tpu.memory_space<vmem>>, %arg1: memref<8x128xf32, #tpu.memory_space<vmem>>, %arg2: memref<32x128xf32, #tpu.memory_space<vmem>>, %arg3: memref<1x128xf32, #tpu.memory_space<vmem>>, %arg4: memref<1x8xf32, #tpu.memory_space<vmem>>, %arg5: memref<1x8xf32, #tpu.memory_space<vmem>>, %arg6: memref<1x32xf32, #tpu.memory_space<vmem>>, %arg7: memref<1x32xf32, #tpu.memory_space<vmem>>, %arg8: memref<8x32x8xf32, #tpu.memory_space<vmem>>, %arg9: memref<8x1x8xf32, #tpu.memory_space<vmem>>, %arg10: memref<4x8x8xf32, #tpu.memory_space<vmem>>) attributes {dimension_semantics = [], scalar_prefetch = 0 : i64, scratch_operands = 0 : i64, tpu.core_type = #tpu.core_type<tc>} {
    %c0 = arith.constant 0 : index
    %c0_0 = arith.constant 0 : index
    %0 = vector.load %arg0[%c0, %c0_0] : memref<32x8xf32, #tpu.memory_space<vmem>>, vector<32x8xf32>
    %cst = arith.constant dense<0.000000e+00> : vector<8xf32>
    %1 = vector.multi_reduction <add>, %0, %cst [0] : vector<32x8xf32> to vector<8xf32>
    %2 = vector.shape_cast %1 : vector<8xf32> to vector<1x8xf32>
    %cst_1 = arith.constant 3.200000e+01 : f32
    %3 = vector.broadcast %cst_1 : f32 to vector<1x8xf32>
    %4 = arith.divf %2, %3 : vector<1x8xf32>
    %5 = vector.broadcast %4 : vector<1x8xf32> to vector<32x8xf32>
    %6 = arith.subf %0, %5 : vector<32x8xf32>
    %7 = arith.mulf %6, %6 : vector<32x8xf32>
    %cst_2 = arith.constant dense<0.000000e+00> : vector<8xf32>
    %8 = vector.multi_reduction <add>, %7, %cst_2 [0] : vector<32x8xf32> to vector<8xf32>
    %9 = vector.shape_cast %8 : vector<8xf32> to vector<1x8xf32>
    %cst_3 = arith.constant 3.200000e+01 : f32
    %10 = vector.broadcast %cst_3 : f32 to vector<1x8xf32>
    %11 = arith.divf %9, %10 : vector<1x8xf32>
    %c0_4 = arith.constant 0 : index
    %c0_5 = arith.constant 0 : index
    %12 = vector.load %arg4[%c0_4, %c0_5] : memref<1x8xf32, #tpu.memory_space<vmem>>, vector<1x8xf32>
    %cst_6 = arith.constant 9.99999974E-6 : f32
    %13 = vector.broadcast %cst_6 : f32 to vector<1x8xf32>
    %14 = arith.addf %11, %13 : vector<1x8xf32>
    %15 = math.rsqrt %14 : vector<1x8xf32>
    %16 = arith.mulf %12, %15 : vector<1x8xf32>
    %c0_7 = arith.constant 0 : index
    %c0_8 = arith.constant 0 : index
    %17 = vector.load %arg5[%c0_7, %c0_8] : memref<1x8xf32, #tpu.memory_space<vmem>>, vector<1x8xf32>
    %18 = arith.mulf %4, %16 : vector<1x8xf32>
    %19 = arith.subf %17, %18 : vector<1x8xf32>
    %20 = vector.broadcast %16 : vector<1x8xf32> to vector<32x8xf32>
    %21 = arith.mulf %0, %20 : vector<32x8xf32>
    %22 = vector.broadcast %19 : vector<1x8xf32> to vector<32x8xf32>
    %23 = arith.addf %21, %22 : vector<32x8xf32>
    %c0_9 = arith.constant 0 : index
    %c0_10 = arith.constant 0 : index
    %24 = vector.load %arg1[%c0_9, %c0_10] : memref<8x128xf32, #tpu.memory_space<vmem>>, vector<8x128xf32>
    %cst_11 = arith.constant dense<0.000000e+00> : vector<32x128xf32>
    %25 = tpu.matmul %23, %24, %cst_11 {dimension_numbers = #tpu.dot_dimension_numbers<[1], [0], [0], [1], [0, 0, 1, 1], [], []>} : vector<32x8xf32>, vector<8x128xf32>, vector<32x128xf32> -> vector<32x128xf32>
    %c0_12 = arith.constant 0 : index
    %c0_13 = arith.constant 0 : index
    %26 = vector.load %arg3[%c0_12, %c0_13] : memref<1x128xf32, #tpu.memory_space<vmem>>, vector<1x128xf32>
    %27 = vector.broadcast %26 : vector<1x128xf32> to vector<32x128xf32>
    %28 = arith.addf %25, %27 : vector<32x128xf32>
    %29 = vector.shape_cast %28 : vector<32x128xf32> to vector<4x8x128xf32>
    %c0_14 = arith.constant 0 : index
    %c0_15 = arith.constant 0 : index
    %30 = vector.load %arg2[%c0_14, %c0_15] : memref<32x128xf32, #tpu.memory_space<vmem>>, vector<32x128xf32>
    %cst_16 = arith.constant 0.000000e+00 : f32
    %31 = vector.broadcast %cst_16 : f32 to vector<4x32xf32>
    %cst_17 = arith.constant 0.000000e+00 : f32
    %32 = vector.broadcast %cst_17 : f32 to vector<4x32xf32>
    %33 = vector.extract_strided_slice %29 {offsets = [0, 0, 0], sizes = [4, 1, 128], strides = [1, 1, 1]} : vector<4x8x128xf32> to vector<4x1x128xf32>
    %34 = vector.shape_cast %33 : vector<4x1x128xf32> to vector<4x128xf32>
    %cst_18 = arith.constant dense<0.000000e+00> : vector<4x128xf32>
    %35 = tpu.matmul %31, %30, %cst_18 {dimension_numbers = #tpu.dot_dimension_numbers<[1], [0], [0], [1], [0, 0, 1, 1], [], []>} : vector<4x32xf32>, vector<32x128xf32>, vector<4x128xf32> -> vector<4x128xf32>
    %36 = arith.addf %34, %35 : vector<4x128xf32>
    %37 = vector.extract_strided_slice %36 {offsets = [0, 0], sizes = [4, 32], strides = [1, 1]} : vector<4x128xf32> to vector<4x32xf32>
    %38 = arith.negf %37 : vector<4x32xf32>
    %39 = math.exp %38 : vector<4x32xf32>
    %cst_19 = arith.constant 1.000000e+00 : f32
    %40 = vector.broadcast %cst_19 : f32 to vector<4x32xf32>
    %41 = arith.addf %40, %39 : vector<4x32xf32>
    %42 = arith.divf %40, %41 : vector<4x32xf32>
    %43 = vector.extract_strided_slice %36 {offsets = [0, 32], sizes = [4, 32], strides = [1, 1]} : vector<4x128xf32> to vector<4x32xf32>
    %44 = arith.negf %43 : vector<4x32xf32>
    %45 = math.exp %44 : vector<4x32xf32>
    %cst_20 = arith.constant 1.000000e+00 : f32
    %46 = vector.broadcast %cst_20 : f32 to vector<4x32xf32>
    %47 = arith.addf %46, %45 : vector<4x32xf32>
    %48 = arith.divf %46, %47 : vector<4x32xf32>
    %49 = vector.extract_strided_slice %36 {offsets = [0, 64], sizes = [4, 32], strides = [1, 1]} : vector<4x128xf32> to vector<4x32xf32>
    %50 = math.tanh %49 : vector<4x32xf32>
    %51 = vector.extract_strided_slice %36 {offsets = [0, 96], sizes = [4, 32], strides = [1, 1]} : vector<4x128xf32> to vector<4x32xf32>
    %52 = arith.negf %51 : vector<4x32xf32>
    %53 = math.exp %52 : vector<4x32xf32>
    %cst_21 = arith.constant 1.000000e+00 : f32
    %54 = vector.broadcast %cst_21 : f32 to vector<4x32xf32>
    %55 = arith.addf %54, %53 : vector<4x32xf32>
    %56 = arith.divf %54, %55 : vector<4x32xf32>
    %57 = arith.mulf %48, %32 : vector<4x32xf32>
    %58 = arith.mulf %42, %50 : vector<4x32xf32>
    %59 = arith.addf %57, %58 : vector<4x32xf32>
    %60 = math.tanh %59 : vector<4x32xf32>
    %61 = arith.mulf %56, %60 : vector<4x32xf32>
    %62 = vector.extract_strided_slice %29 {offsets = [0, 1, 0], sizes = [4, 1, 128], strides = [1, 1, 1]} : vector<4x8x128xf32> to vector<4x1x128xf32>
    %63 = vector.shape_cast %62 : vector<4x1x128xf32> to vector<4x128xf32>
    %cst_22 = arith.constant dense<0.000000e+00> : vector<4x128xf32>
    %64 = tpu.matmul %61, %30, %cst_22 {dimension_numbers = #tpu.dot_dimension_numbers<[1], [0], [0], [1], [0, 0, 1, 1], [], []>} : vector<4x32xf32>, vector<32x128xf32>, vector<4x128xf32> -> vector<4x128xf32>
    %65 = arith.addf %63, %64 : vector<4x128xf32>
    %66 = vector.extract_strided_slice %65 {offsets = [0, 0], sizes = [4, 32], strides = [1, 1]} : vector<4x128xf32> to vector<4x32xf32>
    %67 = arith.negf %66 : vector<4x32xf32>
    %68 = math.exp %67 : vector<4x32xf32>
    %cst_23 = arith.constant 1.000000e+00 : f32
    %69 = vector.broadcast %cst_23 : f32 to vector<4x32xf32>
    %70 = arith.addf %69, %68 : vector<4x32xf32>
    %71 = arith.divf %69, %70 : vector<4x32xf32>
    %72 = vector.extract_strided_slice %65 {offsets = [0, 32], sizes = [4, 32], strides = [1, 1]} : vector<4x128xf32> to vector<4x32xf32>
    %73 = arith.negf %72 : vector<4x32xf32>
    %74 = math.exp %73 : vector<4x32xf32>
    %cst_24 = arith.constant 1.000000e+00 : f32
    %75 = vector.broadcast %cst_24 : f32 to vector<4x32xf32>
    %76 = arith.addf %75, %74 : vector<4x32xf32>
    %77 = arith.divf %75, %76 : vector<4x32xf32>
    %78 = vector.extract_strided_slice %65 {offsets = [0, 64], sizes = [4, 32], strides = [1, 1]} : vector<4x128xf32> to vector<4x32xf32>
    %79 = math.tanh %78 : vector<4x32xf32>
    %80 = vector.extract_strided_slice %65 {offsets = [0, 96], sizes = [4, 32], strides = [1, 1]} : vector<4x128xf32> to vector<4x32xf32>
    %81 = arith.negf %80 : vector<4x32xf32>
    %82 = math.exp %81 : vector<4x32xf32>
    %cst_25 = arith.constant 1.000000e+00 : f32
    %83 = vector.broadcast %cst_25 : f32 to vector<4x32xf32>
    %84 = arith.addf %83, %82 : vector<4x32xf32>
    %85 = arith.divf %83, %84 : vector<4x32xf32>
    %86 = arith.mulf %77, %59 : vector<4x32xf32>
    %87 = arith.mulf %71, %79 : vector<4x32xf32>
    %88 = arith.addf %86, %87 : vector<4x32xf32>
    %89 = math.tanh %88 : vector<4x32xf32>
    %90 = arith.mulf %85, %89 : vector<4x32xf32>
    %91 = vector.extract_strided_slice %29 {offsets = [0, 2, 0], sizes = [4, 1, 128], strides = [1, 1, 1]} : vector<4x8x128xf32> to vector<4x1x128xf32>
    %92 = vector.shape_cast %91 : vector<4x1x128xf32> to vector<4x128xf32>
    %cst_26 = arith.constant dense<0.000000e+00> : vector<4x128xf32>
    %93 = tpu.matmul %90, %30, %cst_26 {dimension_numbers = #tpu.dot_dimension_numbers<[1], [0], [0], [1], [0, 0, 1, 1], [], []>} : vector<4x32xf32>, vector<32x128xf32>, vector<4x128xf32> -> vector<4x128xf32>
    %94 = arith.addf %92, %93 : vector<4x128xf32>
    %95 = vector.extract_strided_slice %94 {offsets = [0, 0], sizes = [4, 32], strides = [1, 1]} : vector<4x128xf32> to vector<4x32xf32>
    %96 = arith.negf %95 : vector<4x32xf32>
    %97 = math.exp %96 : vector<4x32xf32>
    %cst_27 = arith.constant 1.000000e+00 : f32
    %98 = vector.broadcast %cst_27 : f32 to vector<4x32xf32>
    %99 = arith.addf %98, %97 : vector<4x32xf32>
    %100 = arith.divf %98, %99 : vector<4x32xf32>
    %101 = vector.extract_strided_slice %94 {offsets = [0, 32], sizes = [4, 32], strides = [1, 1]} : vector<4x128xf32> to vector<4x32xf32>
    %102 = arith.negf %101 : vector<4x32xf32>
    %103 = math.exp %102 : vector<4x32xf32>
    %cst_28 = arith.constant 1.000000e+00 : f32
    %104 = vector.broadcast %cst_28 : f32 to vector<4x32xf32>
    %105 = arith.addf %104, %103 : vector<4x32xf32>
    %106 = arith.divf %104, %105 : vector<4x32xf32>
    %107 = vector.extract_strided_slice %94 {offsets = [0, 64], sizes = [4, 32], strides = [1, 1]} : vector<4x128xf32> to vector<4x32xf32>
    %108 = math.tanh %107 : vector<4x32xf32>
    %109 = vector.extract_strided_slice %94 {offsets = [0, 96], sizes = [4, 32], strides = [1, 1]} : vector<4x128xf32> to vector<4x32xf32>
    %110 = arith.negf %109 : vector<4x32xf32>
    %111 = math.exp %110 : vector<4x32xf32>
    %cst_29 = arith.constant 1.000000e+00 : f32
    %112 = vector.broadcast %cst_29 : f32 to vector<4x32xf32>
    %113 = arith.addf %112, %111 : vector<4x32xf32>
    %114 = arith.divf %112, %113 : vector<4x32xf32>
    %115 = arith.mulf %106, %88 : vector<4x32xf32>
    %116 = arith.mulf %100, %108 : vector<4x32xf32>
    %117 = arith.addf %115, %116 : vector<4x32xf32>
    %118 = math.tanh %117 : vector<4x32xf32>
    %119 = arith.mulf %114, %118 : vector<4x32xf32>
    %120 = vector.extract_strided_slice %29 {offsets = [0, 3, 0], sizes = [4, 1, 128], strides = [1, 1, 1]} : vector<4x8x128xf32> to vector<4x1x128xf32>
    %121 = vector.shape_cast %120 : vector<4x1x128xf32> to vector<4x128xf32>
    %cst_30 = arith.constant dense<0.000000e+00> : vector<4x128xf32>
    %122 = tpu.matmul %119, %30, %cst_30 {dimension_numbers = #tpu.dot_dimension_numbers<[1], [0], [0], [1], [0, 0, 1, 1], [], []>} : vector<4x32xf32>, vector<32x128xf32>, vector<4x128xf32> -> vector<4x128xf32>
    %123 = arith.addf %121, %122 : vector<4x128xf32>
    %124 = vector.extract_strided_slice %123 {offsets = [0, 0], sizes = [4, 32], strides = [1, 1]} : vector<4x128xf32> to vector<4x32xf32>
    %125 = arith.negf %124 : vector<4x32xf32>
    %126 = math.exp %125 : vector<4x32xf32>
    %cst_31 = arith.constant 1.000000e+00 : f32
    %127 = vector.broadcast %cst_31 : f32 to vector<4x32xf32>
    %128 = arith.addf %127, %126 : vector<4x32xf32>
    %129 = arith.divf %127, %128 : vector<4x32xf32>
    %130 = vector.extract_strided_slice %123 {offsets = [0, 32], sizes = [4, 32], strides = [1, 1]} : vector<4x128xf32> to vector<4x32xf32>
    %131 = arith.negf %130 : vector<4x32xf32>
    %132 = math.exp %131 : vector<4x32xf32>
    %cst_32 = arith.constant 1.000000e+00 : f32
    %133 = vector.broadcast %cst_32 : f32 to vector<4x32xf32>
    %134 = arith.addf %133, %132 : vector<4x32xf32>
    %135 = arith.divf %133, %134 : vector<4x32xf32>
    %136 = vector.extract_strided_slice %123 {offsets = [0, 64], sizes = [4, 32], strides = [1, 1]} : vector<4x128xf32> to vector<4x32xf32>
    %137 = math.tanh %136 : vector<4x32xf32>
    %138 = vector.extract_strided_slice %123 {offsets = [0, 96], sizes = [4, 32], strides = [1, 1]} : vector<4x128xf32> to vector<4x32xf32>
    %139 = arith.negf %138 : vector<4x32xf32>
    %140 = math.exp %139 : vector<4x32xf32>
    %cst_33 = arith.constant 1.000000e+00 : f32
    %141 = vector.broadcast %cst_33 : f32 to vector<4x32xf32>
    %142 = arith.addf %141, %140 : vector<4x32xf32>
    %143 = arith.divf %141, %142 : vector<4x32xf32>
    %144 = arith.mulf %135, %117 : vector<4x32xf32>
    %145 = arith.mulf %129, %137 : vector<4x32xf32>
    %146 = arith.addf %144, %145 : vector<4x32xf32>
    %147 = math.tanh %146 : vector<4x32xf32>
    %148 = arith.mulf %143, %147 : vector<4x32xf32>
    %149 = vector.extract_strided_slice %29 {offsets = [0, 4, 0], sizes = [4, 1, 128], strides = [1, 1, 1]} : vector<4x8x128xf32> to vector<4x1x128xf32>
    %150 = vector.shape_cast %149 : vector<4x1x128xf32> to vector<4x128xf32>
    %cst_34 = arith.constant dense<0.000000e+00> : vector<4x128xf32>
    %151 = tpu.matmul %148, %30, %cst_34 {dimension_numbers = #tpu.dot_dimension_numbers<[1], [0], [0], [1], [0, 0, 1, 1], [], []>} : vector<4x32xf32>, vector<32x128xf32>, vector<4x128xf32> -> vector<4x128xf32>
    %152 = arith.addf %150, %151 : vector<4x128xf32>
    %153 = vector.extract_strided_slice %152 {offsets = [0, 0], sizes = [4, 32], strides = [1, 1]} : vector<4x128xf32> to vector<4x32xf32>
    %154 = arith.negf %153 : vector<4x32xf32>
    %155 = math.exp %154 : vector<4x32xf32>
    %cst_35 = arith.constant 1.000000e+00 : f32
    %156 = vector.broadcast %cst_35 : f32 to vector<4x32xf32>
    %157 = arith.addf %156, %155 : vector<4x32xf32>
    %158 = arith.divf %156, %157 : vector<4x32xf32>
    %159 = vector.extract_strided_slice %152 {offsets = [0, 32], sizes = [4, 32], strides = [1, 1]} : vector<4x128xf32> to vector<4x32xf32>
    %160 = arith.negf %159 : vector<4x32xf32>
    %161 = math.exp %160 : vector<4x32xf32>
    %cst_36 = arith.constant 1.000000e+00 : f32
    %162 = vector.broadcast %cst_36 : f32 to vector<4x32xf32>
    %163 = arith.addf %162, %161 : vector<4x32xf32>
    %164 = arith.divf %162, %163 : vector<4x32xf32>
    %165 = vector.extract_strided_slice %152 {offsets = [0, 64], sizes = [4, 32], strides = [1, 1]} : vector<4x128xf32> to vector<4x32xf32>
    %166 = math.tanh %165 : vector<4x32xf32>
    %167 = vector.extract_strided_slice %152 {offsets = [0, 96], sizes = [4, 32], strides = [1, 1]} : vector<4x128xf32> to vector<4x32xf32>
    %168 = arith.negf %167 : vector<4x32xf32>
    %169 = math.exp %168 : vector<4x32xf32>
    %cst_37 = arith.constant 1.000000e+00 : f32
    %170 = vector.broadcast %cst_37 : f32 to vector<4x32xf32>
    %171 = arith.addf %170, %169 : vector<4x32xf32>
    %172 = arith.divf %170, %171 : vector<4x32xf32>
    %173 = arith.mulf %164, %146 : vector<4x32xf32>
    %174 = arith.mulf %158, %166 : vector<4x32xf32>
    %175 = arith.addf %173, %174 : vector<4x32xf32>
    %176 = math.tanh %175 : vector<4x32xf32>
    %177 = arith.mulf %172, %176 : vector<4x32xf32>
    %178 = vector.extract_strided_slice %29 {offsets = [0, 5, 0], sizes = [4, 1, 128], strides = [1, 1, 1]} : vector<4x8x128xf32> to vector<4x1x128xf32>
    %179 = vector.shape_cast %178 : vector<4x1x128xf32> to vector<4x128xf32>
    %cst_38 = arith.constant dense<0.000000e+00> : vector<4x128xf32>
    %180 = tpu.matmul %177, %30, %cst_38 {dimension_numbers = #tpu.dot_dimension_numbers<[1], [0], [0], [1], [0, 0, 1, 1], [], []>} : vector<4x32xf32>, vector<32x128xf32>, vector<4x128xf32> -> vector<4x128xf32>
    %181 = arith.addf %179, %180 : vector<4x128xf32>
    %182 = vector.extract_strided_slice %181 {offsets = [0, 0], sizes = [4, 32], strides = [1, 1]} : vector<4x128xf32> to vector<4x32xf32>
    %183 = arith.negf %182 : vector<4x32xf32>
    %184 = math.exp %183 : vector<4x32xf32>
    %cst_39 = arith.constant 1.000000e+00 : f32
    %185 = vector.broadcast %cst_39 : f32 to vector<4x32xf32>
    %186 = arith.addf %185, %184 : vector<4x32xf32>
    %187 = arith.divf %185, %186 : vector<4x32xf32>
    %188 = vector.extract_strided_slice %181 {offsets = [0, 32], sizes = [4, 32], strides = [1, 1]} : vector<4x128xf32> to vector<4x32xf32>
    %189 = arith.negf %188 : vector<4x32xf32>
    %190 = math.exp %189 : vector<4x32xf32>
    %cst_40 = arith.constant 1.000000e+00 : f32
    %191 = vector.broadcast %cst_40 : f32 to vector<4x32xf32>
    %192 = arith.addf %191, %190 : vector<4x32xf32>
    %193 = arith.divf %191, %192 : vector<4x32xf32>
    %194 = vector.extract_strided_slice %181 {offsets = [0, 64], sizes = [4, 32], strides = [1, 1]} : vector<4x128xf32> to vector<4x32xf32>
    %195 = math.tanh %194 : vector<4x32xf32>
    %196 = vector.extract_strided_slice %181 {offsets = [0, 96], sizes = [4, 32], strides = [1, 1]} : vector<4x128xf32> to vector<4x32xf32>
    %197 = arith.negf %196 : vector<4x32xf32>
    %198 = math.exp %197 : vector<4x32xf32>
    %cst_41 = arith.constant 1.000000e+00 : f32
    %199 = vector.broadcast %cst_41 : f32 to vector<4x32xf32>
    %200 = arith.addf %199, %198 : vector<4x32xf32>
    %201 = arith.divf %199, %200 : vector<4x32xf32>
    %202 = arith.mulf %193, %175 : vector<4x32xf32>
    %203 = arith.mulf %187, %195 : vector<4x32xf32>
    %204 = arith.addf %202, %203 : vector<4x32xf32>
    %205 = math.tanh %204 : vector<4x32xf32>
    %206 = arith.mulf %201, %205 : vector<4x32xf32>
    %207 = vector.extract_strided_slice %29 {offsets = [0, 6, 0], sizes = [4, 1, 128], strides = [1, 1, 1]} : vector<4x8x128xf32> to vector<4x1x128xf32>
    %208 = vector.shape_cast %207 : vector<4x1x128xf32> to vector<4x128xf32>
    %cst_42 = arith.constant dense<0.000000e+00> : vector<4x128xf32>
    %209 = tpu.matmul %206, %30, %cst_42 {dimension_numbers = #tpu.dot_dimension_numbers<[1], [0], [0], [1], [0, 0, 1, 1], [], []>} : vector<4x32xf32>, vector<32x128xf32>, vector<4x128xf32> -> vector<4x128xf32>
    %210 = arith.addf %208, %209 : vector<4x128xf32>
    %211 = vector.extract_strided_slice %210 {offsets = [0, 0], sizes = [4, 32], strides = [1, 1]} : vector<4x128xf32> to vector<4x32xf32>
    %212 = arith.negf %211 : vector<4x32xf32>
    %213 = math.exp %212 : vector<4x32xf32>
    %cst_43 = arith.constant 1.000000e+00 : f32
    %214 = vector.broadcast %cst_43 : f32 to vector<4x32xf32>
    %215 = arith.addf %214, %213 : vector<4x32xf32>
    %216 = arith.divf %214, %215 : vector<4x32xf32>
    %217 = vector.extract_strided_slice %210 {offsets = [0, 32], sizes = [4, 32], strides = [1, 1]} : vector<4x128xf32> to vector<4x32xf32>
    %218 = arith.negf %217 : vector<4x32xf32>
    %219 = math.exp %218 : vector<4x32xf32>
    %cst_44 = arith.constant 1.000000e+00 : f32
    %220 = vector.broadcast %cst_44 : f32 to vector<4x32xf32>
    %221 = arith.addf %220, %219 : vector<4x32xf32>
    %222 = arith.divf %220, %221 : vector<4x32xf32>
    %223 = vector.extract_strided_slice %210 {offsets = [0, 64], sizes = [4, 32], strides = [1, 1]} : vector<4x128xf32> to vector<4x32xf32>
    %224 = math.tanh %223 : vector<4x32xf32>
    %225 = vector.extract_strided_slice %210 {offsets = [0, 96], sizes = [4, 32], strides = [1, 1]} : vector<4x128xf32> to vector<4x32xf32>
    %226 = arith.negf %225 : vector<4x32xf32>
    %227 = math.exp %226 : vector<4x32xf32>
    %cst_45 = arith.constant 1.000000e+00 : f32
    %228 = vector.broadcast %cst_45 : f32 to vector<4x32xf32>
    %229 = arith.addf %228, %227 : vector<4x32xf32>
    %230 = arith.divf %228, %229 : vector<4x32xf32>
    %231 = arith.mulf %222, %204 : vector<4x32xf32>
    %232 = arith.mulf %216, %224 : vector<4x32xf32>
    %233 = arith.addf %231, %232 : vector<4x32xf32>
    %234 = math.tanh %233 : vector<4x32xf32>
    %235 = arith.mulf %230, %234 : vector<4x32xf32>
    %236 = vector.extract_strided_slice %29 {offsets = [0, 7, 0], sizes = [4, 1, 128], strides = [1, 1, 1]} : vector<4x8x128xf32> to vector<4x1x128xf32>
    %237 = vector.shape_cast %236 : vector<4x1x128xf32> to vector<4x128xf32>
    %cst_46 = arith.constant dense<0.000000e+00> : vector<4x128xf32>
    %238 = tpu.matmul %235, %30, %cst_46 {dimension_numbers = #tpu.dot_dimension_numbers<[1], [0], [0], [1], [0, 0, 1, 1], [], []>} : vector<4x32xf32>, vector<32x128xf32>, vector<4x128xf32> -> vector<4x128xf32>
    %239 = arith.addf %237, %238 : vector<4x128xf32>
    %240 = vector.extract_strided_slice %239 {offsets = [0, 0], sizes = [4, 32], strides = [1, 1]} : vector<4x128xf32> to vector<4x32xf32>
    %241 = arith.negf %240 : vector<4x32xf32>
    %242 = math.exp %241 : vector<4x32xf32>
    %cst_47 = arith.constant 1.000000e+00 : f32
    %243 = vector.broadcast %cst_47 : f32 to vector<4x32xf32>
    %244 = arith.addf %243, %242 : vector<4x32xf32>
    %245 = arith.divf %243, %244 : vector<4x32xf32>
    %246 = vector.extract_strided_slice %239 {offsets = [0, 32], sizes = [4, 32], strides = [1, 1]} : vector<4x128xf32> to vector<4x32xf32>
    %247 = arith.negf %246 : vector<4x32xf32>
    %248 = math.exp %247 : vector<4x32xf32>
    %cst_48 = arith.constant 1.000000e+00 : f32
    %249 = vector.broadcast %cst_48 : f32 to vector<4x32xf32>
    %250 = arith.addf %249, %248 : vector<4x32xf32>
    %251 = arith.divf %249, %250 : vector<4x32xf32>
    %252 = vector.extract_strided_slice %239 {offsets = [0, 64], sizes = [4, 32], strides = [1, 1]} : vector<4x128xf32> to vector<4x32xf32>
    %253 = math.tanh %252 : vector<4x32xf32>
    %254 = vector.extract_strided_slice %239 {offsets = [0, 96], sizes = [4, 32], strides = [1, 1]} : vector<4x128xf32> to vector<4x32xf32>
    %255 = arith.negf %254 : vector<4x32xf32>
    %256 = math.exp %255 : vector<4x32xf32>
    %cst_49 = arith.constant 1.000000e+00 : f32
    %257 = vector.broadcast %cst_49 : f32 to vector<4x32xf32>
    %258 = arith.addf %257, %256 : vector<4x32xf32>
    %259 = arith.divf %257, %258 : vector<4x32xf32>
    %260 = arith.mulf %251, %233 : vector<4x32xf32>
    %261 = arith.mulf %245, %253 : vector<4x32xf32>
    %262 = arith.addf %260, %261 : vector<4x32xf32>
    %263 = math.tanh %262 : vector<4x32xf32>
    %264 = arith.mulf %259, %263 : vector<4x32xf32>
    %265 = tpu.concatenate %61, %90, %119, %148, %177, %206, %235, %264 in 0 : vector<4x32xf32>, vector<4x32xf32>, vector<4x32xf32>, vector<4x32xf32>, vector<4x32xf32>, vector<4x32xf32>, vector<4x32xf32>, vector<4x32xf32> -> vector<32x32xf32>
    %cst_50 = arith.constant dense<0.000000e+00> : vector<32xf32>
    %266 = vector.multi_reduction <add>, %265, %cst_50 [0] : vector<32x32xf32> to vector<32xf32>
    %267 = vector.shape_cast %266 : vector<32xf32> to vector<1x32xf32>
    %cst_51 = arith.constant 3.200000e+01 : f32
    %268 = vector.broadcast %cst_51 : f32 to vector<1x32xf32>
    %269 = arith.divf %267, %268 : vector<1x32xf32>
    %270 = vector.broadcast %269 : vector<1x32xf32> to vector<32x32xf32>
    %271 = arith.subf %265, %270 : vector<32x32xf32>
    %272 = arith.mulf %271, %271 : vector<32x32xf32>
    %cst_52 = arith.constant dense<0.000000e+00> : vector<32xf32>
    %273 = vector.multi_reduction <add>, %272, %cst_52 [0] : vector<32x32xf32> to vector<32xf32>
    %274 = vector.shape_cast %273 : vector<32xf32> to vector<1x32xf32>
    %cst_53 = arith.constant 3.200000e+01 : f32
    %275 = vector.broadcast %cst_53 : f32 to vector<1x32xf32>
    %276 = arith.divf %274, %275 : vector<1x32xf32>
    %c0_54 = arith.constant 0 : index
    %c0_55 = arith.constant 0 : index
    %277 = vector.load %arg6[%c0_54, %c0_55] : memref<1x32xf32, #tpu.memory_space<vmem>>, vector<1x32xf32>
    %cst_56 = arith.constant 9.99999974E-6 : f32
    %278 = vector.broadcast %cst_56 : f32 to vector<1x32xf32>
    %279 = arith.addf %276, %278 : vector<1x32xf32>
    %280 = math.rsqrt %279 : vector<1x32xf32>
    %281 = arith.mulf %277, %280 : vector<1x32xf32>
    %c0_57 = arith.constant 0 : index
    %c0_58 = arith.constant 0 : index
    %282 = vector.load %arg7[%c0_57, %c0_58] : memref<1x32xf32, #tpu.memory_space<vmem>>, vector<1x32xf32>
    %283 = arith.mulf %269, %281 : vector<1x32xf32>
    %284 = arith.subf %282, %283 : vector<1x32xf32>
    %285 = vector.broadcast %281 : vector<1x32xf32> to vector<32x32xf32>
    %286 = arith.mulf %265, %285 : vector<32x32xf32>
    %287 = vector.broadcast %284 : vector<1x32xf32> to vector<32x32xf32>
    %288 = arith.addf %286, %287 : vector<32x32xf32>
    %289 = vector.extract_strided_slice %288 {offsets = [0, 0], sizes = [4, 32], strides = [1, 1]} : vector<32x32xf32> to vector<4x32xf32>
    %c0_59 = arith.constant 0 : index
    %c0_60 = arith.constant 0 : index
    %c0_61 = arith.constant 0 : index
    %290 = vector.load %arg8[%c0_59, %c0_60, %c0_61] : memref<8x32x8xf32, #tpu.memory_space<vmem>>, vector<1x32x8xf32>
    %291 = vector.shape_cast %290 : vector<1x32x8xf32> to vector<32x8xf32>
    %cst_62 = arith.constant dense<0.000000e+00> : vector<4x8xf32>
    %292 = tpu.matmul %289, %291, %cst_62 {dimension_numbers = #tpu.dot_dimension_numbers<[1], [0], [0], [1], [0, 0, 1, 1], [], []>} : vector<4x32xf32>, vector<32x8xf32>, vector<4x8xf32> -> vector<4x8xf32>
    %c0_63 = arith.constant 0 : index
    %c0_64 = arith.constant 0 : index
    %c0_65 = arith.constant 0 : index
    %293 = vector.load %arg9[%c0_63, %c0_64, %c0_65] : memref<8x1x8xf32, #tpu.memory_space<vmem>>, vector<1x1x8xf32>
    %294 = vector.shape_cast %293 : vector<1x1x8xf32> to vector<1x8xf32>
    %295 = vector.broadcast %294 : vector<1x8xf32> to vector<4x8xf32>
    %296 = arith.addf %292, %295 : vector<4x8xf32>
    %c0_66 = arith.constant 0 : index
    %c0_67 = arith.constant 0 : index
    %c0_68 = arith.constant 0 : index
    %297 = vector.load %arg10[%c0_66, %c0_67, %c0_68] : memref<4x8x8xf32, #tpu.memory_space<vmem>>, vector<4x1x8xf32>
    %298 = vector.shape_cast %297 : vector<4x1x8xf32> to vector<4x8xf32>
    %299 = vector.shape_cast %296 : vector<4x8xf32> to vector<4x1x8xf32>
    tpu.vector_store %arg10[%c0_66, %c0_67, %c0_68], %299 {strides = array<i32>} : memref<4x8x8xf32, #tpu.memory_space<vmem>>, vector<4x1x8xf32>,
    %300 = vector.extract_strided_slice %288 {offsets = [4, 0], sizes = [4, 32], strides = [1, 1]} : vector<32x32xf32> to vector<4x32xf32>
    %c1 = arith.constant 1 : index
    %c0_69 = arith.constant 0 : index
    %c0_70 = arith.constant 0 : index
    %301 = vector.load %arg8[%c1, %c0_69, %c0_70] : memref<8x32x8xf32, #tpu.memory_space<vmem>>, vector<1x32x8xf32>
    %302 = vector.shape_cast %301 : vector<1x32x8xf32> to vector<32x8xf32>
    %cst_71 = arith.constant dense<0.000000e+00> : vector<4x8xf32>
    %303 = tpu.matmul %300, %302, %cst_71 {dimension_numbers = #tpu.dot_dimension_numbers<[1], [0], [0], [1], [0, 0, 1, 1], [], []>} : vector<4x32xf32>, vector<32x8xf32>, vector<4x8xf32> -> vector<4x8xf32>
    %c1_72 = arith.constant 1 : index
    %c0_73 = arith.constant 0 : index
    %c0_74 = arith.constant 0 : index
    %304 = vector.load %arg9[%c1_72, %c0_73, %c0_74] : memref<8x1x8xf32, #tpu.memory_space<vmem>>, vector<1x1x8xf32>
    %305 = vector.shape_cast %304 : vector<1x1x8xf32> to vector<1x8xf32>
    %306 = vector.broadcast %305 : vector<1x8xf32> to vector<4x8xf32>
    %307 = arith.addf %303, %306 : vector<4x8xf32>
    %c0_75 = arith.constant 0 : index
    %c1_76 = arith.constant 1 : index
    %c0_77 = arith.constant 0 : index
    %308 = vector.load %arg10[%c0_75, %c1_76, %c0_77] : memref<4x8x8xf32, #tpu.memory_space<vmem>>, vector<4x1x8xf32>
    %309 = vector.shape_cast %308 : vector<4x1x8xf32> to vector<4x8xf32>
    %310 = vector.shape_cast %307 : vector<4x8xf32> to vector<4x1x8xf32>
    tpu.vector_store %arg10[%c0_75, %c1_76, %c0_77], %310 {strides = array<i32>} : memref<4x8x8xf32, #tpu.memory_space<vmem>>, vector<4x1x8xf32>,
    %311 = vector.extract_strided_slice %288 {offsets = [8, 0], sizes = [4, 32], strides = [1, 1]} : vector<32x32xf32> to vector<4x32xf32>
    %c2 = arith.constant 2 : index
    %c0_78 = arith.constant 0 : index
    %c0_79 = arith.constant 0 : index
    %312 = vector.load %arg8[%c2, %c0_78, %c0_79] : memref<8x32x8xf32, #tpu.memory_space<vmem>>, vector<1x32x8xf32>
    %313 = vector.shape_cast %312 : vector<1x32x8xf32> to vector<32x8xf32>
    %cst_80 = arith.constant dense<0.000000e+00> : vector<4x8xf32>
    %314 = tpu.matmul %311, %313, %cst_80 {dimension_numbers = #tpu.dot_dimension_numbers<[1], [0], [0], [1], [0, 0, 1, 1], [], []>} : vector<4x32xf32>, vector<32x8xf32>, vector<4x8xf32> -> vector<4x8xf32>
    %c2_81 = arith.constant 2 : index
    %c0_82 = arith.constant 0 : index
    %c0_83 = arith.constant 0 : index
    %315 = vector.load %arg9[%c2_81, %c0_82, %c0_83] : memref<8x1x8xf32, #tpu.memory_space<vmem>>, vector<1x1x8xf32>
    %316 = vector.shape_cast %315 : vector<1x1x8xf32> to vector<1x8xf32>
    %317 = vector.broadcast %316 : vector<1x8xf32> to vector<4x8xf32>
    %318 = arith.addf %314, %317 : vector<4x8xf32>
    %c0_84 = arith.constant 0 : index
    %c2_85 = arith.constant 2 : index
    %c0_86 = arith.constant 0 : index
    %319 = vector.load %arg10[%c0_84, %c2_85, %c0_86] : memref<4x8x8xf32, #tpu.memory_space<vmem>>, vector<4x1x8xf32>
    %320 = vector.shape_cast %319 : vector<4x1x8xf32> to vector<4x8xf32>
    %321 = vector.shape_cast %318 : vector<4x8xf32> to vector<4x1x8xf32>
    tpu.vector_store %arg10[%c0_84, %c2_85, %c0_86], %321 {strides = array<i32>} : memref<4x8x8xf32, #tpu.memory_space<vmem>>, vector<4x1x8xf32>,
    %322 = vector.extract_strided_slice %288 {offsets = [12, 0], sizes = [4, 32], strides = [1, 1]} : vector<32x32xf32> to vector<4x32xf32>
    %c3 = arith.constant 3 : index
    %c0_87 = arith.constant 0 : index
    %c0_88 = arith.constant 0 : index
    %323 = vector.load %arg8[%c3, %c0_87, %c0_88] : memref<8x32x8xf32, #tpu.memory_space<vmem>>, vector<1x32x8xf32>
    %324 = vector.shape_cast %323 : vector<1x32x8xf32> to vector<32x8xf32>
    %cst_89 = arith.constant dense<0.000000e+00> : vector<4x8xf32>
    %325 = tpu.matmul %322, %324, %cst_89 {dimension_numbers = #tpu.dot_dimension_numbers<[1], [0], [0], [1], [0, 0, 1, 1], [], []>} : vector<4x32xf32>, vector<32x8xf32>, vector<4x8xf32> -> vector<4x8xf32>
    %c3_90 = arith.constant 3 : index
    %c0_91 = arith.constant 0 : index
    %c0_92 = arith.constant 0 : index
    %326 = vector.load %arg9[%c3_90, %c0_91, %c0_92] : memref<8x1x8xf32, #tpu.memory_space<vmem>>, vector<1x1x8xf32>
    %327 = vector.shape_cast %326 : vector<1x1x8xf32> to vector<1x8xf32>
    %328 = vector.broadcast %327 : vector<1x8xf32> to vector<4x8xf32>
    %329 = arith.addf %325, %328 : vector<4x8xf32>
    %c0_93 = arith.constant 0 : index
    %c3_94 = arith.constant 3 : index
    %c0_95 = arith.constant 0 : index
    %330 = vector.load %arg10[%c0_93, %c3_94, %c0_95] : memref<4x8x8xf32, #tpu.memory_space<vmem>>, vector<4x1x8xf32>
    %331 = vector.shape_cast %330 : vector<4x1x8xf32> to vector<4x8xf32>
    %332 = vector.shape_cast %329 : vector<4x8xf32> to vector<4x1x8xf32>
    tpu.vector_store %arg10[%c0_93, %c3_94, %c0_95], %332 {strides = array<i32>} : memref<4x8x8xf32, #tpu.memory_space<vmem>>, vector<4x1x8xf32>,
    %333 = vector.extract_strided_slice %288 {offsets = [16, 0], sizes = [4, 32], strides = [1, 1]} : vector<32x32xf32> to vector<4x32xf32>
    %c4 = arith.constant 4 : index
    %c0_96 = arith.constant 0 : index
    %c0_97 = arith.constant 0 : index
    %334 = vector.load %arg8[%c4, %c0_96, %c0_97] : memref<8x32x8xf32, #tpu.memory_space<vmem>>, vector<1x32x8xf32>
    %335 = vector.shape_cast %334 : vector<1x32x8xf32> to vector<32x8xf32>
    %cst_98 = arith.constant dense<0.000000e+00> : vector<4x8xf32>
    %336 = tpu.matmul %333, %335, %cst_98 {dimension_numbers = #tpu.dot_dimension_numbers<[1], [0], [0], [1], [0, 0, 1, 1], [], []>} : vector<4x32xf32>, vector<32x8xf32>, vector<4x8xf32> -> vector<4x8xf32>
    %c4_99 = arith.constant 4 : index
    %c0_100 = arith.constant 0 : index
    %c0_101 = arith.constant 0 : index
    %337 = vector.load %arg9[%c4_99, %c0_100, %c0_101] : memref<8x1x8xf32, #tpu.memory_space<vmem>>, vector<1x1x8xf32>
    %338 = vector.shape_cast %337 : vector<1x1x8xf32> to vector<1x8xf32>
    %339 = vector.broadcast %338 : vector<1x8xf32> to vector<4x8xf32>
    %340 = arith.addf %336, %339 : vector<4x8xf32>
    %c0_102 = arith.constant 0 : index
    %c4_103 = arith.constant 4 : index
    %c0_104 = arith.constant 0 : index
    %341 = vector.load %arg10[%c0_102, %c4_103, %c0_104] : memref<4x8x8xf32, #tpu.memory_space<vmem>>, vector<4x1x8xf32>
    %342 = vector.shape_cast %341 : vector<4x1x8xf32> to vector<4x8xf32>
    %343 = vector.shape_cast %340 : vector<4x8xf32> to vector<4x1x8xf32>
    tpu.vector_store %arg10[%c0_102, %c4_103, %c0_104], %343 {strides = array<i32>} : memref<4x8x8xf32, #tpu.memory_space<vmem>>, vector<4x1x8xf32>,
    %344 = vector.extract_strided_slice %288 {offsets = [20, 0], sizes = [4, 32], strides = [1, 1]} : vector<32x32xf32> to vector<4x32xf32>
    %c5 = arith.constant 5 : index
    %c0_105 = arith.constant 0 : index
    %c0_106 = arith.constant 0 : index
    %345 = vector.load %arg8[%c5, %c0_105, %c0_106] : memref<8x32x8xf32, #tpu.memory_space<vmem>>, vector<1x32x8xf32>
    %346 = vector.shape_cast %345 : vector<1x32x8xf32> to vector<32x8xf32>
    %cst_107 = arith.constant dense<0.000000e+00> : vector<4x8xf32>
    %347 = tpu.matmul %344, %346, %cst_107 {dimension_numbers = #tpu.dot_dimension_numbers<[1], [0], [0], [1], [0, 0, 1, 1], [], []>} : vector<4x32xf32>, vector<32x8xf32>, vector<4x8xf32> -> vector<4x8xf32>
    %c5_108 = arith.constant 5 : index
    %c0_109 = arith.constant 0 : index
    %c0_110 = arith.constant 0 : index
    %348 = vector.load %arg9[%c5_108, %c0_109, %c0_110] : memref<8x1x8xf32, #tpu.memory_space<vmem>>, vector<1x1x8xf32>
    %349 = vector.shape_cast %348 : vector<1x1x8xf32> to vector<1x8xf32>
    %350 = vector.broadcast %349 : vector<1x8xf32> to vector<4x8xf32>
    %351 = arith.addf %347, %350 : vector<4x8xf32>
    %c0_111 = arith.constant 0 : index
    %c5_112 = arith.constant 5 : index
    %c0_113 = arith.constant 0 : index
    %352 = vector.load %arg10[%c0_111, %c5_112, %c0_113] : memref<4x8x8xf32, #tpu.memory_space<vmem>>, vector<4x1x8xf32>
    %353 = vector.shape_cast %352 : vector<4x1x8xf32> to vector<4x8xf32>
    %354 = vector.shape_cast %351 : vector<4x8xf32> to vector<4x1x8xf32>
    tpu.vector_store %arg10[%c0_111, %c5_112, %c0_113], %354 {strides = array<i32>} : memref<4x8x8xf32, #tpu.memory_space<vmem>>, vector<4x1x8xf32>,
    %355 = vector.extract_strided_slice %288 {offsets = [24, 0], sizes = [4, 32], strides = [1, 1]} : vector<32x32xf32> to vector<4x32xf32>
    %c6 = arith.constant 6 : index
    %c0_114 = arith.constant 0 : index
    %c0_115 = arith.constant 0 : index
    %356 = vector.load %arg8[%c6, %c0_114, %c0_115] : memref<8x32x8xf32, #tpu.memory_space<vmem>>, vector<1x32x8xf32>
    %357 = vector.shape_cast %356 : vector<1x32x8xf32> to vector<32x8xf32>
    %cst_116 = arith.constant dense<0.000000e+00> : vector<4x8xf32>
    %358 = tpu.matmul %355, %357, %cst_116 {dimension_numbers = #tpu.dot_dimension_numbers<[1], [0], [0], [1], [0, 0, 1, 1], [], []>} : vector<4x32xf32>, vector<32x8xf32>, vector<4x8xf32> -> vector<4x8xf32>
    %c6_117 = arith.constant 6 : index
    %c0_118 = arith.constant 0 : index
    %c0_119 = arith.constant 0 : index
    %359 = vector.load %arg9[%c6_117, %c0_118, %c0_119] : memref<8x1x8xf32, #tpu.memory_space<vmem>>, vector<1x1x8xf32>
    %360 = vector.shape_cast %359 : vector<1x1x8xf32> to vector<1x8xf32>
    %361 = vector.broadcast %360 : vector<1x8xf32> to vector<4x8xf32>
    %362 = arith.addf %358, %361 : vector<4x8xf32>
    %c0_120 = arith.constant 0 : index
    %c6_121 = arith.constant 6 : index
    %c0_122 = arith.constant 0 : index
    %363 = vector.load %arg10[%c0_120, %c6_121, %c0_122] : memref<4x8x8xf32, #tpu.memory_space<vmem>>, vector<4x1x8xf32>
    %364 = vector.shape_cast %363 : vector<4x1x8xf32> to vector<4x8xf32>
    %365 = vector.shape_cast %362 : vector<4x8xf32> to vector<4x1x8xf32>
    tpu.vector_store %arg10[%c0_120, %c6_121, %c0_122], %365 {strides = array<i32>} : memref<4x8x8xf32, #tpu.memory_space<vmem>>, vector<4x1x8xf32>,
    %366 = vector.extract_strided_slice %288 {offsets = [28, 0], sizes = [4, 32], strides = [1, 1]} : vector<32x32xf32> to vector<4x32xf32>
    %c7 = arith.constant 7 : index
    %c0_123 = arith.constant 0 : index
    %c0_124 = arith.constant 0 : index
    %367 = vector.load %arg8[%c7, %c0_123, %c0_124] : memref<8x32x8xf32, #tpu.memory_space<vmem>>, vector<1x32x8xf32>
    %368 = vector.shape_cast %367 : vector<1x32x8xf32> to vector<32x8xf32>
    %cst_125 = arith.constant dense<0.000000e+00> : vector<4x8xf32>
    %369 = tpu.matmul %366, %368, %cst_125 {dimension_numbers = #tpu.dot_dimension_numbers<[1], [0], [0], [1], [0, 0, 1, 1], [], []>} : vector<4x32xf32>, vector<32x8xf32>, vector<4x8xf32> -> vector<4x8xf32>
    %c7_126 = arith.constant 7 : index
    %c0_127 = arith.constant 0 : index
    %c0_128 = arith.constant 0 : index
    %370 = vector.load %arg9[%c7_126, %c0_127, %c0_128] : memref<8x1x8xf32, #tpu.memory_space<vmem>>, vector<1x1x8xf32>
    %371 = vector.shape_cast %370 : vector<1x1x8xf32> to vector<1x8xf32>
    %372 = vector.broadcast %371 : vector<1x8xf32> to vector<4x8xf32>
    %373 = arith.addf %369, %372 : vector<4x8xf32>
    %c0_129 = arith.constant 0 : index
    %c7_130 = arith.constant 7 : index
    %c0_131 = arith.constant 0 : index
    %374 = vector.load %arg10[%c0_129, %c7_130, %c0_131] : memref<4x8x8xf32, #tpu.memory_space<vmem>>, vector<4x1x8xf32>
    %375 = vector.shape_cast %374 : vector<4x1x8xf32> to vector<4x8xf32>
    %376 = vector.shape_cast %373 : vector<4x8xf32> to vector<4x1x8xf32>
    tpu.vector_store %arg10[%c0_129, %c7_130, %c0_131], %376 {strides = array<i32>} : memref<4x8x8xf32, #tpu.memory_space<vmem>>, vector<4x1x8xf32>,
    return
  }
}

</mosaic_0001>

<llo_original>
// kernel: tpu_custom_call.1
$region0: #{tpu_custom_call.1}
  #allocation0 [shape = 'u32[]', space=smem, size = 0x4, offset = 0x4, fixed_abs, tag = 'smem constant byte address 0x4 - core index']
  #allocation1 [shape = 'u32[144,128]{1,0:T(1,128)}', space=vmem, size = 0x12000, scoped, tag = 'internal scratch']
  %s0 = inlined_call_operand.vmem [shape: f32[32,8], index: 0, kind: input, shape index: {}]
  %s1 = inlined_call_operand.vmem [shape: f32[8,128], index: 1, kind: input, shape index: {}]
  %s2 = inlined_call_operand.vmem [shape: f32[32,128], index: 2, kind: input, shape index: {}]
  %s3 = inlined_call_operand.vmem [shape: f32[1,128], index: 3, kind: input, shape index: {}]
  %s4 = inlined_call_operand.vmem [shape: f32[1,8], index: 4, kind: input, shape index: {}]
  %s5 = inlined_call_operand.vmem [shape: f32[1,8], index: 5, kind: input, shape index: {}]
  %s6 = inlined_call_operand.vmem [shape: f32[1,32], index: 6, kind: input, shape index: {}]
  %s7 = inlined_call_operand.vmem [shape: f32[1,32], index: 7, kind: input, shape index: {}]
  %s8 = inlined_call_operand.vmem [shape: f32[8,32,8], index: 8, kind: input, shape index: {}]
  %s9 = inlined_call_operand.vmem [shape: f32[8,1,8], index: 9, kind: input, shape index: {}]
  %s10 = inlined_call_operand.hbm [shape: f32[4,8,8], index: 10, kind: output, shape index: {}]
  %s11 = sld [smem:[#allocation0]]
  $region50: #{tpu_custom_call.1} parent=0
    _
  %s13 = ssub.s32 1, %s11
  %s14 = scalar_select 0, %s13, %s11
  $region1: #{tpu_custom_call.1} parent=0
    #allocation2 [shape = 'u8[16384]{0}', space=vmem, size = 0x4000, scoped, tag = 'output window, operand 0, single buffered']
    #allocation3 [shape = 's32[1]{0}', space=sflag, size = 0x4, scoped, tag = 'scoped memory for tpu_custom_call.1']
    %15 = vsyncpa [#allocation3], 0
    // Predicated region
    $region2: #{tpu_custom_call.1} parent=1 // pred_check
      _
    $region3: #{tpu_custom_call.1} parent=1 // pred_check_branch
      %17 = sbr.rel (0) target = $region5
    $region4: #{tpu_custom_call.1} parent=1 // pred_region
      _
    $region5: #{tpu_custom_call.1} parent=1 // pred_fallthru
      _
    // Predicated region
    $region6: #{tpu_custom_call.1} parent=1 // pred_check
      _
    $region7: #{tpu_custom_call.1} parent=1 // pred_check_branch
      %19 = sbr.rel (0) target = $region9
    $region8: #{tpu_custom_call.1} parent=1 // pred_region
      _
    $region9: #{tpu_custom_call.1} parent=1 // pred_fallthru
      _
    // Predicated region
    $region10: #{tpu_custom_call.1} parent=1 // pred_check
      _
    $region11: #{tpu_custom_call.1} parent=1 // pred_check_branch
      %21 = sbr.rel (0) target = $region13
    $region12: #{tpu_custom_call.1} parent=1 // pred_region
      _
    $region13: #{tpu_custom_call.1} parent=1 // pred_fallthru
      _
    // Predicated region
    $region14: #{tpu_custom_call.1} parent=1 // pred_check
      _
    $region15: #{tpu_custom_call.1} parent=1 // pred_check_branch
      %23 = sbr.rel (0) target = $region17
    $region16: #{tpu_custom_call.1} parent=1 // pred_region
      _
    $region17: #{tpu_custom_call.1} parent=1 // pred_fallthru
      _
    // Predicated region
    $region18: #{tpu_custom_call.1} parent=1 // pred_check
      _
    $region19: #{tpu_custom_call.1} parent=1 // pred_check_branch
      %25 = sbr.rel (0) target = $region21
    $region20: #{tpu_custom_call.1} parent=1 // pred_region
      _
    $region21: #{tpu_custom_call.1} parent=1 // pred_fallthru
      _
    // Predicated region
    $region22: #{tpu_custom_call.1} parent=1 // pred_check
      _
    $region23: #{tpu_custom_call.1} parent=1 // pred_check_branch
      %27 = sbr.rel (0) target = $region25
    $region24: #{tpu_custom_call.1} parent=1 // pred_region
      _
    $region25: #{tpu_custom_call.1} parent=1 // pred_fallthru
      _
    // Predicated region
    $region26: #{tpu_custom_call.1} parent=1 // pred_check
      _
    $region27: #{tpu_custom_call.1} parent=1 // pred_check_branch
      %29 = sbr.rel (0) target = $region29
    $region28: #{tpu_custom_call.1} parent=1 // pred_region
      _
    $region29: #{tpu_custom_call.1} parent=1 // pred_fallthru
      _
    // Predicated region
    $region30: #{tpu_custom_call.1} parent=1 // pred_check
      _
    $region31: #{tpu_custom_call.1} parent=1 // pred_check_branch
      %31 = sbr.rel (0) target = $region33
    $region32: #{tpu_custom_call.1} parent=1 // pred_region
      _
    $region33: #{tpu_custom_call.1} parent=1 // pred_fallthru
      _
    // Predicated region
    $region34: #{tpu_custom_call.1} parent=1 // pred_check
      _
    $region35: #{tpu_custom_call.1} parent=1 // pred_check_branch
      %33 = sbr.rel (0) target = $region37
    $region36: #{tpu_custom_call.1} parent=1 // pred_region
      _
    $region37: #{tpu_custom_call.1} parent=1 // pred_fallthru
      _
    // Predicated region
    $region38: #{tpu_custom_call.1} parent=1 // pred_check
      _
    $region39: #{tpu_custom_call.1} parent=1 // pred_check_branch
      %35 = sbr.rel (0) target = $region41
    $region40: #{tpu_custom_call.1} parent=1 // pred_region
      _
    $region41: #{tpu_custom_call.1} parent=1 // pred_fallthru
      _
    %v36 = vld [vmem:[%s0] sm:$0xff]
    %v37 = vld [vmem:[%s0 + $0x8] sm:$0xff]
    %v38 = vld [vmem:[%s0 + $0x10] sm:$0xff]
    %v39 = vld [vmem:[%s0 + $0x18] sm:$0xff]
    %vm40 = vcmask 64512
    %v41 = vsel %vm40, %v36, 0.0
    %v42 = vsel %vm40, %v37, 0.0
    %v43 = vadd.f32 %v41, %v42
    %v44 = vsel %vm40, %v38, 0.0
    %v45 = vadd.f32 %v43, %v44
    %v46 = vsel %vm40, %v39, 0.0
    %v47 = vadd.f32 %v45, %v46
    %v48 = vrot.slane %v47, 4
    %v49 = vadd.f32 %v47, %v48
    %v50 = vrot.slane %v49, 2
    %v51 = vadd.f32 %v49, %v50
    %v52 = vrot.slane %v51, 1
    %v53 = vadd.f32 %v51, %v52
    %v54 = vrcp.pop 32.0
    %v55 = vmul.f32 %v53, %v54
    %v56 = vsub.f32 %v36, %v55
    %v57 = vsub.f32 %v37, %v55
    %v58 = vsub.f32 %v38, %v55
    %v59 = vsub.f32 %v39, %v55
    %v60 = vmul.f32 %v56, %v56
    %v61 = vmul.f32 %v57, %v57
    %v62 = vmul.f32 %v58, %v58
    %v63 = vmul.f32 %v59, %v59
    %v64 = vsel %vm40, %v60, 0.0
    %v65 = vsel %vm40, %v61, 0.0
    %v66 = vadd.f32 %v64, %v65
    %v67 = vsel %vm40, %v62, 0.0
    %v68 = vadd.f32 %v66, %v67
    %v69 = vsel %vm40, %v63, 0.0
    %v70 = vadd.f32 %v68, %v69
    %v71 = vrot.slane %v70, 4
    %v72 = vadd.f32 %v70, %v71
    %v73 = vrot.slane %v72, 2
    %v74 = vadd.f32 %v72, %v73
    %v75 = vrot.slane %v74, 1
    %v76 = vadd.f32 %v74, %v75
    %v77 = vmul.f32 %v76, %v54
    %v78 = vld [vmem:[%s4] sm:$0x1]
    %v79 = vadd.f32 %v77, 1e-05
    %v80 = vrsqrt.pop %v79
    %v81 = vmul.f32 %v78, %v80
    %v82 = vld [vmem:[%s5] sm:$0x1]
    %v83 = vmul.f32 %v55, %v81
    %v84 = vsub.f32 %v82, %v83
    %v86 = vlaneseq
    %v87 = vshrl.u32 %v86, 7
    %v88 = vsub.s32 0, %v87
    %v89 = vrot.slane %v81, %v88
    %v91 = vmul.f32 %v36, %v89
    %v92 = vmul.f32 %v37, %v89
    %v93 = vmul.f32 %v38, %v89
    %v94 = vmul.f32 %v39, %v89
    %v96 = vlaneseq
    %v97 = vshrl.u32 %v96, 7
    %v98 = vsub.s32 0, %v97
    %v99 = vrot.slane %v84, %v98
    %v101 = vadd.f32 %v91, %v99
    %v102 = vadd.f32 %v92, %v99
    %v103 = vadd.f32 %v93, %v99
    %v104 = vadd.f32 %v94, %v99
    %v105 = vld [vmem:[%s1] sm:$0xff]
    %v106 = vld [vmem:[%s3] sm:$0x1]
    %v108 = vlaneseq
    %v109 = vshrl.u32 %v108, 7
    %v110 = vsub.s32 0, %v109
    %v111 = vrot.slane %v106, %v110
    %v114 = vsel %vm40, %v101, 0
    %v117 = vsel %vm40, %v102, 0
    %v120 = vsel %vm40, %v103, 0
    %v123 = vsel %vm40, %v104, 0
    %125 = vmatprep.subr.mxu0 0.0
    %126 = vmatpush1.msra.mxu0 %v105
    %127 = vmatprep.subr.mxu0 0.0
    %128 = vmatpush1.msra.mxu0 0.0
    %129 = vmatprep.subr.mxu0 0.0
    %130 = vmatpush1.msra.mxu0 0.0
    %131 = vmatprep.subr.mxu0 0.0
    %132 = vmatpush1.msra.mxu0 0.0
    %133 = vmatprep.subr.mxu0 0.0
    %134 = vmatpush1.msra.mxu0 0.0
    %135 = vmatprep.subr.mxu0 0.0
    %136 = vmatpush1.msra.mxu0 0.0
    %137 = vmatprep.subr.mxu0 0.0
    %138 = vmatpush1.msra.mxu0 0.0
    %139 = vmatprep.subr.mxu0 0.0
    %140 = vmatpush1.msra.mxu0 0.0
    %141 = vmatprep.subr.mxu0 0.0
    %142 = vmatpush1.msra.mxu0 0.0
    %143 = vmatprep.subr.mxu0 0.0
    %144 = vmatpush1.msra.mxu0 0.0
    %145 = vmatprep.subr.mxu0 0.0
    %146 = vmatpush1.msra.mxu0 0.0
    %147 = vmatprep.subr.mxu0 0.0
    %148 = vmatpush1.msra.mxu0 0.0
    %149 = vmatprep.subr.mxu0 0.0
    %150 = vmatpush1.msra.mxu0 0.0
    %151 = vmatprep.subr.mxu0 0.0
    %152 = vmatpush1.msra.mxu0 0.0
    %153 = vmatprep.subr.mxu0 0.0
    %154 = vmatpush1.msra.mxu0 0.0
    %155 = vmatprep.subr.mxu0 0.0
    %156 = vmatpush1.msra.mxu0 0.0
    %157 = vmatprep.subr.mxu0 0.0
    %158 = vmatpush1.msra.mxu0 0.0
    %159 = vmatprep.subr.mxu0 0.0
    %160 = vmatpush1.msra.mxu0 0.0
    %161 = vmatprep.subr.mxu0 0.0
    %162 = vmatpush1.msra.mxu0 0.0
    %163 = vmatprep.subr.mxu0 0.0
    %164 = vmatpush1.msra.mxu0 0.0
    %165 = vmatprep.subr.mxu0 0.0
    %166 = vmatpush1.msra.mxu0 0.0
    %167 = vmatprep.subr.mxu0 0.0
    %168 = vmatpush1.msra.mxu0 0.0
    %169 = vmatprep.subr.mxu0 0.0
    %170 = vmatpush1.msra.mxu0 0.0
    %171 = vmatprep.subr.mxu0 0.0
    %172 = vmatpush1.msra.mxu0 0.0
    %173 = vmatprep.subr.mxu0 0.0
    %174 = vmatpush1.msra.mxu0 0.0
    %175 = vmatprep.subr.mxu0 0.0
    %176 = vmatpush1.msra.mxu0 0.0
    %177 = vmatprep.subr.mxu0 0.0
    %178 = vmatpush1.msra.mxu0 0.0
    %179 = vmatprep.subr.mxu0 0.0
    %180 = vmatpush1.msra.mxu0 0.0
    %181 = vmatprep.subr.mxu0 0.0
    %182 = vmatpush1.msra.mxu0 0.0
    %183 = vmatprep.subr.mxu0 0.0
    %184 = vmatpush1.msra.mxu0 0.0
    %185 = vmatprep.subr.mxu0 0.0
    %186 = vmatpush1.msra.mxu0 0.0
    %187 = vmatprep.subr.mxu0 0.0
    %188 = vmatpush1.msra.mxu0 0.0
    %189 = vmatprep.mubr.f32.mxu0 0.0
    %190 = vmatmul.mubr.f32.gmra.mrb[0].mxu0 %v114
    %v191 = vpop.f32.mrb[0].mxu0
    %v192 = vadd.f32 %v111, %v191
    %v193 = vpop.f32.mrb[0].mxu0
    %194 = vmatprep.mubr.f32.mxu0 0.0
    %195 = vmatmul.mubr.f32.gmra.mrb[0].mxu0 %v117
    %v196 = vpop.f32.mrb[0].mxu0
    %v197 = vadd.f32 %v111, %v196
    %v198 = vpop.f32.mrb[0].mxu0
    %199 = vmatprep.mubr.f32.mxu0 0.0
    %200 = vmatmul.mubr.f32.gmra.mrb[0].mxu0 %v120
    %v201 = vpop.f32.mrb[0].mxu0
    %v202 = vadd.f32 %v111, %v201
    %v203 = vpop.f32.mrb[0].mxu0
    %204 = vmatprep.mubr.f32.mxu0 0.0
    %205 = vmatmul.mubr.f32.gmra.mrb[0].mxu0 %v123
    %v206 = vpop.f32.mrb[0].mxu0
    %v207 = vadd.f32 %v111, %v206
    %v208 = vpop.f32.mrb[0].mxu0
    %209 = vdwg.mxu0
    %v210 = vld [vmem:[%s2] sm:$0xff]
    %v211 = vld [vmem:[%s2 + $0x8] sm:$0xff]
    %v212 = vld [vmem:[%s2 + $0x10] sm:$0xff]
    %v213 = vld [vmem:[%s2 + $0x18] sm:$0xff]
    %vm214 = vcmask 261120
    %v216 = vsel %vm214, 0.0, 0
    %218 = vmatprep.subr.mxu0 0.0
    %219 = vmatpush1.msra.mxu0 %v210
    %220 = vmatprep.subr.mxu0 0.0
    %221 = vmatpush1.msra.mxu0 %v211
    %222 = vmatprep.subr.mxu0 0.0
    %223 = vmatpush1.msra.mxu0 %v212
    %224 = vmatprep.subr.mxu0 0.0
    %225 = vmatpush1.msra.mxu0 %v213
    %226 = vmatprep.subr.mxu0 0.0
    %227 = vmatpush1.msra.mxu0 0.0
    %228 = vmatprep.subr.mxu0 0.0
    %229 = vmatpush1.msra.mxu0 0.0
    %230 = vmatprep.subr.mxu0 0.0
    %231 = vmatpush1.msra.mxu0 0.0
    %232 = vmatprep.subr.mxu0 0.0
    %233 = vmatpush1.msra.mxu0 0.0
    %234 = vmatprep.subr.mxu0 0.0
    %235 = vmatpush1.msra.mxu0 0.0
    %236 = vmatprep.subr.mxu0 0.0
    %237 = vmatpush1.msra.mxu0 0.0
    %238 = vmatprep.subr.mxu0 0.0
    %239 = vmatpush1.msra.mxu0 0.0
    %240 = vmatprep.subr.mxu0 0.0
    %241 = vmatpush1.msra.mxu0 0.0
    %242 = vmatprep.subr.mxu0 0.0
    %243 = vmatpush1.msra.mxu0 0.0
    %244 = vmatprep.subr.mxu0 0.0
    %245 = vmatpush1.msra.mxu0 0.0
    %246 = vmatprep.subr.mxu0 0.0
    %247 = vmatpush1.msra.mxu0 0.0
    %248 = vmatprep.subr.mxu0 0.0
    %249 = vmatpush1.msra.mxu0 0.0
    %250 = vmatprep.subr.mxu0 0.0
    %251 = vmatpush1.msra.mxu0 0.0
    %252 = vmatprep.subr.mxu0 0.0
    %253 = vmatpush1.msra.mxu0 0.0
    %254 = vmatprep.subr.mxu0 0.0
    %255 = vmatpush1.msra.mxu0 0.0
    %256 = vmatprep.subr.mxu0 0.0
    %257 = vmatpush1.msra.mxu0 0.0
    %258 = vmatprep.subr.mxu0 0.0
    %259 = vmatpush1.msra.mxu0 0.0
    %260 = vmatprep.subr.mxu0 0.0
    %261 = vmatpush1.msra.mxu0 0.0
    %262 = vmatprep.subr.mxu0 0.0
    %263 = vmatpush1.msra.mxu0 0.0
    %264 = vmatprep.subr.mxu0 0.0
    %265 = vmatpush1.msra.mxu0 0.0
    %266 = vmatprep.subr.mxu0 0.0
    %267 = vmatpush1.msra.mxu0 0.0
    %268 = vmatprep.subr.mxu0 0.0
    %269 = vmatpush1.msra.mxu0 0.0
    %270 = vmatprep.subr.mxu0 0.0
    %271 = vmatpush1.msra.mxu0 0.0
    %272 = vmatprep.subr.mxu0 0.0
    %273 = vmatpush1.msra.mxu0 0.0
    %274 = vmatprep.subr.mxu0 0.0
    %275 = vmatpush1.msra.mxu0 0.0
    %276 = vmatprep.subr.mxu0 0.0
    %277 = vmatpush1.msra.mxu0 0.0
    %278 = vmatprep.subr.mxu0 0.0
    %279 = vmatpush1.msra.mxu0 0.0
    %280 = vmatprep.subr.mxu0 0.0
    %281 = vmatpush1.msra.mxu0 0.0
    %282 = vmatprep.mubr.f32.mxu0 0.0
    %283 = vmatmul.mubr.f32.gmra.mrb[0].mxu0 %v216
    %v284 = vpop.f32.mrb[0].mxu0
    %v285 = vadd.f32 0.0, %v284
    %v286 = vpop.f32.mrb[0].mxu0
    %287 = vdwg.mxu0
    %v289 = vrot.slane %v285, 1
    %v290 = vrot.slane %v285, 2
    %v291 = vrot.slane %v285, 3
    %v296 = vadd.f32 %v192, %v285
    %v297 = vadd.f32 %v197, %v289
    %v298 = vadd.f32 %v202, %v290
    %v299 = vadd.f32 %v207, %v291
    %v300 = vxor.u32 %v296, 2147483648
    %v301 = vxor.u32 %v297, 2147483648
    %v302 = vxor.u32 %v298, 2147483648
    %v303 = vxor.u32 %v299, 2147483648
    %v304 = vmul.f32 %v300, 1.442695
    %v305 = vpow.pop %v304
    %v306 = vmul.f32 %v301, 1.442695
    %v307 = vpow.pop %v306
    %v308 = vmul.f32 %v302, 1.442695
    %v309 = vpow.pop %v308
    %v310 = vmul.f32 %v303, 1.442695
    %v311 = vpow.pop %v310
    %v312 = vadd.f32 %v305, 1.0
    %v313 = vadd.f32 %v307, 1.0
    %v314 = vadd.f32 %v309, 1.0
    %v315 = vadd.f32 %v311, 1.0
    %v316 = vrcp.pop %v312
    %v317 = vmul.f32 1.0, %v316
    %v318 = vrcp.pop %v313
    %v319 = vmul.f32 1.0, %v318
    %v320 = vrcp.pop %v314
    %v321 = vmul.f32 1.0, %v320
    %v322 = vrcp.pop %v315
    %v323 = vmul.f32 1.0, %v322
    %v324 = vtanh.pop %v296
    %v325 = vtanh.pop %v297
    %v326 = vtanh.pop %v298
    %v327 = vtanh.pop %v299
    %v328 = vmul.f32 %v317, 0.0
    %v329 = vmul.f32 %v319, 0.0
    %v330 = vmul.f32 %v321, 0.0
    %v331 = vmul.f32 %v323, 0.0
    %336 = vrot.lane.b32.xlu0 %v324, 64
    %v337 = vpop.permute.xlu0 %336
    %338 = vrot.lane.b32.xlu0 %v325, 64
    %v339 = vpop.permute.xlu0 %338
    %340 = vrot.lane.b32.xlu0 %v326, 64
    %v341 = vpop.permute.xlu0 %340
    %342 = vrot.lane.b32.xlu0 %v327, 64
    %v343 = vpop.permute.xlu0 %342
    %v348 = vmul.f32 %v317, %v337
    %v349 = vmul.f32 %v319, %v339
    %v350 = vmul.f32 %v321, %v341
    %v351 = vmul.f32 %v323, %v343
    %356 = vrot.lane.b32.xlu0 %v348, 32
    %v357 = vpop.permute.xlu0 %356
    %358 = vrot.lane.b32.xlu0 %v349, 32
    %v359 = vpop.permute.xlu0 %358
    %360 = vrot.lane.b32.xlu0 %v350, 32
    %v361 = vpop.permute.xlu0 %360
    %362 = vrot.lane.b32.xlu0 %v351, 32
    %v363 = vpop.permute.xlu0 %362
    %v368 = vadd.f32 %v328, %v357
    %v369 = vadd.f32 %v329, %v359
    %v370 = vadd.f32 %v330, %v361
    %v371 = vadd.f32 %v331, %v363
    %v372 = vtanh.pop %v368
    %v373 = vtanh.pop %v369
    %v374 = vtanh.pop %v370
    %v375 = vtanh.pop %v371
    %380 = vrot.lane.b32.xlu0 %v372, 64
    %v381 = vpop.permute.xlu0 %380
    %382 = vrot.lane.b32.xlu0 %v373, 64
    %v383 = vpop.permute.xlu0 %382
    %384 = vrot.lane.b32.xlu0 %v374, 64
    %v385 = vpop.permute.xlu0 %384
    %386 = vrot.lane.b32.xlu0 %v375, 64
    %v387 = vpop.permute.xlu0 %386
    %v392 = vmul.f32 %v317, %v381
    %v393 = vmul.f32 %v319, %v383
    %v394 = vmul.f32 %v321, %v385
    %v395 = vmul.f32 %v323, %v387
    %v400 = vrot.slane %v393, 7
    %vm401 = vcmask 1041409
    %v402 = vsel %vm401, %v400, %v392
    %v403 = vrot.slane %v394, 6
    %vm404 = vcmask 1042434
    %v405 = vsel %vm404, %v403, %v402
    %v406 = vrot.slane %v395, 5
    %vm407 = vcmask 1043459
    %v408 = vsel %vm407, %v406, %v405
    %409 = vrot.lane.b32.xlu0 %v408, 32
    %v410 = vpop.permute.xlu0 %409
    %v411 = vsel %vm214, %v410, 0
    %413 = vmatprep.subr.mxu0 0.0
    %414 = vmatpush1.msra.mxu0 %v210
    %415 = vmatprep.subr.mxu0 0.0
    %416 = vmatpush1.msra.mxu0 %v211
    %417 = vmatprep.subr.mxu0 0.0
    %418 = vmatpush1.msra.mxu0 %v212
    %419 = vmatprep.subr.mxu0 0.0
    %420 = vmatpush1.msra.mxu0 %v213
    %421 = vmatprep.subr.mxu0 0.0
    %422 = vmatpush1.msra.mxu0 0.0
    %423 = vmatprep.subr.mxu0 0.0
    %424 = vmatpush1.msra.mxu0 0.0
    %425 = vmatprep.subr.mxu0 0.0
    %426 = vmatpush1.msra.mxu0 0.0
    %427 = vmatprep.subr.mxu0 0.0
    %428 = vmatpush1.msra.mxu0 0.0
    %429 = vmatprep.subr.mxu0 0.0
    %430 = vmatpush1.msra.mxu0 0.0
    %431 = vmatprep.subr.mxu0 0.0
    %432 = vmatpush1.msra.mxu0 0.0
    %433 = vmatprep.subr.mxu0 0.0
    %434 = vmatpush1.msra.mxu0 0.0
    %435 = vmatprep.subr.mxu0 0.0
    %436 = vmatpush1.msra.mxu0 0.0
    %437 = vmatprep.subr.mxu0 0.0
    %438 = vmatpush1.msra.mxu0 0.0
    %439 = vmatprep.subr.mxu0 0.0
    %440 = vmatpush1.msra.mxu0 0.0
    %441 = vmatprep.subr.mxu0 0.0
    %442 = vmatpush1.msra.mxu0 0.0
    %443 = vmatprep.subr.mxu0 0.0
    %444 = vmatpush1.msra.mxu0 0.0
    %445 = vmatprep.subr.mxu0 0.0
    %446 = vmatpush1.msra.mxu0 0.0
    %447 = vmatprep.subr.mxu0 0.0
    %448 = vmatpush1.msra.mxu0 0.0
    %449 = vmatprep.subr.mxu0 0.0
    %450 = vmatpush1.msra.mxu0 0.0
    %451 = vmatprep.subr.mxu0 0.0
    %452 = vmatpush1.msra.mxu0 0.0
    %453 = vmatprep.subr.mxu0 0.0
    %454 = vmatpush1.msra.mxu0 0.0
    %455 = vmatprep.subr.mxu0 0.0
    %456 = vmatpush1.msra.mxu0 0.0
    %457 = vmatprep.subr.mxu0 0.0
    %458 = vmatpush1.msra.mxu0 0.0
    %459 = vmatprep.subr.mxu0 0.0
    %460 = vmatpush1.msra.mxu0 0.0
    %461 = vmatprep.subr.mxu0 0.0
    %462 = vmatpush1.msra.mxu0 0.0
    %463 = vmatprep.subr.mxu0 0.0
    %464 = vmatpush1.msra.mxu0 0.0
    %465 = vmatprep.subr.mxu0 0.0
    %466 = vmatpush1.msra.mxu0 0.0
    %467 = vmatprep.subr.mxu0 0.0
    %468 = vmatpush1.msra.mxu0 0.0
    %469 = vmatprep.subr.mxu0 0.0
    %470 = vmatpush1.msra.mxu0 0.0
    %471 = vmatprep.subr.mxu0 0.0
    %472 = vmatpush1.msra.mxu0 0.0
    %473 = vmatprep.subr.mxu0 0.0
    %474 = vmatpush1.msra.mxu0 0.0
    %475 = vmatprep.subr.mxu0 0.0
    %476 = vmatpush1.msra.mxu0 0.0
    %477 = vmatprep.mubr.f32.mxu0 0.0
    %478 = vmatmul.mubr.f32.gmra.mrb[0].mxu0 %v411
    %v479 = vpop.f32.mrb[0].mxu0
    %v480 = vadd.f32 0.0, %v479
    %v481 = vpop.f32.mrb[0].mxu0
    %482 = vdwg.mxu0
    %v484 = vrot.slane %v480, 7
    %v485 = vrot.slane %v480, 1
    %v486 = vrot.slane %v480, 2
    %v491 = vadd.f32 %v192, %v484
    %v492 = vadd.f32 %v197, %v480
    %v493 = vadd.f32 %v202, %v485
    %v494 = vadd.f32 %v207, %v486
    %v495 = vxor.u32 %v491, 2147483648
    %v496 = vxor.u32 %v492, 2147483648
    %v497 = vxor.u32 %v493, 2147483648
    %v498 = vxor.u32 %v494, 2147483648
    %v499 = vmul.f32 %v495, 1.442695
    %v500 = vpow.pop %v499
    %v501 = vmul.f32 %v496, 1.442695
    %v502 = vpow.pop %v501
    %v503 = vmul.f32 %v497, 1.442695
    %v504 = vpow.pop %v503
    %v505 = vmul.f32 %v498, 1.442695
    %v506 = vpow.pop %v505
    %v507 = vadd.f32 %v500, 1.0
    %v508 = vadd.f32 %v502, 1.0
    %v509 = vadd.f32 %v504, 1.0
    %v510 = vadd.f32 %v506, 1.0
    %v511 = vrcp.pop %v507
    %v512 = vmul.f32 1.0, %v511
    %v513 = vrcp.pop %v508
    %v514 = vmul.f32 1.0, %v513
    %v515 = vrcp.pop %v509
    %v516 = vmul.f32 1.0, %v515
    %v517 = vrcp.pop %v510
    %v518 = vmul.f32 1.0, %v517
    %v519 = vtanh.pop %v491
    %v520 = vtanh.pop %v492
    %v521 = vtanh.pop %v493
    %v522 = vtanh.pop %v494
    %v527 = vrot.slane %v368, 7
    %v528 = vrot.slane %v369, 7
    %v529 = vrot.slane %v370, 7
    %v530 = vrot.slane %v371, 7
    %v535 = vmul.f32 %v512, %v527
    %v536 = vmul.f32 %v514, %v528
    %v537 = vmul.f32 %v516, %v529
    %v538 = vmul.f32 %v518, %v530
    %543 = vrot.lane.b32.xlu0 %v519, 64
    %v544 = vpop.permute.xlu0 %543
    %545 = vrot.lane.b32.xlu0 %v520, 64
    %v546 = vpop.permute.xlu0 %545
    %547 = vrot.lane.b32.xlu0 %v521, 64
    %v548 = vpop.permute.xlu0 %547
    %549 = vrot.lane.b32.xlu0 %v522, 64
    %v550 = vpop.permute.xlu0 %549
    %v555 = vmul.f32 %v512, %v544
    %v556 = vmul.f32 %v514, %v546
    %v557 = vmul.f32 %v516, %v548
    %v558 = vmul.f32 %v518, %v550
    %563 = vrot.lane.b32.xlu0 %v555, 32
    %v564 = vpop.permute.xlu0 %563
    %565 = vrot.lane.b32.xlu0 %v556, 32
    %v566 = vpop.permute.xlu0 %565
    %567 = vrot.lane.b32.xlu0 %v557, 32
    %v568 = vpop.permute.xlu0 %567
    %569 = vrot.lane.b32.xlu0 %v558, 32
    %v570 = vpop.permute.xlu0 %569
    %v575 = vadd.f32 %v535, %v564
    %v576 = vadd.f32 %v536, %v566
    %v577 = vadd.f32 %v537, %v568
    %v578 = vadd.f32 %v538, %v570
    %v579 = vtanh.pop %v575
    %v580 = vtanh.pop %v576
    %v581 = vtanh.pop %v577
    %v582 = vtanh.pop %v578
    %587 = vrot.lane.b32.xlu0 %v579, 64
    %v588 = vpop.permute.xlu0 %587
    %589 = vrot.lane.b32.xlu0 %v580, 64
    %v590 = vpop.permute.xlu0 %589
    %591 = vrot.lane.b32.xlu0 %v581, 64
    %v592 = vpop.permute.xlu0 %591
    %593 = vrot.lane.b32.xlu0 %v582, 64
    %v594 = vpop.permute.xlu0 %593
    %v599 = vmul.f32 %v512, %v588
    %v600 = vmul.f32 %v514, %v590
    %v601 = vmul.f32 %v516, %v592
    %v602 = vmul.f32 %v518, %v594
    %v607 = vrot.slane %v599, 1
    %v608 = vsel %vm401, %v600, %v607
    %v609 = vrot.slane %v601, 7
    %v610 = vsel %vm404, %v609, %v608
    %v611 = vrot.slane %v602, 6
    %v612 = vsel %vm407, %v611, %v610
    %613 = vrot.lane.b32.xlu0 %v612, 32
    %v614 = vpop.permute.xlu0 %613
    %v615 = vsel %vm214, %v614, 0
    %617 = vmatprep.subr.mxu0 0.0
    %618 = vmatpush1.msra.mxu0 %v210
    %619 = vmatprep.subr.mxu0 0.0
    %620 = vmatpush1.msra.mxu0 %v211
    %621 = vmatprep.subr.mxu0 0.0
    %622 = vmatpush1.msra.mxu0 %v212
    %623 = vmatprep.subr.mxu0 0.0
    %624 = vmatpush1.msra.mxu0 %v213
    %625 = vmatprep.subr.mxu0 0.0
    %626 = vmatpush1.msra.mxu0 0.0
    %627 = vmatprep.subr.mxu0 0.0
    %628 = vmatpush1.msra.mxu0 0.0
    %629 = vmatprep.subr.mxu0 0.0
    %630 = vmatpush1.msra.mxu0 0.0
    %631 = vmatprep.subr.mxu0 0.0
    %632 = vmatpush1.msra.mxu0 0.0
    %633 = vmatprep.subr.mxu0 0.0
    %634 = vmatpush1.msra.mxu0 0.0
    %635 = vmatprep.subr.mxu0 0.0
    %636 = vmatpush1.msra.mxu0 0.0
    %637 = vmatprep.subr.mxu0 0.0
    %638 = vmatpush1.msra.mxu0 0.0
    %639 = vmatprep.subr.mxu0 0.0
    %640 = vmatpush1.msra.mxu0 0.0
    %641 = vmatprep.subr.mxu0 0.0
    %642 = vmatpush1.msra.mxu0 0.0
    %643 = vmatprep.subr.mxu0 0.0
    %644 = vmatpush1.msra.mxu0 0.0
    %645 = vmatprep.subr.mxu0 0.0
    %646 = vmatpush1.msra.mxu0 0.0
    %647 = vmatprep.subr.mxu0 0.0
    %648 = vmatpush1.msra.mxu0 0.0
    %649 = vmatprep.subr.mxu0 0.0
    %650 = vmatpush1.msra.mxu0 0.0
    %651 = vmatprep.subr.mxu0 0.0
    %652 = vmatpush1.msra.mxu0 0.0
    %653 = vmatprep.subr.mxu0 0.0
    %654 = vmatpush1.msra.mxu0 0.0
    %655 = vmatprep.subr.mxu0 0.0
    %656 = vmatpush1.msra.mxu0 0.0
    %657 = vmatprep.subr.mxu0 0.0
    %658 = vmatpush1.msra.mxu0 0.0
    %659 = vmatprep.subr.mxu0 0.0
    %660 = vmatpush1.msra.mxu0 0.0
    %661 = vmatprep.subr.mxu0 0.0
    %662 = vmatpush1.msra.mxu0 0.0
    %663 = vmatprep.subr.mxu0 0.0
    %664 = vmatpush1.msra.mxu0 0.0
    %665 = vmatprep.subr.mxu0 0.0
    %666 = vmatpush1.msra.mxu0 0.0
    %667 = vmatprep.subr.mxu0 0.0
    %668 = vmatpush1.msra.mxu0 0.0
    %669 = vmatprep.subr.mxu0 0.0
    %670 = vmatpush1.msra.mxu0 0.0
    %671 = vmatprep.subr.mxu0 0.0
    %672 = vmatpush1.msra.mxu0 0.0
    %673 = vmatprep.subr.mxu0 0.0
    %674 = vmatpush1.msra.mxu0 0.0
    %675 = vmatprep.subr.mxu0 0.0
    %676 = vmatpush1.msra.mxu0 0.0
    %677 = vmatprep.subr.mxu0 0.0
    %678 = vmatpush1.msra.mxu0 0.0
    %679 = vmatprep.subr.mxu0 0.0
    %680 = vmatpush1.msra.mxu0 0.0
    %681 = vmatprep.mubr.f32.mxu0 0.0
    %682 = vmatmul.mubr.f32.gmra.mrb[0].mxu0 %v615
    %v683 = vpop.f32.mrb[0].mxu0
    %v684 = vadd.f32 0.0, %v683
    %v685 = vpop.f32.mrb[0].mxu0
    %686 = vdwg.mxu0
    %v688 = vrot.slane %v684, 6
    %v689 = vrot.slane %v684, 7
    %v690 = vrot.slane %v684, 1
    %v695 = vadd.f32 %v192, %v688
    %v696 = vadd.f32 %v197, %v689
    %v697 = vadd.f32 %v202, %v684
    %v698 = vadd.f32 %v207, %v690
    %v699 = vxor.u32 %v695, 2147483648
    %v700 = vxor.u32 %v696, 2147483648
    %v701 = vxor.u32 %v697, 2147483648
    %v702 = vxor.u32 %v698, 2147483648
    %v703 = vmul.f32 %v699, 1.442695
    %v704 = vpow.pop %v703
    %v705 = vmul.f32 %v700, 1.442695
    %v706 = vpow.pop %v705
    %v707 = vmul.f32 %v701, 1.442695
    %v708 = vpow.pop %v707
    %v709 = vmul.f32 %v702, 1.442695
    %v710 = vpow.pop %v709
    %v711 = vadd.f32 %v704, 1.0
    %v712 = vadd.f32 %v706, 1.0
    %v713 = vadd.f32 %v708, 1.0
    %v714 = vadd.f32 %v710, 1.0
    %v715 = vrcp.pop %v711
    %v716 = vmul.f32 1.0, %v715
    %v717 = vrcp.pop %v712
    %v718 = vmul.f32 1.0, %v717
    %v719 = vrcp.pop %v713
    %v720 = vmul.f32 1.0, %v719
    %v721 = vrcp.pop %v714
    %v722 = vmul.f32 1.0, %v721
    %v723 = vtanh.pop %v695
    %v724 = vtanh.pop %v696
    %v725 = vtanh.pop %v697
    %v726 = vtanh.pop %v698
    %v731 = vrot.slane %v575, 7
    %v732 = vrot.slane %v576, 7
    %v733 = vrot.slane %v577, 7
    %v734 = vrot.slane %v578, 7
    %v739 = vmul.f32 %v716, %v731
    %v740 = vmul.f32 %v718, %v732
    %v741 = vmul.f32 %v720, %v733
    %v742 = vmul.f32 %v722, %v734
    %747 = vrot.lane.b32.xlu0 %v723, 64
    %v748 = vpop.permute.xlu0 %747
    %749 = vrot.lane.b32.xlu0 %v724, 64
    %v750 = vpop.permute.xlu0 %749
    %751 = vrot.lane.b32.xlu0 %v725, 64
    %v752 = vpop.permute.xlu0 %751
    %753 = vrot.lane.b32.xlu0 %v726, 64
    %v754 = vpop.permute.xlu0 %753
    %v759 = vmul.f32 %v716, %v748
    %v760 = vmul.f32 %v718, %v750
    %v761 = vmul.f32 %v720, %v752
    %v762 = vmul.f32 %v722, %v754
    %767 = vrot.lane.b32.xlu0 %v759, 32
    %v768 = vpop.permute.xlu0 %767
    %769 = vrot.lane.b32.xlu0 %v760, 32
    %v770 = vpop.permute.xlu0 %769
    %771 = vrot.lane.b32.xlu0 %v761, 32
    %v772 = vpop.permute.xlu0 %771
    %773 = vrot.lane.b32.xlu0 %v762, 32
    %v774 = vpop.permute.xlu0 %773
    %v779 = vadd.f32 %v739, %v768
    %v780 = vadd.f32 %v740, %v770
    %v781 = vadd.f32 %v741, %v772
    %v782 = vadd.f32 %v742, %v774
    %v783 = vtanh.pop %v779
    %v784 = vtanh.pop %v780
    %v785 = vtanh.pop %v781
    %v786 = vtanh.pop %v782
    %791 = vrot.lane.b32.xlu0 %v783, 64
    %v792 = vpop.permute.xlu0 %791
    %793 = vrot.lane.b32.xlu0 %v784, 64
    %v794 = vpop.permute.xlu0 %793
    %795 = vrot.lane.b32.xlu0 %v785, 64
    %v796 = vpop.permute.xlu0 %795
    %797 = vrot.lane.b32.xlu0 %v786, 64
    %v798 = vpop.permute.xlu0 %797
    %v803 = vmul.f32 %v716, %v792
    %v804 = vmul.f32 %v718, %v794
    %v805 = vmul.f32 %v720, %v796
    %v806 = vmul.f32 %v722, %v798
    %v811 = vrot.slane %v803, 2
    %v812 = vrot.slane %v804, 1
    %v813 = vsel %vm401, %v812, %v811
    %v814 = vsel %vm404, %v805, %v813
    %v815 = vrot.slane %v806, 7
    %v816 = vsel %vm407, %v815, %v814
    %817 = vrot.lane.b32.xlu0 %v816, 32
    %v818 = vpop.permute.xlu0 %817
    %v819 = vsel %vm214, %v818, 0
    %821 = vmatprep.subr.mxu0 0.0
    %822 = vmatpush1.msra.mxu0 %v210
    %823 = vmatprep.subr.mxu0 0.0
    %824 = vmatpush1.msra.mxu0 %v211
    %825 = vmatprep.subr.mxu0 0.0
    %826 = vmatpush1.msra.mxu0 %v212
    %827 = vmatprep.subr.mxu0 0.0
    %828 = vmatpush1.msra.mxu0 %v213
    %829 = vmatprep.subr.mxu0 0.0
    %830 = vmatpush1.msra.mxu0 0.0
    %831 = vmatprep.subr.mxu0 0.0
    %832 = vmatpush1.msra.mxu0 0.0
    %833 = vmatprep.subr.mxu0 0.0
    %834 = vmatpush1.msra.mxu0 0.0
    %835 = vmatprep.subr.mxu0 0.0
    %836 = vmatpush1.msra.mxu0 0.0
    %837 = vmatprep.subr.mxu0 0.0
    %838 = vmatpush1.msra.mxu0 0.0
    %839 = vmatprep.subr.mxu0 0.0
    %840 = vmatpush1.msra.mxu0 0.0
    %841 = vmatprep.subr.mxu0 0.0
    %842 = vmatpush1.msra.mxu0 0.0
    %843 = vmatprep.subr.mxu0 0.0
    %844 = vmatpush1.msra.mxu0 0.0
    %845 = vmatprep.subr.mxu0 0.0
    %846 = vmatpush1.msra.mxu0 0.0
    %847 = vmatprep.subr.mxu0 0.0
    %848 = vmatpush1.msra.mxu0 0.0
    %849 = vmatprep.subr.mxu0 0.0
    %850 = vmatpush1.msra.mxu0 0.0
    %851 = vmatprep.subr.mxu0 0.0
    %852 = vmatpush1.msra.mxu0 0.0
    %853 = vmatprep.subr.mxu0 0.0
    %854 = vmatpush1.msra.mxu0 0.0
    %855 = vmatprep.subr.mxu0 0.0
    %856 = vmatpush1.msra.mxu0 0.0
    %857 = vmatprep.subr.mxu0 0.0
    %858 = vmatpush1.msra.mxu0 0.0
    %859 = vmatprep.subr.mxu0 0.0
    %860 = vmatpush1.msra.mxu0 0.0
    %861 = vmatprep.subr.mxu0 0.0
    %862 = vmatpush1.msra.mxu0 0.0
    %863 = vmatprep.subr.mxu0 0.0
    %864 = vmatpush1.msra.mxu0 0.0
    %865 = vmatprep.subr.mxu0 0.0
    %866 = vmatpush1.msra.mxu0 0.0
    %867 = vmatprep.subr.mxu0 0.0
    %868 = vmatpush1.msra.mxu0 0.0
    %869 = vmatprep.subr.mxu0 0.0
    %870 = vmatpush1.msra.mxu0 0.0
    %871 = vmatprep.subr.mxu0 0.0
    %872 = vmatpush1.msra.mxu0 0.0
    %873 = vmatprep.subr.mxu0 0.0
    %874 = vmatpush1.msra.mxu0 0.0
    %875 = vmatprep.subr.mxu0 0.0
    %876 = vmatpush1.msra.mxu0 0.0
    %877 = vmatprep.subr.mxu0 0.0
    %878 = vmatpush1.msra.mxu0 0.0
    %879 = vmatprep.subr.mxu0 0.0
    %880 = vmatpush1.msra.mxu0 0.0
    %881 = vmatprep.subr.mxu0 0.0
    %882 = vmatpush1.msra.mxu0 0.0
    %883 = vmatprep.subr.mxu0 0.0
    %884 = vmatpush1.msra.mxu0 0.0
    %885 = vmatprep.mubr.f32.mxu0 0.0
    %886 = vmatmul.mubr.f32.gmra.mrb[0].mxu0 %v819
    %v887 = vpop.f32.mrb[0].mxu0
    %v888 = vadd.f32 0.0, %v887
    %v889 = vpop.f32.mrb[0].mxu0
    %890 = vdwg.mxu0
    %v892 = vrot.slane %v888, 5
    %v893 = vrot.slane %v888, 6
    %v894 = vrot.slane %v888, 7
    %v899 = vadd.f32 %v192, %v892
    %v900 = vadd.f32 %v197, %v893
    %v901 = vadd.f32 %v202, %v894
    %v902 = vadd.f32 %v207, %v888
    %v903 = vxor.u32 %v899, 2147483648
    %v904 = vxor.u32 %v900, 2147483648
    %v905 = vxor.u32 %v901, 2147483648
    %v906 = vxor.u32 %v902, 2147483648
    %v907 = vmul.f32 %v903, 1.442695
    %v908 = vpow.pop %v907
    %v909 = vmul.f32 %v904, 1.442695
    %v910 = vpow.pop %v909
    %v911 = vmul.f32 %v905, 1.442695
    %v912 = vpow.pop %v911
    %v913 = vmul.f32 %v906, 1.442695
    %v914 = vpow.pop %v913
    %v915 = vadd.f32 %v908, 1.0
    %v916 = vadd.f32 %v910, 1.0
    %v917 = vadd.f32 %v912, 1.0
    %v918 = vadd.f32 %v914, 1.0
    %v919 = vrcp.pop %v915
    %v920 = vmul.f32 1.0, %v919
    %v921 = vrcp.pop %v916
    %v922 = vmul.f32 1.0, %v921
    %v923 = vrcp.pop %v917
    %v924 = vmul.f32 1.0, %v923
    %v925 = vrcp.pop %v918
    %v926 = vmul.f32 1.0, %v925
    %v927 = vtanh.pop %v899
    %v928 = vtanh.pop %v900
    %v929 = vtanh.pop %v901
    %v930 = vtanh.pop %v902
    %v935 = vrot.slane %v779, 7
    %v936 = vrot.slane %v780, 7
    %v937 = vrot.slane %v781, 7
    %v938 = vrot.slane %v782, 7
    %v943 = vmul.f32 %v920, %v935
    %v944 = vmul.f32 %v922, %v936
    %v945 = vmul.f32 %v924, %v937
    %v946 = vmul.f32 %v926, %v938
    %951 = vrot.lane.b32.xlu0 %v927, 64
    %v952 = vpop.permute.xlu0 %951
    %953 = vrot.lane.b32.xlu0 %v928, 64
    %v954 = vpop.permute.xlu0 %953
    %955 = vrot.lane.b32.xlu0 %v929, 64
    %v956 = vpop.permute.xlu0 %955
    %957 = vrot.lane.b32.xlu0 %v930, 64
    %v958 = vpop.permute.xlu0 %957
    %v963 = vmul.f32 %v920, %v952
    %v964 = vmul.f32 %v922, %v954
    %v965 = vmul.f32 %v924, %v956
    %v966 = vmul.f32 %v926, %v958
    %971 = vrot.lane.b32.xlu0 %v963, 32
    %v972 = vpop.permute.xlu0 %971
    %973 = vrot.lane.b32.xlu0 %v964, 32
    %v974 = vpop.permute.xlu0 %973
    %975 = vrot.lane.b32.xlu0 %v965, 32
    %v976 = vpop.permute.xlu0 %975
    %977 = vrot.lane.b32.xlu0 %v966, 32
    %v978 = vpop.permute.xlu0 %977
    %v983 = vadd.f32 %v943, %v972
    %v984 = vadd.f32 %v944, %v974
    %v985 = vadd.f32 %v945, %v976
    %v986 = vadd.f32 %v946, %v978
    %v987 = vtanh.pop %v983
    %v988 = vtanh.pop %v984
    %v989 = vtanh.pop %v985
    %v990 = vtanh.pop %v986
    %995 = vrot.lane.b32.xlu0 %v987, 64
    %v996 = vpop.permute.xlu0 %995
    %997 = vrot.lane.b32.xlu0 %v988, 64
    %v998 = vpop.permute.xlu0 %997
    %999 = vrot.lane.b32.xlu0 %v989, 64
    %v1000 = vpop.permute.xlu0 %999
    %1001 = vrot.lane.b32.xlu0 %v990, 64
    %v1002 = vpop.permute.xlu0 %1001
    %v1007 = vmul.f32 %v920, %v996
    %v1008 = vmul.f32 %v922, %v998
    %v1009 = vmul.f32 %v924, %v1000
    %v1010 = vmul.f32 %v926, %v1002
    %v1015 = vrot.slane %v1007, 3
    %v1016 = vrot.slane %v1008, 2
    %v1017 = vsel %vm401, %v1016, %v1015
    %v1018 = vrot.slane %v1009, 1
    %v1019 = vsel %vm404, %v1018, %v1017
    %v1020 = vsel %vm407, %v1010, %v1019
    %1021 = vrot.lane.b32.xlu0 %v1020, 32
    %v1022 = vpop.permute.xlu0 %1021
    %v1023 = vsel %vm214, %v1022, 0
    %1025 = vmatprep.subr.mxu0 0.0
    %1026 = vmatpush1.msra.mxu0 %v210
    %1027 = vmatprep.subr.mxu0 0.0
    %1028 = vmatpush1.msra.mxu0 %v211
    %1029 = vmatprep.subr.mxu0 0.0
    %1030 = vmatpush1.msra.mxu0 %v212
    %1031 = vmatprep.subr.mxu0 0.0
    %1032 = vmatpush1.msra.mxu0 %v213
    %1033 = vmatprep.subr.mxu0 0.0
    %1034 = vmatpush1.msra.mxu0 0.0
    %1035 = vmatprep.subr.mxu0 0.0
    %1036 = vmatpush1.msra.mxu0 0.0
    %1037 = vmatprep.subr.mxu0 0.0
    %1038 = vmatpush1.msra.mxu0 0.0
    %1039 = vmatprep.subr.mxu0 0.0
    %1040 = vmatpush1.msra.mxu0 0.0
    %1041 = vmatprep.subr.mxu0 0.0
    %1042 = vmatpush1.msra.mxu0 0.0
    %1043 = vmatprep.subr.mxu0 0.0
    %1044 = vmatpush1.msra.mxu0 0.0
    %1045 = vmatprep.subr.mxu0 0.0
    %1046 = vmatpush1.msra.mxu0 0.0
    %1047 = vmatprep.subr.mxu0 0.0
    %1048 = vmatpush1.msra.mxu0 0.0
    %1049 = vmatprep.subr.mxu0 0.0
    %1050 = vmatpush1.msra.mxu0 0.0
    %1051 = vmatprep.subr.mxu0 0.0
    %1052 = vmatpush1.msra.mxu0 0.0
    %1053 = vmatprep.subr.mxu0 0.0
    %1054 = vmatpush1.msra.mxu0 0.0
    %1055 = vmatprep.subr.mxu0 0.0
    %1056 = vmatpush1.msra.mxu0 0.0
    %1057 = vmatprep.subr.mxu0 0.0
    %1058 = vmatpush1.msra.mxu0 0.0
    %1059 = vmatprep.subr.mxu0 0.0
    %1060 = vmatpush1.msra.mxu0 0.0
    %1061 = vmatprep.subr.mxu0 0.0
    %1062 = vmatpush1.msra.mxu0 0.0
    %1063 = vmatprep.subr.mxu0 0.0
    %1064 = vmatpush1.msra.mxu0 0.0
    %1065 = vmatprep.subr.mxu0 0.0
    %1066 = vmatpush1.msra.mxu0 0.0
    %1067 = vmatprep.subr.mxu0 0.0
    %1068 = vmatpush1.msra.mxu0 0.0
    %1069 = vmatprep.subr.mxu0 0.0
    %1070 = vmatpush1.msra.mxu0 0.0
    %1071 = vmatprep.subr.mxu0 0.0
    %1072 = vmatpush1.msra.mxu0 0.0
    %1073 = vmatprep.subr.mxu0 0.0
    %1074 = vmatpush1.msra.mxu0 0.0
    %1075 = vmatprep.subr.mxu0 0.0
    %1076 = vmatpush1.msra.mxu0 0.0
    %1077 = vmatprep.subr.mxu0 0.0
    %1078 = vmatpush1.msra.mxu0 0.0
    %1079 = vmatprep.subr.mxu0 0.0
    %1080 = vmatpush1.msra.mxu0 0.0
    %1081 = vmatprep.subr.mxu0 0.0
    %1082 = vmatpush1.msra.mxu0 0.0
    %1083 = vmatprep.subr.mxu0 0.0
    %1084 = vmatpush1.msra.mxu0 0.0
    %1085 = vmatprep.subr.mxu0 0.0
    %1086 = vmatpush1.msra.mxu0 0.0
    %1087 = vmatprep.subr.mxu0 0.0
    %1088 = vmatpush1.msra.mxu0 0.0
    %1089 = vmatprep.mubr.f32.mxu0 0.0
    %1090 = vmatmul.mubr.f32.gmra.mrb[0].mxu0 %v1023
    %v1091 = vpop.f32.mrb[0].mxu0
    %v1092 = vadd.f32 0.0, %v1091
    %v1093 = vpop.f32.mrb[0].mxu0
    %1094 = vdwg.mxu0
    %v1096 = vrot.slane %v1092, 4
    %v1097 = vrot.slane %v1092, 5
    %v1098 = vrot.slane %v1092, 6
    %v1099 = vrot.slane %v1092, 7
    %v1104 = vadd.f32 %v192, %v1096
    %v1105 = vadd.f32 %v197, %v1097
    %v1106 = vadd.f32 %v202, %v1098
    %v1107 = vadd.f32 %v207, %v1099
    %v1108 = vxor.u32 %v1104, 2147483648
    %v1109 = vxor.u32 %v1105, 2147483648
    %v1110 = vxor.u32 %v1106, 2147483648
    %v1111 = vxor.u32 %v1107, 2147483648
    %v1112 = vmul.f32 %v1108, 1.442695
    %v1113 = vpow.pop %v1112
    %v1114 = vmul.f32 %v1109, 1.442695
    %v1115 = vpow.pop %v1114
    %v1116 = vmul.f32 %v1110, 1.442695
    %v1117 = vpow.pop %v1116
    %v1118 = vmul.f32 %v1111, 1.442695
    %v1119 = vpow.pop %v1118
    %v1120 = vadd.f32 %v1113, 1.0
    %v1121 = vadd.f32 %v1115, 1.0
    %v1122 = vadd.f32 %v1117, 1.0
    %v1123 = vadd.f32 %v1119, 1.0
    %v1124 = vrcp.pop %v1120
    %v1125 = vmul.f32 1.0, %v1124
    %v1126 = vrcp.pop %v1121
    %v1127 = vmul.f32 1.0, %v1126
    %v1128 = vrcp.pop %v1122
    %v1129 = vmul.f32 1.0, %v1128
    %v1130 = vrcp.pop %v1123
    %v1131 = vmul.f32 1.0, %v1130
    %v1132 = vtanh.pop %v1104
    %v1133 = vtanh.pop %v1105
    %v1134 = vtanh.pop %v1106
    %v1135 = vtanh.pop %v1107
    %v1140 = vrot.slane %v983, 7
    %v1141 = vrot.slane %v984, 7
    %v1142 = vrot.slane %v985, 7
    %v1143 = vrot.slane %v986, 7
    %v1148 = vmul.f32 %v1125, %v1140
    %v1149 = vmul.f32 %v1127, %v1141
    %v1150 = vmul.f32 %v1129, %v1142
    %v1151 = vmul.f32 %v1131, %v1143
    %1156 = vrot.lane.b32.xlu0 %v1132, 64
    %v1157 = vpop.permute.xlu0 %1156
    %1158 = vrot.lane.b32.xlu0 %v1133, 64
    %v1159 = vpop.permute.xlu0 %1158
    %1160 = vrot.lane.b32.xlu0 %v1134, 64
    %v1161 = vpop.permute.xlu0 %1160
    %1162 = vrot.lane.b32.xlu0 %v1135, 64
    %v1163 = vpop.permute.xlu0 %1162
    %v1168 = vmul.f32 %v1125, %v1157
    %v1169 = vmul.f32 %v1127, %v1159
    %v1170 = vmul.f32 %v1129, %v1161
    %v1171 = vmul.f32 %v1131, %v1163
    %1176 = vrot.lane.b32.xlu0 %v1168, 32
    %v1177 = vpop.permute.xlu0 %1176
    %1178 = vrot.lane.b32.xlu0 %v1169, 32
    %v1179 = vpop.permute.xlu0 %1178
    %1180 = vrot.lane.b32.xlu0 %v1170, 32
    %v1181 = vpop.permute.xlu0 %1180
    %1182 = vrot.lane.b32.xlu0 %v1171, 32
    %v1183 = vpop.permute.xlu0 %1182
    %v1188 = vadd.f32 %v1148, %v1177
    %v1189 = vadd.f32 %v1149, %v1179
    %v1190 = vadd.f32 %v1150, %v1181
    %v1191 = vadd.f32 %v1151, %v1183
    %v1192 = vtanh.pop %v1188
    %v1193 = vtanh.pop %v1189
    %v1194 = vtanh.pop %v1190
    %v1195 = vtanh.pop %v1191
    %1200 = vrot.lane.b32.xlu0 %v1192, 64
    %v1201 = vpop.permute.xlu0 %1200
    %1202 = vrot.lane.b32.xlu0 %v1193, 64
    %v1203 = vpop.permute.xlu0 %1202
    %1204 = vrot.lane.b32.xlu0 %v1194, 64
    %v1205 = vpop.permute.xlu0 %1204
    %1206 = vrot.lane.b32.xlu0 %v1195, 64
    %v1207 = vpop.permute.xlu0 %1206
    %v1212 = vmul.f32 %v1125, %v1201
    %v1213 = vmul.f32 %v1127, %v1203
    %v1214 = vmul.f32 %v1129, %v1205
    %v1215 = vmul.f32 %v1131, %v1207
    %v1220 = vrot.slane %v1212, 4
    %v1221 = vrot.slane %v1213, 3
    %v1222 = vsel %vm401, %v1221, %v1220
    %v1223 = vrot.slane %v1214, 2
    %v1224 = vsel %vm404, %v1223, %v1222
    %v1225 = vrot.slane %v1215, 1
    %v1226 = vsel %vm407, %v1225, %v1224
    %1227 = vrot.lane.b32.xlu0 %v1226, 32
    %v1228 = vpop.permute.xlu0 %1227
    %v1229 = vsel %vm214, %v1228, 0
    %1231 = vmatprep.subr.mxu0 0.0
    %1232 = vmatpush1.msra.mxu0 %v210
    %1233 = vmatprep.subr.mxu0 0.0
    %1234 = vmatpush1.msra.mxu0 %v211
    %1235 = vmatprep.subr.mxu0 0.0
    %1236 = vmatpush1.msra.mxu0 %v212
    %1237 = vmatprep.subr.mxu0 0.0
    %1238 = vmatpush1.msra.mxu0 %v213
    %1239 = vmatprep.subr.mxu0 0.0
    %1240 = vmatpush1.msra.mxu0 0.0
    %1241 = vmatprep.subr.mxu0 0.0
    %1242 = vmatpush1.msra.mxu0 0.0
    %1243 = vmatprep.subr.mxu0 0.0
    %1244 = vmatpush1.msra.mxu0 0.0
    %1245 = vmatprep.subr.mxu0 0.0
    %1246 = vmatpush1.msra.mxu0 0.0
    %1247 = vmatprep.subr.mxu0 0.0
    %1248 = vmatpush1.msra.mxu0 0.0
    %1249 = vmatprep.subr.mxu0 0.0
    %1250 = vmatpush1.msra.mxu0 0.0
    %1251 = vmatprep.subr.mxu0 0.0
    %1252 = vmatpush1.msra.mxu0 0.0
    %1253 = vmatprep.subr.mxu0 0.0
    %1254 = vmatpush1.msra.mxu0 0.0
    %1255 = vmatprep.subr.mxu0 0.0
    %1256 = vmatpush1.msra.mxu0 0.0
    %1257 = vmatprep.subr.mxu0 0.0
    %1258 = vmatpush1.msra.mxu0 0.0
    %1259 = vmatprep.subr.mxu0 0.0
    %1260 = vmatpush1.msra.mxu0 0.0
    %1261 = vmatprep.subr.mxu0 0.0
    %1262 = vmatpush1.msra.mxu0 0.0
    %1263 = vmatprep.subr.mxu0 0.0
    %1264 = vmatpush1.msra.mxu0 0.0
    %1265 = vmatprep.subr.mxu0 0.0
    %1266 = vmatpush1.msra.mxu0 0.0
    %1267 = vmatprep.subr.mxu0 0.0
    %1268 = vmatpush1.msra.mxu0 0.0
    %1269 = vmatprep.subr.mxu0 0.0
    %1270 = vmatpush1.msra.mxu0 0.0
    %1271 = vmatprep.subr.mxu0 0.0
    %1272 = vmatpush1.msra.mxu0 0.0
    %1273 = vmatprep.subr.mxu0 0.0
    %1274 = vmatpush1.msra.mxu0 0.0
    %1275 = vmatprep.subr.mxu0 0.0
    %1276 = vmatpush1.msra.mxu0 0.0
    %1277 = vmatprep.subr.mxu0 0.0
    %1278 = vmatpush1.msra.mxu0 0.0
    %1279 = vmatprep.subr.mxu0 0.0
    %1280 = vmatpush1.msra.mxu0 0.0
    %1281 = vmatprep.subr.mxu0 0.0
    %1282 = vmatpush1.msra.mxu0 0.0
    %1283 = vmatprep.subr.mxu0 0.0
    %1284 = vmatpush1.msra.mxu0 0.0
    %1285 = vmatprep.subr.mxu0 0.0
    %1286 = vmatpush1.msra.mxu0 0.0
    %1287 = vmatprep.subr.mxu0 0.0
    %1288 = vmatpush1.msra.mxu0 0.0
    %1289 = vmatprep.subr.mxu0 0.0
    %1290 = vmatpush1.msra.mxu0 0.0
    %1291 = vmatprep.subr.mxu0 0.0
    %1292 = vmatpush1.msra.mxu0 0.0
    %1293 = vmatprep.subr.mxu0 0.0
    %1294 = vmatpush1.msra.mxu0 0.0
    %1295 = vmatprep.mubr.f32.mxu0 0.0
    %1296 = vmatmul.mubr.f32.gmra.mrb[0].mxu0 %v1229
    %v1297 = vpop.f32.mrb[0].mxu0
    %v1298 = vadd.f32 0.0, %v1297
    %v1299 = vpop.f32.mrb[0].mxu0
    %1300 = vdwg.mxu0
    %v1302 = vrot.slane %v1298, 3
    %v1303 = vrot.slane %v1298, 4
    %v1304 = vrot.slane %v1298, 5
    %v1305 = vrot.slane %v1298, 6
    %v1310 = vadd.f32 %v192, %v1302
    %v1311 = vadd.f32 %v197, %v1303
    %v1312 = vadd.f32 %v202, %v1304
    %v1313 = vadd.f32 %v207, %v1305
    %v1314 = vxor.u32 %v1310, 2147483648
    %v1315 = vxor.u32 %v1311, 2147483648
    %v1316 = vxor.u32 %v1312, 2147483648
    %v1317 = vxor.u32 %v1313, 2147483648
    %v1318 = vmul.f32 %v1314, 1.442695
    %v1319 = vpow.pop %v1318
    %v1320 = vmul.f32 %v1315, 1.442695
    %v1321 = vpow.pop %v1320
    %v1322 = vmul.f32 %v1316, 1.442695
    %v1323 = vpow.pop %v1322
    %v1324 = vmul.f32 %v1317, 1.442695
    %v1325 = vpow.pop %v1324
    %v1326 = vadd.f32 %v1319, 1.0
    %v1327 = vadd.f32 %v1321, 1.0
    %v1328 = vadd.f32 %v1323, 1.0
    %v1329 = vadd.f32 %v1325, 1.0
    %v1330 = vrcp.pop %v1326
    %v1331 = vmul.f32 1.0, %v1330
    %v1332 = vrcp.pop %v1327
    %v1333 = vmul.f32 1.0, %v1332
    %v1334 = vrcp.pop %v1328
    %v1335 = vmul.f32 1.0, %v1334
    %v1336 = vrcp.pop %v1329
    %v1337 = vmul.f32 1.0, %v1336
    %v1338 = vtanh.pop %v1310
    %v1339 = vtanh.pop %v1311
    %v1340 = vtanh.pop %v1312
    %v1341 = vtanh.pop %v1313
    %v1346 = vrot.slane %v1188, 7
    %v1347 = vrot.slane %v1189, 7
    %v1348 = vrot.slane %v1190, 7
    %v1349 = vrot.slane %v1191, 7
    %v1354 = vmul.f32 %v1331, %v1346
    %v1355 = vmul.f32 %v1333, %v1347
    %v1356 = vmul.f32 %v1335, %v1348
    %v1357 = vmul.f32 %v1337, %v1349
    %1362 = vrot.lane.b32.xlu0 %v1338, 64
    %v1363 = vpop.permute.xlu0 %1362
    %1364 = vrot.lane.b32.xlu0 %v1339, 64
    %v1365 = vpop.permute.xlu0 %1364
    %1366 = vrot.lane.b32.xlu0 %v1340, 64
    %v1367 = vpop.permute.xlu0 %1366
    %1368 = vrot.lane.b32.xlu0 %v1341, 64
    %v1369 = vpop.permute.xlu0 %1368
    %v1374 = vmul.f32 %v1331, %v1363
    %v1375 = vmul.f32 %v1333, %v1365
    %v1376 = vmul.f32 %v1335, %v1367
    %v1377 = vmul.f32 %v1337, %v1369
    %1382 = vrot.lane.b32.xlu0 %v1374, 32
    %v1383 = vpop.permute.xlu0 %1382
    %1384 = vrot.lane.b32.xlu0 %v1375, 32
    %v1385 = vpop.permute.xlu0 %1384
    %1386 = vrot.lane.b32.xlu0 %v1376, 32
    %v1387 = vpop.permute.xlu0 %1386
    %1388 = vrot.lane.b32.xlu0 %v1377, 32
    %v1389 = vpop.permute.xlu0 %1388
    %v1394 = vadd.f32 %v1354, %v1383
    %v1395 = vadd.f32 %v1355, %v1385
    %v1396 = vadd.f32 %v1356, %v1387
    %v1397 = vadd.f32 %v1357, %v1389
    %v1398 = vtanh.pop %v1394
    %v1399 = vtanh.pop %v1395
    %v1400 = vtanh.pop %v1396
    %v1401 = vtanh.pop %v1397
    %1406 = vrot.lane.b32.xlu0 %v1398, 64
    %v1407 = vpop.permute.xlu0 %1406
    %1408 = vrot.lane.b32.xlu0 %v1399, 64
    %v1409 = vpop.permute.xlu0 %1408
    %1410 = vrot.lane.b32.xlu0 %v1400, 64
    %v1411 = vpop.permute.xlu0 %1410
    %1412 = vrot.lane.b32.xlu0 %v1401, 64
    %v1413 = vpop.permute.xlu0 %1412
    %v1418 = vmul.f32 %v1331, %v1407
    %v1419 = vmul.f32 %v1333, %v1409
    %v1420 = vmul.f32 %v1335, %v1411
    %v1421 = vmul.f32 %v1337, %v1413
    %v1426 = vrot.slane %v1418, 5
    %v1427 = vrot.slane %v1419, 4
    %v1428 = vsel %vm401, %v1427, %v1426
    %v1429 = vrot.slane %v1420, 3
    %v1430 = vsel %vm404, %v1429, %v1428
    %v1431 = vrot.slane %v1421, 2
    %v1432 = vsel %vm407, %v1431, %v1430
    %1433 = vrot.lane.b32.xlu0 %v1432, 32
    %v1434 = vpop.permute.xlu0 %1433
    %v1435 = vsel %vm214, %v1434, 0
    %1437 = vmatprep.subr.mxu0 0.0
    %1438 = vmatpush1.msra.mxu0 %v210
    %1439 = vmatprep.subr.mxu0 0.0
    %1440 = vmatpush1.msra.mxu0 %v211
    %1441 = vmatprep.subr.mxu0 0.0
    %1442 = vmatpush1.msra.mxu0 %v212
    %1443 = vmatprep.subr.mxu0 0.0
    %1444 = vmatpush1.msra.mxu0 %v213
    %1445 = vmatprep.subr.mxu0 0.0
    %1446 = vmatpush1.msra.mxu0 0.0
    %1447 = vmatprep.subr.mxu0 0.0
    %1448 = vmatpush1.msra.mxu0 0.0
    %1449 = vmatprep.subr.mxu0 0.0
    %1450 = vmatpush1.msra.mxu0 0.0
    %1451 = vmatprep.subr.mxu0 0.0
    %1452 = vmatpush1.msra.mxu0 0.0
    %1453 = vmatprep.subr.mxu0 0.0
    %1454 = vmatpush1.msra.mxu0 0.0
    %1455 = vmatprep.subr.mxu0 0.0
    %1456 = vmatpush1.msra.mxu0 0.0
    %1457 = vmatprep.subr.mxu0 0.0
    %1458 = vmatpush1.msra.mxu0 0.0
    %1459 = vmatprep.subr.mxu0 0.0
    %1460 = vmatpush1.msra.mxu0 0.0
    %1461 = vmatprep.subr.mxu0 0.0
    %1462 = vmatpush1.msra.mxu0 0.0
    %1463 = vmatprep.subr.mxu0 0.0
    %1464 = vmatpush1.msra.mxu0 0.0
    %1465 = vmatprep.subr.mxu0 0.0
    %1466 = vmatpush1.msra.mxu0 0.0
    %1467 = vmatprep.subr.mxu0 0.0
    %1468 = vmatpush1.msra.mxu0 0.0
    %1469 = vmatprep.subr.mxu0 0.0
    %1470 = vmatpush1.msra.mxu0 0.0
    %1471 = vmatprep.subr.mxu0 0.0
    %1472 = vmatpush1.msra.mxu0 0.0
    %1473 = vmatprep.subr.mxu0 0.0
    %1474 = vmatpush1.msra.mxu0 0.0
    %1475 = vmatprep.subr.mxu0 0.0
    %1476 = vmatpush1.msra.mxu0 0.0
    %1477 = vmatprep.subr.mxu0 0.0
    %1478 = vmatpush1.msra.mxu0 0.0
    %1479 = vmatprep.subr.mxu0 0.0
    %1480 = vmatpush1.msra.mxu0 0.0
    %1481 = vmatprep.subr.mxu0 0.0
    %1482 = vmatpush1.msra.mxu0 0.0
    %1483 = vmatprep.subr.mxu0 0.0
    %1484 = vmatpush1.msra.mxu0 0.0
    %1485 = vmatprep.subr.mxu0 0.0
    %1486 = vmatpush1.msra.mxu0 0.0
    %1487 = vmatprep.subr.mxu0 0.0
    %1488 = vmatpush1.msra.mxu0 0.0
    %1489 = vmatprep.subr.mxu0 0.0
    %1490 = vmatpush1.msra.mxu0 0.0
    %1491 = vmatprep.subr.mxu0 0.0
    %1492 = vmatpush1.msra.mxu0 0.0
    %1493 = vmatprep.subr.mxu0 0.0
    %1494 = vmatpush1.msra.mxu0 0.0
    %1495 = vmatprep.subr.mxu0 0.0
    %1496 = vmatpush1.msra.mxu0 0.0
    %1497 = vmatprep.subr.mxu0 0.0
    %1498 = vmatpush1.msra.mxu0 0.0
    %1499 = vmatprep.subr.mxu0 0.0
    %1500 = vmatpush1.msra.mxu0 0.0
    %1501 = vmatprep.mubr.f32.mxu0 0.0
    %1502 = vmatmul.mubr.f32.gmra.mrb[0].mxu0 %v1435
    %v1503 = vpop.f32.mrb[0].mxu0
    %v1504 = vadd.f32 0.0, %v1503
    %v1505 = vpop.f32.mrb[0].mxu0
    %1506 = vdwg.mxu0
    %v1508 = vrot.slane %v1504, 2
    %v1509 = vrot.slane %v1504, 3
    %v1510 = vrot.slane %v1504, 4
    %v1511 = vrot.slane %v1504, 5
    %v1516 = vadd.f32 %v192, %v1508
    %v1517 = vadd.f32 %v197, %v1509
    %v1518 = vadd.f32 %v202, %v1510
    %v1519 = vadd.f32 %v207, %v1511
    %v1520 = vxor.u32 %v1516, 2147483648
    %v1521 = vxor.u32 %v1517, 2147483648
    %v1522 = vxor.u32 %v1518, 2147483648
    %v1523 = vxor.u32 %v1519, 2147483648
    %v1524 = vmul.f32 %v1520, 1.442695
    %v1525 = vpow.pop %v1524
    %v1526 = vmul.f32 %v1521, 1.442695
    %v1527 = vpow.pop %v1526
    %v1528 = vmul.f32 %v1522, 1.442695
    %v1529 = vpow.pop %v1528
    %v1530 = vmul.f32 %v1523, 1.442695
    %v1531 = vpow.pop %v1530
    %v1532 = vadd.f32 %v1525, 1.0
    %v1533 = vadd.f32 %v1527, 1.0
    %v1534 = vadd.f32 %v1529, 1.0
    %v1535 = vadd.f32 %v1531, 1.0
    %v1536 = vrcp.pop %v1532
    %v1537 = vmul.f32 1.0, %v1536
    %v1538 = vrcp.pop %v1533
    %v1539 = vmul.f32 1.0, %v1538
    %v1540 = vrcp.pop %v1534
    %v1541 = vmul.f32 1.0, %v1540
    %v1542 = vrcp.pop %v1535
    %v1543 = vmul.f32 1.0, %v1542
    %v1544 = vtanh.pop %v1516
    %v1545 = vtanh.pop %v1517
    %v1546 = vtanh.pop %v1518
    %v1547 = vtanh.pop %v1519
    %v1552 = vrot.slane %v1394, 7
    %v1553 = vrot.slane %v1395, 7
    %v1554 = vrot.slane %v1396, 7
    %v1555 = vrot.slane %v1397, 7
    %v1560 = vmul.f32 %v1537, %v1552
    %v1561 = vmul.f32 %v1539, %v1553
    %v1562 = vmul.f32 %v1541, %v1554
    %v1563 = vmul.f32 %v1543, %v1555
    %1568 = vrot.lane.b32.xlu0 %v1544, 64
    %v1569 = vpop.permute.xlu0 %1568
    %1570 = vrot.lane.b32.xlu0 %v1545, 64
    %v1571 = vpop.permute.xlu0 %1570
    %1572 = vrot.lane.b32.xlu0 %v1546, 64
    %v1573 = vpop.permute.xlu0 %1572
    %1574 = vrot.lane.b32.xlu0 %v1547, 64
    %v1575 = vpop.permute.xlu0 %1574
    %v1580 = vmul.f32 %v1537, %v1569
    %v1581 = vmul.f32 %v1539, %v1571
    %v1582 = vmul.f32 %v1541, %v1573
    %v1583 = vmul.f32 %v1543, %v1575
    %1588 = vrot.lane.b32.xlu0 %v1580, 32
    %v1589 = vpop.permute.xlu0 %1588
    %1590 = vrot.lane.b32.xlu0 %v1581, 32
    %v1591 = vpop.permute.xlu0 %1590
    %1592 = vrot.lane.b32.xlu0 %v1582, 32
    %v1593 = vpop.permute.xlu0 %1592
    %1594 = vrot.lane.b32.xlu0 %v1583, 32
    %v1595 = vpop.permute.xlu0 %1594
    %v1600 = vadd.f32 %v1560, %v1589
    %v1601 = vadd.f32 %v1561, %v1591
    %v1602 = vadd.f32 %v1562, %v1593
    %v1603 = vadd.f32 %v1563, %v1595
    %v1604 = vtanh.pop %v1600
    %v1605 = vtanh.pop %v1601
    %v1606 = vtanh.pop %v1602
    %v1607 = vtanh.pop %v1603
    %1612 = vrot.lane.b32.xlu0 %v1604, 64
    %v1613 = vpop.permute.xlu0 %1612
    %1614 = vrot.lane.b32.xlu0 %v1605, 64
    %v1615 = vpop.permute.xlu0 %1614
    %1616 = vrot.lane.b32.xlu0 %v1606, 64
    %v1617 = vpop.permute.xlu0 %1616
    %1618 = vrot.lane.b32.xlu0 %v1607, 64
    %v1619 = vpop.permute.xlu0 %1618
    %v1624 = vmul.f32 %v1537, %v1613
    %v1625 = vmul.f32 %v1539, %v1615
    %v1626 = vmul.f32 %v1541, %v1617
    %v1627 = vmul.f32 %v1543, %v1619
    %v1632 = vrot.slane %v1624, 6
    %v1633 = vrot.slane %v1625, 5
    %v1634 = vsel %vm401, %v1633, %v1632
    %v1635 = vrot.slane %v1626, 4
    %v1636 = vsel %vm404, %v1635, %v1634
    %v1637 = vrot.slane %v1627, 3
    %v1638 = vsel %vm407, %v1637, %v1636
    %1639 = vrot.lane.b32.xlu0 %v1638, 32
    %v1640 = vpop.permute.xlu0 %1639
    %v1641 = vsel %vm214, %v1640, 0
    %1643 = vmatprep.subr.mxu0 0.0
    %1644 = vmatpush1.msra.mxu0 %v210
    %1645 = vmatprep.subr.mxu0 0.0
    %1646 = vmatpush1.msra.mxu0 %v211
    %1647 = vmatprep.subr.mxu0 0.0
    %1648 = vmatpush1.msra.mxu0 %v212
    %1649 = vmatprep.subr.mxu0 0.0
    %1650 = vmatpush1.msra.mxu0 %v213
    %1651 = vmatprep.subr.mxu0 0.0
    %1652 = vmatpush1.msra.mxu0 0.0
    %1653 = vmatprep.subr.mxu0 0.0
    %1654 = vmatpush1.msra.mxu0 0.0
    %1655 = vmatprep.subr.mxu0 0.0
    %1656 = vmatpush1.msra.mxu0 0.0
    %1657 = vmatprep.subr.mxu0 0.0
    %1658 = vmatpush1.msra.mxu0 0.0
    %1659 = vmatprep.subr.mxu0 0.0
    %1660 = vmatpush1.msra.mxu0 0.0
    %1661 = vmatprep.subr.mxu0 0.0
    %1662 = vmatpush1.msra.mxu0 0.0
    %1663 = vmatprep.subr.mxu0 0.0
    %1664 = vmatpush1.msra.mxu0 0.0
    %1665 = vmatprep.subr.mxu0 0.0
    %1666 = vmatpush1.msra.mxu0 0.0
    %1667 = vmatprep.subr.mxu0 0.0
    %1668 = vmatpush1.msra.mxu0 0.0
    %1669 = vmatprep.subr.mxu0 0.0
    %1670 = vmatpush1.msra.mxu0 0.0
    %1671 = vmatprep.subr.mxu0 0.0
    %1672 = vmatpush1.msra.mxu0 0.0
    %1673 = vmatprep.subr.mxu0 0.0
    %1674 = vmatpush1.msra.mxu0 0.0
    %1675 = vmatprep.subr.mxu0 0.0
    %1676 = vmatpush1.msra.mxu0 0.0
    %1677 = vmatprep.subr.mxu0 0.0
    %1678 = vmatpush1.msra.mxu0 0.0
    %1679 = vmatprep.subr.mxu0 0.0
    %1680 = vmatpush1.msra.mxu0 0.0
    %1681 = vmatprep.subr.mxu0 0.0
    %1682 = vmatpush1.msra.mxu0 0.0
    %1683 = vmatprep.subr.mxu0 0.0
    %1684 = vmatpush1.msra.mxu0 0.0
    %1685 = vmatprep.subr.mxu0 0.0
    %1686 = vmatpush1.msra.mxu0 0.0
    %1687 = vmatprep.subr.mxu0 0.0
    %1688 = vmatpush1.msra.mxu0 0.0
    %1689 = vmatprep.subr.mxu0 0.0
    %1690 = vmatpush1.msra.mxu0 0.0
    %1691 = vmatprep.subr.mxu0 0.0
    %1692 = vmatpush1.msra.mxu0 0.0
    %1693 = vmatprep.subr.mxu0 0.0
    %1694 = vmatpush1.msra.mxu0 0.0
    %1695 = vmatprep.subr.mxu0 0.0
    %1696 = vmatpush1.msra.mxu0 0.0
    %1697 = vmatprep.subr.mxu0 0.0
    %1698 = vmatpush1.msra.mxu0 0.0
    %1699 = vmatprep.subr.mxu0 0.0
    %1700 = vmatpush1.msra.mxu0 0.0
    %1701 = vmatprep.subr.mxu0 0.0
    %1702 = vmatpush1.msra.mxu0 0.0
    %1703 = vmatprep.subr.mxu0 0.0
    %1704 = vmatpush1.msra.mxu0 0.0
    %1705 = vmatprep.subr.mxu0 0.0
    %1706 = vmatpush1.msra.mxu0 0.0
    %1707 = vmatprep.mubr.f32.mxu0 0.0
    %1708 = vmatmul.mubr.f32.gmra.mrb[0].mxu0 %v1641
    %v1709 = vpop.f32.mrb[0].mxu0
    %v1710 = vadd.f32 0.0, %v1709
    %v1711 = vpop.f32.mrb[0].mxu0
    %1712 = vdwg.mxu0
    %v1714 = vrot.slane %v1710, 1
    %v1715 = vrot.slane %v1710, 2
    %v1716 = vrot.slane %v1710, 3
    %v1717 = vrot.slane %v1710, 4
    %v1722 = vadd.f32 %v192, %v1714
    %v1723 = vadd.f32 %v197, %v1715
    %v1724 = vadd.f32 %v202, %v1716
    %v1725 = vadd.f32 %v207, %v1717
    %v1726 = vxor.u32 %v1722, 2147483648
    %v1727 = vxor.u32 %v1723, 2147483648
    %v1728 = vxor.u32 %v1724, 2147483648
    %v1729 = vxor.u32 %v1725, 2147483648
    %v1730 = vmul.f32 %v1726, 1.442695
    %v1731 = vpow.pop %v1730
    %v1732 = vmul.f32 %v1727, 1.442695
    %v1733 = vpow.pop %v1732
    %v1734 = vmul.f32 %v1728, 1.442695
    %v1735 = vpow.pop %v1734
    %v1736 = vmul.f32 %v1729, 1.442695
    %v1737 = vpow.pop %v1736
    %v1738 = vadd.f32 %v1731, 1.0
    %v1739 = vadd.f32 %v1733, 1.0
    %v1740 = vadd.f32 %v1735, 1.0
    %v1741 = vadd.f32 %v1737, 1.0
    %v1742 = vrcp.pop %v1738
    %v1743 = vmul.f32 1.0, %v1742
    %v1744 = vrcp.pop %v1739
    %v1745 = vmul.f32 1.0, %v1744
    %v1746 = vrcp.pop %v1740
    %v1747 = vmul.f32 1.0, %v1746
    %v1748 = vrcp.pop %v1741
    %v1749 = vmul.f32 1.0, %v1748
    %v1750 = vtanh.pop %v1722
    %v1751 = vtanh.pop %v1723
    %v1752 = vtanh.pop %v1724
    %v1753 = vtanh.pop %v1725
    %v1758 = vrot.slane %v1600, 7
    %v1759 = vrot.slane %v1601, 7
    %v1760 = vrot.slane %v1602, 7
    %v1761 = vrot.slane %v1603, 7
    %v1766 = vmul.f32 %v1743, %v1758
    %v1767 = vmul.f32 %v1745, %v1759
    %v1768 = vmul.f32 %v1747, %v1760
    %v1769 = vmul.f32 %v1749, %v1761
    %1774 = vrot.lane.b32.xlu0 %v1750, 64
    %v1775 = vpop.permute.xlu0 %1774
    %1776 = vrot.lane.b32.xlu0 %v1751, 64
    %v1777 = vpop.permute.xlu0 %1776
    %1778 = vrot.lane.b32.xlu0 %v1752, 64
    %v1779 = vpop.permute.xlu0 %1778
    %1780 = vrot.lane.b32.xlu0 %v1753, 64
    %v1781 = vpop.permute.xlu0 %1780
    %v1786 = vmul.f32 %v1743, %v1775
    %v1787 = vmul.f32 %v1745, %v1777
    %v1788 = vmul.f32 %v1747, %v1779
    %v1789 = vmul.f32 %v1749, %v1781
    %1794 = vrot.lane.b32.xlu0 %v1786, 32
    %v1795 = vpop.permute.xlu0 %1794
    %1796 = vrot.lane.b32.xlu0 %v1787, 32
    %v1797 = vpop.permute.xlu0 %1796
    %1798 = vrot.lane.b32.xlu0 %v1788, 32
    %v1799 = vpop.permute.xlu0 %1798
    %1800 = vrot.lane.b32.xlu0 %v1789, 32
    %v1801 = vpop.permute.xlu0 %1800
    %v1806 = vadd.f32 %v1766, %v1795
    %v1807 = vadd.f32 %v1767, %v1797
    %v1808 = vadd.f32 %v1768, %v1799
    %v1809 = vadd.f32 %v1769, %v1801
    %v1810 = vtanh.pop %v1806
    %v1811 = vtanh.pop %v1807
    %v1812 = vtanh.pop %v1808
    %v1813 = vtanh.pop %v1809
    %1818 = vrot.lane.b32.xlu0 %v1810, 64
    %v1819 = vpop.permute.xlu0 %1818
    %1820 = vrot.lane.b32.xlu0 %v1811, 64
    %v1821 = vpop.permute.xlu0 %1820
    %1822 = vrot.lane.b32.xlu0 %v1812, 64
    %v1823 = vpop.permute.xlu0 %1822
    %1824 = vrot.lane.b32.xlu0 %v1813, 64
    %v1825 = vpop.permute.xlu0 %1824
    %v1830 = vmul.f32 %v1743, %v1819
    %v1831 = vmul.f32 %v1745, %v1821
    %v1832 = vmul.f32 %v1747, %v1823
    %v1833 = vmul.f32 %v1749, %v1825
    %v1835 = vrot.slane %v599, 5
    %v1836 = vrot.slane %v600, 4
    %vm1837 = vcmask 1045509
    %v1838 = vsel %vm1837, %v1836, %v1835
    %v1839 = vrot.slane %v601, 3
    %vm1840 = vcmask 1046534
    %v1841 = vsel %vm1840, %v1839, %v1838
    %v1842 = vrot.slane %v602, 2
    %vm1843 = vcmask 1047559
    %v1844 = vsel %vm1843, %v1842, %v1841
    %v1847 = vrot.slane %v1007, 7
    %v1848 = vrot.slane %v1008, 6
    %v1849 = vsel %vm1837, %v1848, %v1847
    %v1850 = vrot.slane %v1009, 5
    %v1851 = vsel %vm1840, %v1850, %v1849
    %v1852 = vrot.slane %v1010, 4
    %v1853 = vsel %vm1843, %v1852, %v1851
    %v1856 = vrot.slane %v1418, 1
    %v1857 = vsel %vm1837, %v1419, %v1856
    %v1858 = vrot.slane %v1420, 7
    %v1859 = vsel %vm1840, %v1858, %v1857
    %v1860 = vrot.slane %v1421, 6
    %v1861 = vsel %vm1843, %v1860, %v1859
    %v1868 = vrot.slane %v1830, 3
    %v1869 = vrot.slane %v1831, 2
    %v1870 = vsel %vm1837, %v1869, %v1868
    %v1871 = vrot.slane %v1832, 1
    %v1872 = vsel %vm1840, %v1871, %v1870
    %v1873 = vsel %vm1843, %v1833, %v1872
    %vm1875 = vcmask 1043456
    %v1876 = vsel %vm1875, %v408, %v1844
    %v1877 = vsel %vm1875, %v816, %v1853
    %v1878 = vsel %vm1875, %v1226, %v1861
    %v1879 = vsel %vm1875, %v1638, %v1873
    %vm1880 = vcmask 1048320
    %v1881 = vsel %vm1880, %v1876, 0.0
    %v1882 = vsel %vm1880, %v1877, 0.0
    %v1883 = vadd.f32 %v1881, %v1882
    %v1884 = vsel %vm1880, %v1878, 0.0
    %v1885 = vadd.f32 %v1883, %v1884
    %v1886 = vsel %vm1880, %v1879, 0.0
    %v1887 = vadd.f32 %v1885, %v1886
    %v1888 = vrot.slane %v1887, 4
    %v1889 = vadd.f32 %v1887, %v1888
    %v1890 = vrot.slane %v1889, 2
    %v1891 = vadd.f32 %v1889, %v1890
    %v1892 = vrot.slane %v1891, 1
    %v1893 = vadd.f32 %v1891, %v1892
    %v1894 = vmul.f32 %v1893, %v54
    %v1895 = vsub.f32 %v1876, %v1894
    %v1896 = vsub.f32 %v1877, %v1894
    %v1897 = vsub.f32 %v1878, %v1894
    %v1898 = vsub.f32 %v1879, %v1894
    %v1899 = vmul.f32 %v1895, %v1895
    %v1900 = vmul.f32 %v1896, %v1896
    %v1901 = vmul.f32 %v1897, %v1897
    %v1902 = vmul.f32 %v1898, %v1898
    %v1903 = vsel %vm1880, %v1899, 0.0
    %v1904 = vsel %vm1880, %v1900, 0.0
    %v1905 = vadd.f32 %v1903, %v1904
    %v1906 = vsel %vm1880, %v1901, 0.0
    %v1907 = vadd.f32 %v1905, %v1906
    %v1908 = vsel %vm1880, %v1902, 0.0
    %v1909 = vadd.f32 %v1907, %v1908
    %v1910 = vrot.slane %v1909, 4
    %v1911 = vadd.f32 %v1909, %v1910
    %v1912 = vrot.slane %v1911, 2
    %v1913 = vadd.f32 %v1911, %v1912
    %v1914 = vrot.slane %v1913, 1
    %v1915 = vadd.f32 %v1913, %v1914
    %v1916 = vmul.f32 %v1915, %v54
    %v1917 = vld [vmem:[%s6] sm:$0x1]
    %v1918 = vadd.f32 %v1916, 1e-05
    %v1919 = vrsqrt.pop %v1918
    %v1922 = vunpack.c.l.s4 1966171168
    %v1923 = vunpack.c.0.s8 %v1922
    %v1924 = vlaneseq
    %v1925 = vshrl.u32 %v1924, 7
    %v1926 = vsub.s32 %v1923, %v1925
    %v1927 = vrot.slane %v1919, %v1926
    %v1929 = vunpack.c.l.s4 1966171168
    %v1930 = vunpack.c.0.s8 %v1929
    %v1931 = vlaneseq
    %v1932 = vshrl.u32 %v1931, 7
    %v1933 = vsub.s32 %v1930, %v1932
    %v1934 = vrot.slane %v1927, %v1933
    %1935 = vrot.lane.b32.xlu0 %v1934, 32
    %v1936 = vpop.permute.xlu0 %1935
    %v1938 = vmul.f32 %v1917, %v1936
    %v1939 = vld [vmem:[%s7] sm:$0x1]
    %v1941 = vlaneseq
    %v1942 = vshrl.u32 %v1941, 7
    %v1943 = vsub.s32 0, %v1942
    %v1944 = vrot.slane %v1938, %v1943
    %1945 = vrot.lane.b32.xlu0 %v1944, 96
    %v1946 = vpop.permute.xlu0 %1945
    %v1948 = vmul.f32 %v1894, %v1946
    %v1951 = vunpack.c.l.s4 1966171168
    %v1952 = vunpack.c.0.s8 %v1951
    %v1953 = vlaneseq
    %v1954 = vshrl.u32 %v1953, 7
    %v1955 = vsub.s32 %v1952, %v1954
    %v1956 = vrot.slane %v1948, %v1955
    %v1958 = vunpack.c.l.s4 1966171168
    %v1959 = vunpack.c.0.s8 %v1958
    %v1960 = vlaneseq
    %v1961 = vshrl.u32 %v1960, 7
    %v1962 = vsub.s32 %v1959, %v1961
    %v1963 = vrot.slane %v1956, %v1962
    %1964 = vrot.lane.b32.xlu0 %v1963, 32
    %v1965 = vpop.permute.xlu0 %1964
    %v1967 = vsub.f32 %v1939, %v1965
    %v1968 = vmul.f32 %v1876, %v1946
    %v1969 = vmul.f32 %v1877, %v1946
    %v1970 = vmul.f32 %v1878, %v1946
    %v1971 = vmul.f32 %v1879, %v1946
    %v1973 = vlaneseq
    %v1974 = vshrl.u32 %v1973, 7
    %v1975 = vsub.s32 0, %v1974
    %v1976 = vrot.slane %v1967, %v1975
    %1977 = vrot.lane.b32.xlu0 %v1976, 96
    %v1978 = vpop.permute.xlu0 %1977
    %v1980 = vadd.f32 %v1968, %v1978
    %v1981 = vadd.f32 %v1969, %v1978
    %v1982 = vadd.f32 %v1970, %v1978
    %v1983 = vadd.f32 %v1971, %v1978
    %v1984 = vld [vmem:[%s8] sm:$0xff]
    %v1985 = vld [vmem:[%s8 + $0x8] sm:$0xff]
    %v1986 = vld [vmem:[%s8 + $0x10] sm:$0xff]
    %v1987 = vld [vmem:[%s8 + $0x18] sm:$0xff]
    %v1988 = vld [vmem:[%s9] sm:$0x1]
    %v1990 = vlaneseq
    %v1991 = vshrl.u32 %v1990, 7
    %v1992 = vsub.s32 0, %v1991
    %v1993 = vrot.slane %v1988, %v1992
    %1996 = vrot.lane.b32.xlu0 %v1980, 32
    %v1997 = vpop.permute.xlu0 %1996
    %v1998 = vsel %vm214, %v1997, 0
    %2000 = vmatprep.subr.mxu0 0.0
    %2001 = vmatpush1.msra.mxu0 %v1984
    %2002 = vmatprep.subr.mxu0 0.0
    %2003 = vmatpush1.msra.mxu0 %v1985
    %2004 = vmatprep.subr.mxu0 0.0
    %2005 = vmatpush1.msra.mxu0 %v1986
    %2006 = vmatprep.subr.mxu0 0.0
    %2007 = vmatpush1.msra.mxu0 %v1987
    %2008 = vmatprep.subr.mxu0 0.0
    %2009 = vmatpush1.msra.mxu0 0.0
    %2010 = vmatprep.subr.mxu0 0.0
    %2011 = vmatpush1.msra.mxu0 0.0
    %2012 = vmatprep.subr.mxu0 0.0
    %2013 = vmatpush1.msra.mxu0 0.0
    %2014 = vmatprep.subr.mxu0 0.0
    %2015 = vmatpush1.msra.mxu0 0.0
    %2016 = vmatprep.subr.mxu0 0.0
    %2017 = vmatpush1.msra.mxu0 0.0
    %2018 = vmatprep.subr.mxu0 0.0
    %2019 = vmatpush1.msra.mxu0 0.0
    %2020 = vmatprep.subr.mxu0 0.0
    %2021 = vmatpush1.msra.mxu0 0.0
    %2022 = vmatprep.subr.mxu0 0.0
    %2023 = vmatpush1.msra.mxu0 0.0
    %2024 = vmatprep.subr.mxu0 0.0
    %2025 = vmatpush1.msra.mxu0 0.0
    %2026 = vmatprep.subr.mxu0 0.0
    %2027 = vmatpush1.msra.mxu0 0.0
    %2028 = vmatprep.subr.mxu0 0.0
    %2029 = vmatpush1.msra.mxu0 0.0
    %2030 = vmatprep.subr.mxu0 0.0
    %2031 = vmatpush1.msra.mxu0 0.0
    %2032 = vmatprep.subr.mxu0 0.0
    %2033 = vmatpush1.msra.mxu0 0.0
    %2034 = vmatprep.subr.mxu0 0.0
    %2035 = vmatpush1.msra.mxu0 0.0
    %2036 = vmatprep.subr.mxu0 0.0
    %2037 = vmatpush1.msra.mxu0 0.0
    %2038 = vmatprep.subr.mxu0 0.0
    %2039 = vmatpush1.msra.mxu0 0.0
    %2040 = vmatprep.subr.mxu0 0.0
    %2041 = vmatpush1.msra.mxu0 0.0
    %2042 = vmatprep.subr.mxu0 0.0
    %2043 = vmatpush1.msra.mxu0 0.0
    %2044 = vmatprep.subr.mxu0 0.0
    %2045 = vmatpush1.msra.mxu0 0.0
    %2046 = vmatprep.subr.mxu0 0.0
    %2047 = vmatpush1.msra.mxu0 0.0
    %2048 = vmatprep.subr.mxu0 0.0
    %2049 = vmatpush1.msra.mxu0 0.0
    %2050 = vmatprep.subr.mxu0 0.0
    %2051 = vmatpush1.msra.mxu0 0.0
    %2052 = vmatprep.subr.mxu0 0.0
    %2053 = vmatpush1.msra.mxu0 0.0
    %2054 = vmatprep.subr.mxu0 0.0
    %2055 = vmatpush1.msra.mxu0 0.0
    %2056 = vmatprep.subr.mxu0 0.0
    %2057 = vmatpush1.msra.mxu0 0.0
    %2058 = vmatprep.subr.mxu0 0.0
    %2059 = vmatpush1.msra.mxu0 0.0
    %2060 = vmatprep.subr.mxu0 0.0
    %2061 = vmatpush1.msra.mxu0 0.0
    %2062 = vmatprep.subr.mxu0 0.0
    %2063 = vmatpush1.msra.mxu0 0.0
    %2064 = vmatprep.mubr.f32.mxu0 0.0
    %2065 = vmatmul.mubr.f32.gmra.mrb[0].mxu0 %v1998
    %v2066 = vpop.f32.mrb[0].mxu0
    %v2067 = vadd.f32 %v1993, %v2066
    %v2068 = vpop.f32.mrb[0].mxu0
    %2069 = vdwg.mxu0
    %v2072 = vunpack.c.l.s4 1966171168
    %v2073 = vunpack.c.0.s8 %v2072
    %v2074 = vlaneseq
    %v2075 = vshrl.u32 %v2074, 7
    %v2076 = vsub.s32 %v2073, %v2075
    %v2077 = vrot.slane %v2067, %v2076
    %v2078 = vcombine.high %v2077, %v2077
    %v2080 = vunpack.c.l.s4 1966171168
    %v2081 = vunpack.c.0.s8 %v2080
    %v2082 = vlaneseq
    %v2083 = vshrl.u32 %v2082, 7
    %v2084 = vsub.s32 %v2081, %v2083
    %v2085 = vrot.slane %v2077, %v2084
    %v2087 = vunpack.c.l.s4 1966171168
    %v2088 = vunpack.c.0.s8 %v2087
    %v2089 = vlaneseq
    %v2090 = vshrl.u32 %v2089, 7
    %v2091 = vsub.s32 %v2088, %v2090
    %v2092 = vrot.slane %v2078, %v2091
    %v2093 = vcombine.high %v2085, %v2085
    %v2094 = vcombine.high %v2092, %v2092
    %vm2099 = vcmask 57344
    %2100 = vst.msk [vmem:[#allocation2] sm:$0x1] %vm2099, %v2085
    %2101 = vst.msk [vmem:[#allocation2 + $0x8] sm:$0x1] %vm2099, %v2092
    %2102 = vst.msk [vmem:[#allocation2 + $0x10] sm:$0x1] %vm2099, %v2093
    %2103 = vst.msk [vmem:[#allocation2 + $0x18] sm:$0x1] %vm2099, %v2094
    %s2104 = scalar_lea.vmem %s8, 32
    %v2105 = vld [vmem:[%s2104] sm:$0xff]
    %v2106 = vld [vmem:[%s2104 + $0x8] sm:$0xff]
    %v2107 = vld [vmem:[%s2104 + $0x10] sm:$0xff]
    %v2108 = vld [vmem:[%s2104 + $0x18] sm:$0xff]
    %s2109 = scalar_lea.vmem %s9, 1
    %v2110 = vld [vmem:[%s2109] sm:$0x1]
    %v2112 = vlaneseq
    %v2113 = vshrl.u32 %v2112, 7
    %v2114 = vsub.s32 0, %v2113
    %v2115 = vrot.slane %v2110, %v2114
    %v2117 = vrot.slane %v1980, 4
    %2118 = vrot.lane.b32.xlu0 %v2117, 32
    %v2119 = vpop.permute.xlu0 %2118
    %v2120 = vsel %vm214, %v2119, 0
    %2122 = vmatprep.subr.mxu0 0.0
    %2123 = vmatpush1.msra.mxu0 %v2105
    %2124 = vmatprep.subr.mxu0 0.0
    %2125 = vmatpush1.msra.mxu0 %v2106
    %2126 = vmatprep.subr.mxu0 0.0
    %2127 = vmatpush1.msra.mxu0 %v2107
    %2128 = vmatprep.subr.mxu0 0.0
    %2129 = vmatpush1.msra.mxu0 %v2108
    %2130 = vmatprep.subr.mxu0 0.0
    %2131 = vmatpush1.msra.mxu0 0.0
    %2132 = vmatprep.subr.mxu0 0.0
    %2133 = vmatpush1.msra.mxu0 0.0
    %2134 = vmatprep.subr.mxu0 0.0
    %2135 = vmatpush1.msra.mxu0 0.0
    %2136 = vmatprep.subr.mxu0 0.0
    %2137 = vmatpush1.msra.mxu0 0.0
    %2138 = vmatprep.subr.mxu0 0.0
    %2139 = vmatpush1.msra.mxu0 0.0
    %2140 = vmatprep.subr.mxu0 0.0
    %2141 = vmatpush1.msra.mxu0 0.0
    %2142 = vmatprep.subr.mxu0 0.0
    %2143 = vmatpush1.msra.mxu0 0.0
    %2144 = vmatprep.subr.mxu0 0.0
    %2145 = vmatpush1.msra.mxu0 0.0
    %2146 = vmatprep.subr.mxu0 0.0
    %2147 = vmatpush1.msra.mxu0 0.0
    %2148 = vmatprep.subr.mxu0 0.0
    %2149 = vmatpush1.msra.mxu0 0.0
    %2150 = vmatprep.subr.mxu0 0.0
    %2151 = vmatpush1.msra.mxu0 0.0
    %2152 = vmatprep.subr.mxu0 0.0
    %2153 = vmatpush1.msra.mxu0 0.0
    %2154 = vmatprep.subr.mxu0 0.0
    %2155 = vmatpush1.msra.mxu0 0.0
    %2156 = vmatprep.subr.mxu0 0.0
    %2157 = vmatpush1.msra.mxu0 0.0
    %2158 = vmatprep.subr.mxu0 0.0
    %2159 = vmatpush1.msra.mxu0 0.0
    %2160 = vmatprep.subr.mxu0 0.0
    %2161 = vmatpush1.msra.mxu0 0.0
    %2162 = vmatprep.subr.mxu0 0.0
    %2163 = vmatpush1.msra.mxu0 0.0
    %2164 = vmatprep.subr.mxu0 0.0
    %2165 = vmatpush1.msra.mxu0 0.0
    %2166 = vmatprep.subr.mxu0 0.0
    %2167 = vmatpush1.msra.mxu0 0.0
    %2168 = vmatprep.subr.mxu0 0.0
    %2169 = vmatpush1.msra.mxu0 0.0
    %2170 = vmatprep.subr.mxu0 0.0
    %2171 = vmatpush1.msra.mxu0 0.0
    %2172 = vmatprep.subr.mxu0 0.0
    %2173 = vmatpush1.msra.mxu0 0.0
    %2174 = vmatprep.subr.mxu0 0.0
    %2175 = vmatpush1.msra.mxu0 0.0
    %2176 = vmatprep.subr.mxu0 0.0
    %2177 = vmatpush1.msra.mxu0 0.0
    %2178 = vmatprep.subr.mxu0 0.0
    %2179 = vmatpush1.msra.mxu0 0.0
    %2180 = vmatprep.subr.mxu0 0.0
    %2181 = vmatpush1.msra.mxu0 0.0
    %2182 = vmatprep.subr.mxu0 0.0
    %2183 = vmatpush1.msra.mxu0 0.0
    %2184 = vmatprep.subr.mxu0 0.0
    %2185 = vmatpush1.msra.mxu0 0.0
    %2186 = vmatprep.mubr.f32.mxu0 0.0
    %2187 = vmatmul.mubr.f32.gmra.mrb[0].mxu0 %v2120
    %v2188 = vpop.f32.mrb[0].mxu0
    %v2189 = vadd.f32 %v2115, %v2188
    %v2190 = vpop.f32.mrb[0].mxu0
    %2191 = vdwg.mxu0
    %v2194 = vunpack.c.l.s4 1966171168
    %v2195 = vunpack.c.0.s8 %v2194
    %v2196 = vlaneseq
    %v2197 = vshrl.u32 %v2196, 7
    %v2198 = vsub.s32 %v2195, %v2197
    %v2199 = vrot.slane %v2189, %v2198
    %v2200 = vcombine.high %v2199, %v2199
    %v2202 = vunpack.c.l.s4 1966171168
    %v2203 = vunpack.c.0.s8 %v2202
    %v2204 = vlaneseq
    %v2205 = vshrl.u32 %v2204, 7
    %v2206 = vsub.s32 %v2203, %v2205
    %v2207 = vrot.slane %v2199, %v2206
    %v2209 = vunpack.c.l.s4 1966171168
    %v2210 = vunpack.c.0.s8 %v2209
    %v2211 = vlaneseq
    %v2212 = vshrl.u32 %v2211, 7
    %v2213 = vsub.s32 %v2210, %v2212
    %v2214 = vrot.slane %v2200, %v2213
    %v2215 = vcombine.high %v2207, %v2207
    %v2216 = vcombine.high %v2214, %v2214
    %2221 = vst.msk [vmem:[#allocation2 + $0x1] sm:$0x1] %vm2099, %v2207
    %2222 = vst.msk [vmem:[#allocation2 + $0x9] sm:$0x1] %vm2099, %v2214
    %2223 = vst.msk [vmem:[#allocation2 + $0x11] sm:$0x1] %vm2099, %v2215
    %2224 = vst.msk [vmem:[#allocation2 + $0x19] sm:$0x1] %vm2099, %v2216
    %s2225 = scalar_lea.vmem %s8, 64
    %v2226 = vld [vmem:[%s2225] sm:$0xff]
    %v2227 = vld [vmem:[%s2225 + $0x8] sm:$0xff]
    %v2228 = vld [vmem:[%s2225 + $0x10] sm:$0xff]
    %v2229 = vld [vmem:[%s2225 + $0x18] sm:$0xff]
    %s2230 = scalar_lea.vmem %s9, 2
    %v2231 = vld [vmem:[%s2230] sm:$0x1]
    %v2233 = vlaneseq
    %v2234 = vshrl.u32 %v2233, 7
    %v2235 = vsub.s32 0, %v2234
    %v2236 = vrot.slane %v2231, %v2235
    %2239 = vrot.lane.b32.xlu0 %v1981, 32
    %v2240 = vpop.permute.xlu0 %2239
    %v2241 = vsel %vm214, %v2240, 0
    %2243 = vmatprep.subr.mxu0 0.0
    %2244 = vmatpush1.msra.mxu0 %v2226
    %2245 = vmatprep.subr.mxu0 0.0
    %2246 = vmatpush1.msra.mxu0 %v2227
    %2247 = vmatprep.subr.mxu0 0.0
    %2248 = vmatpush1.msra.mxu0 %v2228
    %2249 = vmatprep.subr.mxu0 0.0
    %2250 = vmatpush1.msra.mxu0 %v2229
    %2251 = vmatprep.subr.mxu0 0.0
    %2252 = vmatpush1.msra.mxu0 0.0
    %2253 = vmatprep.subr.mxu0 0.0
    %2254 = vmatpush1.msra.mxu0 0.0
    %2255 = vmatprep.subr.mxu0 0.0
    %2256 = vmatpush1.msra.mxu0 0.0
    %2257 = vmatprep.subr.mxu0 0.0
    %2258 = vmatpush1.msra.mxu0 0.0
    %2259 = vmatprep.subr.mxu0 0.0
    %2260 = vmatpush1.msra.mxu0 0.0
    %2261 = vmatprep.subr.mxu0 0.0
    %2262 = vmatpush1.msra.mxu0 0.0
    %2263 = vmatprep.subr.mxu0 0.0
    %2264 = vmatpush1.msra.mxu0 0.0
    %2265 = vmatprep.subr.mxu0 0.0
    %2266 = vmatpush1.msra.mxu0 0.0
    %2267 = vmatprep.subr.mxu0 0.0
    %2268 = vmatpush1.msra.mxu0 0.0
    %2269 = vmatprep.subr.mxu0 0.0
    %2270 = vmatpush1.msra.mxu0 0.0
    %2271 = vmatprep.subr.mxu0 0.0
    %2272 = vmatpush1.msra.mxu0 0.0
    %2273 = vmatprep.subr.mxu0 0.0
    %2274 = vmatpush1.msra.mxu0 0.0
    %2275 = vmatprep.subr.mxu0 0.0
    %2276 = vmatpush1.msra.mxu0 0.0
    %2277 = vmatprep.subr.mxu0 0.0
    %2278 = vmatpush1.msra.mxu0 0.0
    %2279 = vmatprep.subr.mxu0 0.0
    %2280 = vmatpush1.msra.mxu0 0.0
    %2281 = vmatprep.subr.mxu0 0.0
    %2282 = vmatpush1.msra.mxu0 0.0
    %2283 = vmatprep.subr.mxu0 0.0
    %2284 = vmatpush1.msra.mxu0 0.0
    %2285 = vmatprep.subr.mxu0 0.0
    %2286 = vmatpush1.msra.mxu0 0.0
    %2287 = vmatprep.subr.mxu0 0.0
    %2288 = vmatpush1.msra.mxu0 0.0
    %2289 = vmatprep.subr.mxu0 0.0
    %2290 = vmatpush1.msra.mxu0 0.0
    %2291 = vmatprep.subr.mxu0 0.0
    %2292 = vmatpush1.msra.mxu0 0.0
    %2293 = vmatprep.subr.mxu0 0.0
    %2294 = vmatpush1.msra.mxu0 0.0
    %2295 = vmatprep.subr.mxu0 0.0
    %2296 = vmatpush1.msra.mxu0 0.0
    %2297 = vmatprep.subr.mxu0 0.0
    %2298 = vmatpush1.msra.mxu0 0.0
    %2299 = vmatprep.subr.mxu0 0.0
    %2300 = vmatpush1.msra.mxu0 0.0
    %2301 = vmatprep.subr.mxu0 0.0
    %2302 = vmatpush1.msra.mxu0 0.0
    %2303 = vmatprep.subr.mxu0 0.0
    %2304 = vmatpush1.msra.mxu0 0.0
    %2305 = vmatprep.subr.mxu0 0.0
    %2306 = vmatpush1.msra.mxu0 0.0
    %2307 = vmatprep.mubr.f32.mxu0 0.0
    %2308 = vmatmul.mubr.f32.gmra.mrb[0].mxu0 %v2241
    %v2309 = vpop.f32.mrb[0].mxu0
    %v2310 = vadd.f32 %v2236, %v2309
    %v2311 = vpop.f32.mrb[0].mxu0
    %2312 = vdwg.mxu0
    %v2315 = vunpack.c.l.s4 1966171168
    %v2316 = vunpack.c.0.s8 %v2315
    %v2317 = vlaneseq
    %v2318 = vshrl.u32 %v2317, 7
    %v2319 = vsub.s32 %v2316, %v2318
    %v2320 = vrot.slane %v2310, %v2319
    %v2321 = vcombine.high %v2320, %v2320
    %v2323 = vunpack.c.l.s4 1966171168
    %v2324 = vunpack.c.0.s8 %v2323
    %v2325 = vlaneseq
    %v2326 = vshrl.u32 %v2325, 7
    %v2327 = vsub.s32 %v2324, %v2326
    %v2328 = vrot.slane %v2320, %v2327
    %v2330 = vunpack.c.l.s4 1966171168
    %v2331 = vunpack.c.0.s8 %v2330
    %v2332 = vlaneseq
    %v2333 = vshrl.u32 %v2332, 7
    %v2334 = vsub.s32 %v2331, %v2333
    %v2335 = vrot.slane %v2321, %v2334
    %v2336 = vcombine.high %v2328, %v2328
    %v2337 = vcombine.high %v2335, %v2335
    %2342 = vst.msk [vmem:[#allocation2 + $0x2] sm:$0x1] %vm2099, %v2328
    %2343 = vst.msk [vmem:[#allocation2 + $0xa] sm:$0x1] %vm2099, %v2335
    %2344 = vst.msk [vmem:[#allocation2 + $0x12] sm:$0x1] %vm2099, %v2336
    %2345 = vst.msk [vmem:[#allocation2 + $0x1a] sm:$0x1] %vm2099, %v2337
    %s2346 = scalar_lea.vmem %s8, 96
    %v2347 = vld [vmem:[%s2346] sm:$0xff]
    %v2348 = vld [vmem:[%s2346 + $0x8] sm:$0xff]
    %v2349 = vld [vmem:[%s2346 + $0x10] sm:$0xff]
    %v2350 = vld [vmem:[%s2346 + $0x18] sm:$0xff]
    %s2351 = scalar_lea.vmem %s9, 3
    %v2352 = vld [vmem:[%s2351] sm:$0x1]
    %v2354 = vlaneseq
    %v2355 = vshrl.u32 %v2354, 7
    %v2356 = vsub.s32 0, %v2355
    %v2357 = vrot.slane %v2352, %v2356
    %v2359 = vrot.slane %v1981, 4
    %2360 = vrot.lane.b32.xlu0 %v2359, 32
    %v2361 = vpop.permute.xlu0 %2360
    %v2362 = vsel %vm214, %v2361, 0
    %2364 = vmatprep.subr.mxu0 0.0
    %2365 = vmatpush1.msra.mxu0 %v2347
    %2366 = vmatprep.subr.mxu0 0.0
    %2367 = vmatpush1.msra.mxu0 %v2348
    %2368 = vmatprep.subr.mxu0 0.0
    %2369 = vmatpush1.msra.mxu0 %v2349
    %2370 = vmatprep.subr.mxu0 0.0
    %2371 = vmatpush1.msra.mxu0 %v2350
    %2372 = vmatprep.subr.mxu0 0.0
    %2373 = vmatpush1.msra.mxu0 0.0
    %2374 = vmatprep.subr.mxu0 0.0
    %2375 = vmatpush1.msra.mxu0 0.0
    %2376 = vmatprep.subr.mxu0 0.0
    %2377 = vmatpush1.msra.mxu0 0.0
    %2378 = vmatprep.subr.mxu0 0.0
    %2379 = vmatpush1.msra.mxu0 0.0
    %2380 = vmatprep.subr.mxu0 0.0
    %2381 = vmatpush1.msra.mxu0 0.0
    %2382 = vmatprep.subr.mxu0 0.0
    %2383 = vmatpush1.msra.mxu0 0.0
    %2384 = vmatprep.subr.mxu0 0.0
    %2385 = vmatpush1.msra.mxu0 0.0
    %2386 = vmatprep.subr.mxu0 0.0
    %2387 = vmatpush1.msra.mxu0 0.0
    %2388 = vmatprep.subr.mxu0 0.0
    %2389 = vmatpush1.msra.mxu0 0.0
    %2390 = vmatprep.subr.mxu0 0.0
    %2391 = vmatpush1.msra.mxu0 0.0
    %2392 = vmatprep.subr.mxu0 0.0
    %2393 = vmatpush1.msra.mxu0 0.0
    %2394 = vmatprep.subr.mxu0 0.0
    %2395 = vmatpush1.msra.mxu0 0.0
    %2396 = vmatprep.subr.mxu0 0.0
    %2397 = vmatpush1.msra.mxu0 0.0
    %2398 = vmatprep.subr.mxu0 0.0
    %2399 = vmatpush1.msra.mxu0 0.0
    %2400 = vmatprep.subr.mxu0 0.0
    %2401 = vmatpush1.msra.mxu0 0.0
    %2402 = vmatprep.subr.mxu0 0.0
    %2403 = vmatpush1.msra.mxu0 0.0
    %2404 = vmatprep.subr.mxu0 0.0
    %2405 = vmatpush1.msra.mxu0 0.0
    %2406 = vmatprep.subr.mxu0 0.0
    %2407 = vmatpush1.msra.mxu0 0.0
    %2408 = vmatprep.subr.mxu0 0.0
    %2409 = vmatpush1.msra.mxu0 0.0
    %2410 = vmatprep.subr.mxu0 0.0
    %2411 = vmatpush1.msra.mxu0 0.0
    %2412 = vmatprep.subr.mxu0 0.0
    %2413 = vmatpush1.msra.mxu0 0.0
    %2414 = vmatprep.subr.mxu0 0.0
    %2415 = vmatpush1.msra.mxu0 0.0
    %2416 = vmatprep.subr.mxu0 0.0
    %2417 = vmatpush1.msra.mxu0 0.0
    %2418 = vmatprep.subr.mxu0 0.0
    %2419 = vmatpush1.msra.mxu0 0.0
    %2420 = vmatprep.subr.mxu0 0.0
    %2421 = vmatpush1.msra.mxu0 0.0
    %2422 = vmatprep.subr.mxu0 0.0
    %2423 = vmatpush1.msra.mxu0 0.0
    %2424 = vmatprep.subr.mxu0 0.0
    %2425 = vmatpush1.msra.mxu0 0.0
    %2426 = vmatprep.subr.mxu0 0.0
    %2427 = vmatpush1.msra.mxu0 0.0
    %2428 = vmatprep.mubr.f32.mxu0 0.0
    %2429 = vmatmul.mubr.f32.gmra.mrb[0].mxu0 %v2362
    %v2430 = vpop.f32.mrb[0].mxu0
    %v2431 = vadd.f32 %v2357, %v2430
    %v2432 = vpop.f32.mrb[0].mxu0
    %2433 = vdwg.mxu0
    %v2436 = vunpack.c.l.s4 1966171168
    %v2437 = vunpack.c.0.s8 %v2436
    %v2438 = vlaneseq
    %v2439 = vshrl.u32 %v2438, 7
    %v2440 = vsub.s32 %v2437, %v2439
    %v2441 = vrot.slane %v2431, %v2440
    %v2442 = vcombine.high %v2441, %v2441
    %v2444 = vunpack.c.l.s4 1966171168
    %v2445 = vunpack.c.0.s8 %v2444
    %v2446 = vlaneseq
    %v2447 = vshrl.u32 %v2446, 7
    %v2448 = vsub.s32 %v2445, %v2447
    %v2449 = vrot.slane %v2441, %v2448
    %v2451 = vunpack.c.l.s4 1966171168
    %v2452 = vunpack.c.0.s8 %v2451
    %v2453 = vlaneseq
    %v2454 = vshrl.u32 %v2453, 7
    %v2455 = vsub.s32 %v2452, %v2454
    %v2456 = vrot.slane %v2442, %v2455
    %v2457 = vcombine.high %v2449, %v2449
    %v2458 = vcombine.high %v2456, %v2456
    %2463 = vst.msk [vmem:[#allocation2 + $0x3] sm:$0x1] %vm2099, %v2449
    %2464 = vst.msk [vmem:[#allocation2 + $0xb] sm:$0x1] %vm2099, %v2456
    %2465 = vst.msk [vmem:[#allocation2 + $0x13] sm:$0x1] %vm2099, %v2457
    %2466 = vst.msk [vmem:[#allocation2 + $0x1b] sm:$0x1] %vm2099, %v2458
    %s2467 = scalar_lea.vmem %s8, 128
    %v2468 = vld [vmem:[%s2467] sm:$0xff]
    %v2469 = vld [vmem:[%s2467 + $0x8] sm:$0xff]
    %v2470 = vld [vmem:[%s2467 + $0x10] sm:$0xff]
    %v2471 = vld [vmem:[%s2467 + $0x18] sm:$0xff]
    %s2472 = scalar_lea.vmem %s9, 4
    %v2473 = vld [vmem:[%s2472] sm:$0x1]
    %v2475 = vlaneseq
    %v2476 = vshrl.u32 %v2475, 7
    %v2477 = vsub.s32 0, %v2476
    %v2478 = vrot.slane %v2473, %v2477
    %2481 = vrot.lane.b32.xlu0 %v1982, 32
    %v2482 = vpop.permute.xlu0 %2481
    %v2483 = vsel %vm214, %v2482, 0
    %2485 = vmatprep.subr.mxu0 0.0
    %2486 = vmatpush1.msra.mxu0 %v2468
    %2487 = vmatprep.subr.mxu0 0.0
    %2488 = vmatpush1.msra.mxu0 %v2469
    %2489 = vmatprep.subr.mxu0 0.0
    %2490 = vmatpush1.msra.mxu0 %v2470
    %2491 = vmatprep.subr.mxu0 0.0
    %2492 = vmatpush1.msra.mxu0 %v2471
    %2493 = vmatprep.subr.mxu0 0.0
    %2494 = vmatpush1.msra.mxu0 0.0
    %2495 = vmatprep.subr.mxu0 0.0
    %2496 = vmatpush1.msra.mxu0 0.0
    %2497 = vmatprep.subr.mxu0 0.0
    %2498 = vmatpush1.msra.mxu0 0.0
    %2499 = vmatprep.subr.mxu0 0.0
    %2500 = vmatpush1.msra.mxu0 0.0
    %2501 = vmatprep.subr.mxu0 0.0
    %2502 = vmatpush1.msra.mxu0 0.0
    %2503 = vmatprep.subr.mxu0 0.0
    %2504 = vmatpush1.msra.mxu0 0.0
    %2505 = vmatprep.subr.mxu0 0.0
    %2506 = vmatpush1.msra.mxu0 0.0
    %2507 = vmatprep.subr.mxu0 0.0
    %2508 = vmatpush1.msra.mxu0 0.0
    %2509 = vmatprep.subr.mxu0 0.0
    %2510 = vmatpush1.msra.mxu0 0.0
    %2511 = vmatprep.subr.mxu0 0.0
    %2512 = vmatpush1.msra.mxu0 0.0
    %2513 = vmatprep.subr.mxu0 0.0
    %2514 = vmatpush1.msra.mxu0 0.0
    %2515 = vmatprep.subr.mxu0 0.0
    %2516 = vmatpush1.msra.mxu0 0.0
    %2517 = vmatprep.subr.mxu0 0.0
    %2518 = vmatpush1.msra.mxu0 0.0
    %2519 = vmatprep.subr.mxu0 0.0
    %2520 = vmatpush1.msra.mxu0 0.0
    %2521 = vmatprep.subr.mxu0 0.0
    %2522 = vmatpush1.msra.mxu0 0.0
    %2523 = vmatprep.subr.mxu0 0.0
    %2524 = vmatpush1.msra.mxu0 0.0
    %2525 = vmatprep.subr.mxu0 0.0
    %2526 = vmatpush1.msra.mxu0 0.0
    %2527 = vmatprep.subr.mxu0 0.0
    %2528 = vmatpush1.msra.mxu0 0.0
    %2529 = vmatprep.subr.mxu0 0.0
    %2530 = vmatpush1.msra.mxu0 0.0
    %2531 = vmatprep.subr.mxu0 0.0
    %2532 = vmatpush1.msra.mxu0 0.0
    %2533 = vmatprep.subr.mxu0 0.0
    %2534 = vmatpush1.msra.mxu0 0.0
    %2535 = vmatprep.subr.mxu0 0.0
    %2536 = vmatpush1.msra.mxu0 0.0
    %2537 = vmatprep.subr.mxu0 0.0
    %2538 = vmatpush1.msra.mxu0 0.0
    %2539 = vmatprep.subr.mxu0 0.0
    %2540 = vmatpush1.msra.mxu0 0.0
    %2541 = vmatprep.subr.mxu0 0.0
    %2542 = vmatpush1.msra.mxu0 0.0
    %2543 = vmatprep.subr.mxu0 0.0
    %2544 = vmatpush1.msra.mxu0 0.0
    %2545 = vmatprep.subr.mxu0 0.0
    %2546 = vmatpush1.msra.mxu0 0.0
    %2547 = vmatprep.subr.mxu0 0.0
    %2548 = vmatpush1.msra.mxu0 0.0
    %2549 = vmatprep.mubr.f32.mxu0 0.0
    %2550 = vmatmul.mubr.f32.gmra.mrb[0].mxu0 %v2483
    %v2551 = vpop.f32.mrb[0].mxu0
    %v2552 = vadd.f32 %v2478, %v2551
    %v2553 = vpop.f32.mrb[0].mxu0
    %2554 = vdwg.mxu0
    %v2557 = vunpack.c.l.s4 1966171168
    %v2558 = vunpack.c.0.s8 %v2557
    %v2559 = vlaneseq
    %v2560 = vshrl.u32 %v2559, 7
    %v2561 = vsub.s32 %v2558, %v2560
    %v2562 = vrot.slane %v2552, %v2561
    %v2563 = vcombine.high %v2562, %v2562
    %v2565 = vunpack.c.l.s4 1966171168
    %v2566 = vunpack.c.0.s8 %v2565
    %v2567 = vlaneseq
    %v2568 = vshrl.u32 %v2567, 7
    %v2569 = vsub.s32 %v2566, %v2568
    %v2570 = vrot.slane %v2562, %v2569
    %v2572 = vunpack.c.l.s4 1966171168
    %v2573 = vunpack.c.0.s8 %v2572
    %v2574 = vlaneseq
    %v2575 = vshrl.u32 %v2574, 7
    %v2576 = vsub.s32 %v2573, %v2575
    %v2577 = vrot.slane %v2563, %v2576
    %v2578 = vcombine.high %v2570, %v2570
    %v2579 = vcombine.high %v2577, %v2577
    %2584 = vst.msk [vmem:[#allocation2 + $0x4] sm:$0x1] %vm2099, %v2570
    %2585 = vst.msk [vmem:[#allocation2 + $0xc] sm:$0x1] %vm2099, %v2577
    %2586 = vst.msk [vmem:[#allocation2 + $0x14] sm:$0x1] %vm2099, %v2578
    %2587 = vst.msk [vmem:[#allocation2 + $0x1c] sm:$0x1] %vm2099, %v2579
    %s2588 = scalar_lea.vmem %s8, 160
    %v2589 = vld [vmem:[%s2588] sm:$0xff]
    %v2590 = vld [vmem:[%s2588 + $0x8] sm:$0xff]
    %v2591 = vld [vmem:[%s2588 + $0x10] sm:$0xff]
    %v2592 = vld [vmem:[%s2588 + $0x18] sm:$0xff]
    %s2593 = scalar_lea.vmem %s9, 5
    %v2594 = vld [vmem:[%s2593] sm:$0x1]
    %v2596 = vlaneseq
    %v2597 = vshrl.u32 %v2596, 7
    %v2598 = vsub.s32 0, %v2597
    %v2599 = vrot.slane %v2594, %v2598
    %v2601 = vrot.slane %v1982, 4
    %2602 = vrot.lane.b32.xlu0 %v2601, 32
    %v2603 = vpop.permute.xlu0 %2602
    %v2604 = vsel %vm214, %v2603, 0
    %2606 = vmatprep.subr.mxu0 0.0
    %2607 = vmatpush1.msra.mxu0 %v2589
    %2608 = vmatprep.subr.mxu0 0.0
    %2609 = vmatpush1.msra.mxu0 %v2590
    %2610 = vmatprep.subr.mxu0 0.0
    %2611 = vmatpush1.msra.mxu0 %v2591
    %2612 = vmatprep.subr.mxu0 0.0
    %2613 = vmatpush1.msra.mxu0 %v2592
    %2614 = vmatprep.subr.mxu0 0.0
    %2615 = vmatpush1.msra.mxu0 0.0
    %2616 = vmatprep.subr.mxu0 0.0
    %2617 = vmatpush1.msra.mxu0 0.0
    %2618 = vmatprep.subr.mxu0 0.0
    %2619 = vmatpush1.msra.mxu0 0.0
    %2620 = vmatprep.subr.mxu0 0.0
    %2621 = vmatpush1.msra.mxu0 0.0
    %2622 = vmatprep.subr.mxu0 0.0
    %2623 = vmatpush1.msra.mxu0 0.0
    %2624 = vmatprep.subr.mxu0 0.0
    %2625 = vmatpush1.msra.mxu0 0.0
    %2626 = vmatprep.subr.mxu0 0.0
    %2627 = vmatpush1.msra.mxu0 0.0
    %2628 = vmatprep.subr.mxu0 0.0
    %2629 = vmatpush1.msra.mxu0 0.0
    %2630 = vmatprep.subr.mxu0 0.0
    %2631 = vmatpush1.msra.mxu0 0.0
    %2632 = vmatprep.subr.mxu0 0.0
    %2633 = vmatpush1.msra.mxu0 0.0
    %2634 = vmatprep.subr.mxu0 0.0
    %2635 = vmatpush1.msra.mxu0 0.0
    %2636 = vmatprep.subr.mxu0 0.0
    %2637 = vmatpush1.msra.mxu0 0.0
    %2638 = vmatprep.subr.mxu0 0.0
    %2639 = vmatpush1.msra.mxu0 0.0
    %2640 = vmatprep.subr.mxu0 0.0
    %2641 = vmatpush1.msra.mxu0 0.0
    %2642 = vmatprep.subr.mxu0 0.0
    %2643 = vmatpush1.msra.mxu0 0.0
    %2644 = vmatprep.subr.mxu0 0.0
    %2645 = vmatpush1.msra.mxu0 0.0
    %2646 = vmatprep.subr.mxu0 0.0
    %2647 = vmatpush1.msra.mxu0 0.0
    %2648 = vmatprep.subr.mxu0 0.0
    %2649 = vmatpush1.msra.mxu0 0.0
    %2650 = vmatprep.subr.mxu0 0.0
    %2651 = vmatpush1.msra.mxu0 0.0
    %2652 = vmatprep.subr.mxu0 0.0
    %2653 = vmatpush1.msra.mxu0 0.0
    %2654 = vmatprep.subr.mxu0 0.0
    %2655 = vmatpush1.msra.mxu0 0.0
    %2656 = vmatprep.subr.mxu0 0.0
    %2657 = vmatpush1.msra.mxu0 0.0
    %2658 = vmatprep.subr.mxu0 0.0
    %2659 = vmatpush1.msra.mxu0 0.0
    %2660 = vmatprep.subr.mxu0 0.0
    %2661 = vmatpush1.msra.mxu0 0.0
    %2662 = vmatprep.subr.mxu0 0.0
    %2663 = vmatpush1.msra.mxu0 0.0
    %2664 = vmatprep.subr.mxu0 0.0
    %2665 = vmatpush1.msra.mxu0 0.0
    %2666 = vmatprep.subr.mxu0 0.0
    %2667 = vmatpush1.msra.mxu0 0.0
    %2668 = vmatprep.subr.mxu0 0.0
    %2669 = vmatpush1.msra.mxu0 0.0
    %2670 = vmatprep.mubr.f32.mxu0 0.0
    %2671 = vmatmul.mubr.f32.gmra.mrb[0].mxu0 %v2604
    %v2672 = vpop.f32.mrb[0].mxu0
    %v2673 = vadd.f32 %v2599, %v2672
    %v2674 = vpop.f32.mrb[0].mxu0
    %2675 = vdwg.mxu0
    %v2678 = vunpack.c.l.s4 1966171168
    %v2679 = vunpack.c.0.s8 %v2678
    %v2680 = vlaneseq
    %v2681 = vshrl.u32 %v2680, 7
    %v2682 = vsub.s32 %v2679, %v2681
    %v2683 = vrot.slane %v2673, %v2682
    %v2684 = vcombine.high %v2683, %v2683
    %v2686 = vunpack.c.l.s4 1966171168
    %v2687 = vunpack.c.0.s8 %v2686
    %v2688 = vlaneseq
    %v2689 = vshrl.u32 %v2688, 7
    %v2690 = vsub.s32 %v2687, %v2689
    %v2691 = vrot.slane %v2683, %v2690
    %v2693 = vunpack.c.l.s4 1966171168
    %v2694 = vunpack.c.0.s8 %v2693
    %v2695 = vlaneseq
    %v2696 = vshrl.u32 %v2695, 7
    %v2697 = vsub.s32 %v2694, %v2696
    %v2698 = vrot.slane %v2684, %v2697
    %v2699 = vcombine.high %v2691, %v2691
    %v2700 = vcombine.high %v2698, %v2698
    %2705 = vst.msk [vmem:[#allocation2 + $0x5] sm:$0x1] %vm2099, %v2691
    %2706 = vst.msk [vmem:[#allocation2 + $0xd] sm:$0x1] %vm2099, %v2698
    %2707 = vst.msk [vmem:[#allocation2 + $0x15] sm:$0x1] %vm2099, %v2699
    %2708 = vst.msk [vmem:[#allocation2 + $0x1d] sm:$0x1] %vm2099, %v2700
    %s2709 = scalar_lea.vmem %s8, 192
    %v2710 = vld [vmem:[%s2709] sm:$0xff]
    %v2711 = vld [vmem:[%s2709 + $0x8] sm:$0xff]
    %v2712 = vld [vmem:[%s2709 + $0x10] sm:$0xff]
    %v2713 = vld [vmem:[%s2709 + $0x18] sm:$0xff]
    %s2714 = scalar_lea.vmem %s9, 6
    %v2715 = vld [vmem:[%s2714] sm:$0x1]
    %v2717 = vlaneseq
    %v2718 = vshrl.u32 %v2717, 7
    %v2719 = vsub.s32 0, %v2718
    %v2720 = vrot.slane %v2715, %v2719
    %2723 = vrot.lane.b32.xlu0 %v1983, 32
    %v2724 = vpop.permute.xlu0 %2723
    %v2725 = vsel %vm214, %v2724, 0
    %2727 = vmatprep.subr.mxu0 0.0
    %2728 = vmatpush1.msra.mxu0 %v2710
    %2729 = vmatprep.subr.mxu0 0.0
    %2730 = vmatpush1.msra.mxu0 %v2711
    %2731 = vmatprep.subr.mxu0 0.0
    %2732 = vmatpush1.msra.mxu0 %v2712
    %2733 = vmatprep.subr.mxu0 0.0
    %2734 = vmatpush1.msra.mxu0 %v2713
    %2735 = vmatprep.subr.mxu0 0.0
    %2736 = vmatpush1.msra.mxu0 0.0
    %2737 = vmatprep.subr.mxu0 0.0
    %2738 = vmatpush1.msra.mxu0 0.0
    %2739 = vmatprep.subr.mxu0 0.0
    %2740 = vmatpush1.msra.mxu0 0.0
    %2741 = vmatprep.subr.mxu0 0.0
    %2742 = vmatpush1.msra.mxu0 0.0
    %2743 = vmatprep.subr.mxu0 0.0
    %2744 = vmatpush1.msra.mxu0 0.0
    %2745 = vmatprep.subr.mxu0 0.0
    %2746 = vmatpush1.msra.mxu0 0.0
    %2747 = vmatprep.subr.mxu0 0.0
    %2748 = vmatpush1.msra.mxu0 0.0
    %2749 = vmatprep.subr.mxu0 0.0
    %2750 = vmatpush1.msra.mxu0 0.0
    %2751 = vmatprep.subr.mxu0 0.0
    %2752 = vmatpush1.msra.mxu0 0.0
    %2753 = vmatprep.subr.mxu0 0.0
    %2754 = vmatpush1.msra.mxu0 0.0
    %2755 = vmatprep.subr.mxu0 0.0
    %2756 = vmatpush1.msra.mxu0 0.0
    %2757 = vmatprep.subr.mxu0 0.0
    %2758 = vmatpush1.msra.mxu0 0.0
    %2759 = vmatprep.subr.mxu0 0.0
    %2760 = vmatpush1.msra.mxu0 0.0
    %2761 = vmatprep.subr.mxu0 0.0
    %2762 = vmatpush1.msra.mxu0 0.0
    %2763 = vmatprep.subr.mxu0 0.0
    %2764 = vmatpush1.msra.mxu0 0.0
    %2765 = vmatprep.subr.mxu0 0.0
    %2766 = vmatpush1.msra.mxu0 0.0
    %2767 = vmatprep.subr.mxu0 0.0
    %2768 = vmatpush1.msra.mxu0 0.0
    %2769 = vmatprep.subr.mxu0 0.0
    %2770 = vmatpush1.msra.mxu0 0.0
    %2771 = vmatprep.subr.mxu0 0.0
    %2772 = vmatpush1.msra.mxu0 0.0
    %2773 = vmatprep.subr.mxu0 0.0
    %2774 = vmatpush1.msra.mxu0 0.0
    %2775 = vmatprep.subr.mxu0 0.0
    %2776 = vmatpush1.msra.mxu0 0.0
    %2777 = vmatprep.subr.mxu0 0.0
    %2778 = vmatpush1.msra.mxu0 0.0
    %2779 = vmatprep.subr.mxu0 0.0
    %2780 = vmatpush1.msra.mxu0 0.0
    %2781 = vmatprep.subr.mxu0 0.0
    %2782 = vmatpush1.msra.mxu0 0.0
    %2783 = vmatprep.subr.mxu0 0.0
    %2784 = vmatpush1.msra.mxu0 0.0
    %2785 = vmatprep.subr.mxu0 0.0
    %2786 = vmatpush1.msra.mxu0 0.0
    %2787 = vmatprep.subr.mxu0 0.0
    %2788 = vmatpush1.msra.mxu0 0.0
    %2789 = vmatprep.subr.mxu0 0.0
    %2790 = vmatpush1.msra.mxu0 0.0
    %2791 = vmatprep.mubr.f32.mxu0 0.0
    %2792 = vmatmul.mubr.f32.gmra.mrb[0].mxu0 %v2725
    %v2793 = vpop.f32.mrb[0].mxu0
    %v2794 = vadd.f32 %v2720, %v2793
    %v2795 = vpop.f32.mrb[0].mxu0
    %2796 = vdwg.mxu0
    %v2799 = vunpack.c.l.s4 1966171168
    %v2800 = vunpack.c.0.s8 %v2799
    %v2801 = vlaneseq
    %v2802 = vshrl.u32 %v2801, 7
    %v2803 = vsub.s32 %v2800, %v2802
    %v2804 = vrot.slane %v2794, %v2803
    %v2805 = vcombine.high %v2804, %v2804
    %v2807 = vunpack.c.l.s4 1966171168
    %v2808 = vunpack.c.0.s8 %v2807
    %v2809 = vlaneseq
    %v2810 = vshrl.u32 %v2809, 7
    %v2811 = vsub.s32 %v2808, %v2810
    %v2812 = vrot.slane %v2804, %v2811
    %v2814 = vunpack.c.l.s4 1966171168
    %v2815 = vunpack.c.0.s8 %v2814
    %v2816 = vlaneseq
    %v2817 = vshrl.u32 %v2816, 7
    %v2818 = vsub.s32 %v2815, %v2817
    %v2819 = vrot.slane %v2805, %v2818
    %v2820 = vcombine.high %v2812, %v2812
    %v2821 = vcombine.high %v2819, %v2819
    %2826 = vst.msk [vmem:[#allocation2 + $0x6] sm:$0x1] %vm2099, %v2812
    %2827 = vst.msk [vmem:[#allocation2 + $0xe] sm:$0x1] %vm2099, %v2819
    %2828 = vst.msk [vmem:[#allocation2 + $0x16] sm:$0x1] %vm2099, %v2820
    %2829 = vst.msk [vmem:[#allocation2 + $0x1e] sm:$0x1] %vm2099, %v2821
    %s2830 = scalar_lea.vmem %s8, 224
    %v2831 = vld [vmem:[%s2830] sm:$0xff]
    %v2832 = vld [vmem:[%s2830 + $0x8] sm:$0xff]
    %v2833 = vld [vmem:[%s2830 + $0x10] sm:$0xff]
    %v2834 = vld [vmem:[%s2830 + $0x18] sm:$0xff]
    %s2835 = scalar_lea.vmem %s9, 7
    %v2836 = vld [vmem:[%s2835] sm:$0x1]
    %v2838 = vlaneseq
    %v2839 = vshrl.u32 %v2838, 7
    %v2840 = vsub.s32 0, %v2839
    %v2841 = vrot.slane %v2836, %v2840
    %v2843 = vrot.slane %v1983, 4
    %2844 = vrot.lane.b32.xlu0 %v2843, 32
    %v2845 = vpop.permute.xlu0 %2844
    %v2846 = vsel %vm214, %v2845, 0
    %2848 = vmatprep.subr.mxu0 0.0
    %2849 = vmatpush1.msra.mxu0 %v2831
    %2850 = vmatprep.subr.mxu0 0.0
    %2851 = vmatpush1.msra.mxu0 %v2832
    %2852 = vmatprep.subr.mxu0 0.0
    %2853 = vmatpush1.msra.mxu0 %v2833
    %2854 = vmatprep.subr.mxu0 0.0
    %2855 = vmatpush1.msra.mxu0 %v2834
    %2856 = vmatprep.subr.mxu0 0.0
    %2857 = vmatpush1.msra.mxu0 0.0
    %2858 = vmatprep.subr.mxu0 0.0
    %2859 = vmatpush1.msra.mxu0 0.0
    %2860 = vmatprep.subr.mxu0 0.0
    %2861 = vmatpush1.msra.mxu0 0.0
    %2862 = vmatprep.subr.mxu0 0.0
    %2863 = vmatpush1.msra.mxu0 0.0
    %2864 = vmatprep.subr.mxu0 0.0
    %2865 = vmatpush1.msra.mxu0 0.0
    %2866 = vmatprep.subr.mxu0 0.0
    %2867 = vmatpush1.msra.mxu0 0.0
    %2868 = vmatprep.subr.mxu0 0.0
    %2869 = vmatpush1.msra.mxu0 0.0
    %2870 = vmatprep.subr.mxu0 0.0
    %2871 = vmatpush1.msra.mxu0 0.0
    %2872 = vmatprep.subr.mxu0 0.0
    %2873 = vmatpush1.msra.mxu0 0.0
    %2874 = vmatprep.subr.mxu0 0.0
    %2875 = vmatpush1.msra.mxu0 0.0
    %2876 = vmatprep.subr.mxu0 0.0
    %2877 = vmatpush1.msra.mxu0 0.0
    %2878 = vmatprep.subr.mxu0 0.0
    %2879 = vmatpush1.msra.mxu0 0.0
    %2880 = vmatprep.subr.mxu0 0.0
    %2881 = vmatpush1.msra.mxu0 0.0
    %2882 = vmatprep.subr.mxu0 0.0
    %2883 = vmatpush1.msra.mxu0 0.0
    %2884 = vmatprep.subr.mxu0 0.0
    %2885 = vmatpush1.msra.mxu0 0.0
    %2886 = vmatprep.subr.mxu0 0.0
    %2887 = vmatpush1.msra.mxu0 0.0
    %2888 = vmatprep.subr.mxu0 0.0
    %2889 = vmatpush1.msra.mxu0 0.0
    %2890 = vmatprep.subr.mxu0 0.0
    %2891 = vmatpush1.msra.mxu0 0.0
    %2892 = vmatprep.subr.mxu0 0.0
    %2893 = vmatpush1.msra.mxu0 0.0
    %2894 = vmatprep.subr.mxu0 0.0
    %2895 = vmatpush1.msra.mxu0 0.0
    %2896 = vmatprep.subr.mxu0 0.0
    %2897 = vmatpush1.msra.mxu0 0.0
    %2898 = vmatprep.subr.mxu0 0.0
    %2899 = vmatpush1.msra.mxu0 0.0
    %2900 = vmatprep.subr.mxu0 0.0
    %2901 = vmatpush1.msra.mxu0 0.0
    %2902 = vmatprep.subr.mxu0 0.0
    %2903 = vmatpush1.msra.mxu0 0.0
    %2904 = vmatprep.subr.mxu0 0.0
    %2905 = vmatpush1.msra.mxu0 0.0
    %2906 = vmatprep.subr.mxu0 0.0
    %2907 = vmatpush1.msra.mxu0 0.0
    %2908 = vmatprep.subr.mxu0 0.0
    %2909 = vmatpush1.msra.mxu0 0.0
    %2910 = vmatprep.subr.mxu0 0.0
    %2911 = vmatpush1.msra.mxu0 0.0
    %2912 = vmatprep.mubr.f32.mxu0 0.0
    %2913 = vmatmul.mubr.f32.gmra.mrb[0].mxu0 %v2846
    %v2914 = vpop.f32.mrb[0].mxu0
    %v2915 = vadd.f32 %v2841, %v2914
    %v2916 = vpop.f32.mrb[0].mxu0
    %2917 = vdwg.mxu0
    %v2920 = vunpack.c.l.s4 1966171168
    %v2921 = vunpack.c.0.s8 %v2920
    %v2922 = vlaneseq
    %v2923 = vshrl.u32 %v2922, 7
    %v2924 = vsub.s32 %v2921, %v2923
    %v2925 = vrot.slane %v2915, %v2924
    %v2926 = vcombine.high %v2925, %v2925
    %v2928 = vunpack.c.l.s4 1966171168
    %v2929 = vunpack.c.0.s8 %v2928
    %v2930 = vlaneseq
    %v2931 = vshrl.u32 %v2930, 7
    %v2932 = vsub.s32 %v2929, %v2931
    %v2933 = vrot.slane %v2925, %v2932
    %v2935 = vunpack.c.l.s4 1966171168
    %v2936 = vunpack.c.0.s8 %v2935
    %v2937 = vlaneseq
    %v2938 = vshrl.u32 %v2937, 7
    %v2939 = vsub.s32 %v2936, %v2938
    %v2940 = vrot.slane %v2926, %v2939
    %v2941 = vcombine.high %v2933, %v2933
    %v2942 = vcombine.high %v2940, %v2940
    %2947 = vst.msk [vmem:[#allocation2 + $0x7] sm:$0x1] %vm2099, %v2933
    %2948 = vst.msk [vmem:[#allocation2 + $0xf] sm:$0x1] %vm2099, %v2940
    %2949 = vst.msk [vmem:[#allocation2 + $0x17] sm:$0x1] %vm2099, %v2941
    %2950 = vst.msk [vmem:[#allocation2 + $0x1f] sm:$0x1] %vm2099, %v2942
    // Predicated region
    $region42: #{tpu_custom_call.1} parent=1 // pred_check
      _
    $region43: #{tpu_custom_call.1} parent=1 // pred_check_branch
      %2952 = sbr.rel (0) target = $region45
    $region44: #{tpu_custom_call.1} parent=1 // pred_region
      %s2954 = ssub.s32 512, 512
      %2955 = vsyncadd [#allocation3], %s2954
      %s2956 = sshll.u32 [#allocation2], 4
      %s2957 = int_to_ptr.vmem [resolvable:$true] %s2956
      %2962 = dma.vmem_to_hbm [thread:$0]  %s2957, 512, %s10, [#allocation3], 128, 128, 8
    $region45: #{tpu_custom_call.1} parent=1 // pred_fallthru
      _
    // Predicated region
    $region46: #{tpu_custom_call.1} parent=1 // pred_check
      _
    $region47: #{tpu_custom_call.1} parent=1 // pred_check_branch
      %2964 = sbr.rel (0) target = $region49
    $region48: #{tpu_custom_call.1} parent=1 // pred_region
      %2965 = dma.done [#allocation3], 512
    $region49: #{tpu_custom_call.1} parent=1 // pred_fallthru
      _
    %2966 = vsyncpa [#allocation3], 1

</llo_original>
